<compile_context>
chip_gen: v7x
topology: tpu7x:2x2x1
jax: 0.10.0
libtpu: 0.0.40
codegen_flags: <defaults>
</compile_context>

<pallas_src>
import math

import jax
import jax.numpy as jnp
from jax.experimental import pallas as pl
from jax.experimental.pallas import tpu as pltpu

# ---------------- config (small, deterministic "synthetic checkpoint") -----
VOCAB = 100          # len_tokenizer after resize_token_embeddings
MAX_POS = 16         # max position embeddings
B, S = 2, 8          # batch, sequence length
H = 32               # true hidden size
NH = 2               # attention heads
HD = H // NH         # head dim
FFN = 64             # true feed-forward inner dim
NLAYERS = 2          # number of encoder layers
EPS = 1e-12          # BERT layernorm eps
NEG = -1e9           # additive mask value for padded keys

HP = 128             # hidden padded to full lane width
FP = 128             # FFN inner dim padded to full lane width


def _layernorm_padded(x, gamma, beta):
    # x: (rows, HP) with zeros in columns >= H.  Statistics over the true H
    # columns only (padded zeros contribute nothing to the sums); zero-padded
    # gamma/beta keep the padded columns exactly zero afterwards.
    # NOTE: single-pass E[x^2]-E[x]^2 variance — fine at this scale.
    mu = jnp.sum(x, axis=-1, keepdims=True) * (1.0 / H)
    ex2 = jnp.sum(x * x, axis=-1, keepdims=True) * (1.0 / H)
    var = ex2 - mu * mu
    return (x - mu) * jax.lax.rsqrt(var + EPS) * gamma + beta


# ---------------- fully fused Pallas kernel (one batch element / grid step) --

def fused_encoder_kernel(ids_ref, am_ref,                       # SMEM (prefetch)
                         word_emb_ref, pos_type_ref, emb_g_ref, emb_b_ref,
                         wqkv_ref, bqkv_ref, wo_ref, bo_ref,
                         g1_ref, be1_ref, w1_ref, b1_ref, w2_ref, b2_ref,
                         g2_ref, be2_ref, wp_ref, bp_ref,
                         hid_ref, pool_ref):
    b = pl.program_id(0)

    # ---- embedding gather: token ids from SMEM, table resident in VMEM -----
    rows = [word_emb_ref[pl.ds(ids_ref[b, s_i], 1), :] for s_i in range(S)]
    x = jnp.concatenate(rows, axis=0) + pos_type_ref[...]        # (S, HP) f32
    x = _layernorm_padded(x, emb_g_ref[...], emb_b_ref[...])

    # ---- additive key-padding mask built in-kernel from SMEM scalars -------
    col = jax.lax.broadcasted_iota(jnp.int32, (1, S), 1)
    key_add = jnp.zeros((1, S), jnp.float32)
    for j in range(S):
        kj = jnp.where(am_ref[b, j] > 0, 0.0, NEG)               # scalar
        key_add = jnp.where(col == j, kj, key_add)
    key_add3 = key_add[None, :, :]                               # (1, 1, S)

    for l in range(NLAYERS):                  # static loop, weights in VMEM
        # ---- self-attention: packed QKV (single 128-lane output) -----------
        qkv = jnp.dot(x.astype(jnp.bfloat16), wqkv_ref[l],
                      preferred_element_type=jnp.float32) + bqkv_ref[l]  # (S, HP)

        def heads(block):                      # (S, H) -> (NH, S, HD) bf16
            return jnp.stack([block[:, h * HD:(h + 1) * HD] for h in range(NH)],
                             axis=0).astype(jnp.bfloat16)

        q3 = heads(qkv[:, 0:H])                # scale folded into Wq at init
        k3 = heads(qkv[:, H:2 * H])
        v3 = heads(qkv[:, 2 * H:3 * H])

        # one batched score matmul + ONE softmax over all heads
        s = jnp.einsum('hqd,hkd->hqk', q3, k3,
                       preferred_element_type=jnp.float32) + key_add3   # (NH,S,S)
        s = s - jnp.max(s, axis=-1, keepdims=True)
        p = jnp.exp(s)
        p = p * pl.reciprocal(jnp.sum(p, axis=-1, keepdims=True), approx=True)
        ctx3 = jnp.einsum('hqk,hkd->hqd', p.astype(jnp.bfloat16), v3,
                          preferred_element_type=jnp.float32)           # (NH,S,HD)
        ctx = jnp.concatenate([ctx3[h] for h in range(NH)], axis=-1)    # (S, H)

        attn = jnp.dot(ctx.astype(jnp.bfloat16), wo_ref[l],
                       preferred_element_type=jnp.float32) + bo_ref[l]  # (S, HP)
        h1 = _layernorm_padded(x + attn, g1_ref[l], be1_ref[l])

        # ---- feed-forward ---------------------------------------------------
        ff = jnp.dot(h1.astype(jnp.bfloat16), w1_ref[l],
                     preferred_element_type=jnp.float32) + b1_ref[l]    # (S, FP)
        # TODO(synk): HF BERT uses exact erf GELU; tanh approximation kept here.
        ff = jax.nn.gelu(ff, approximate=True)
        ff = jnp.dot(ff.astype(jnp.bfloat16), w2_ref[l],
                     preferred_element_type=jnp.float32) + b2_ref[l]    # (S, HP)
        x = _layernorm_padded(h1 + ff, g2_ref[l], be2_ref[l])

    hid_ref[...] = x                                                    # (S, HP)

    # ---- pooler epilogue: CLS token is simply row 0 of this batch element --
    cls = x[0:1, :]
    pool_ref[...] = jnp.tanh(
        jnp.dot(cls.astype(jnp.bfloat16), wp_ref[...],
                preferred_element_type=jnp.float32) + bp_ref[...])


# ---------------- wrapper ----------------------------------------------------

def _const_spec(shape):
    zeros = (0,) * len(shape)
    return pl.BlockSpec(shape, lambda b, ids, am: zeros)


def fused_forward(input_ids, attention_mask, params):
    weights = [
        params["word_emb"], params["pos_type"],
        params["emb_ln_g"], params["emb_ln_b"],
        params["wqkv"], params["bqkv"], params["wo"], params["bo"],
        params["ln1_g"], params["ln1_b"],
        params["w1"], params["b1"], params["w2"], params["b2"],
        params["ln2_g"], params["ln2_b"],
        params["pooler_w"], params["pooler_b"],
    ]
    hid, pooled = pl.pallas_call(
        fused_encoder_kernel,
        grid_spec=pltpu.PrefetchScalarGridSpec(
            num_scalar_prefetch=2,               # input_ids, attention_mask -> SMEM
            grid=(B,),                           # one grid step per batch element
            in_specs=[_const_spec(w.shape) for w in weights],
            out_specs=[pl.BlockSpec((None, S, HP), lambda b, ids, am: (b, 0, 0)),
                       pl.BlockSpec((None, 1, HP), lambda b, ids, am: (b, 0, 0))],
        ),
        out_shape=[jax.ShapeDtypeStruct((B, S, HP), jnp.float32),
                   jax.ShapeDtypeStruct((B, 1, HP), jnp.float32)],
        compiler_params=pltpu.CompilerParams(
            dimension_semantics=("parallel",)),  # v7x: batch split across 2 TCs
    )(input_ids, attention_mask, *weights)
    return hid, pooled[:, 0, :]


# ---------------- parameter init (deterministic, synthetic, pre-padded) -----

def _pad(a, shape):
    out = jnp.zeros(shape, a.dtype)
    return out.at[tuple(slice(0, d) for d in a.shape)].set(a)


def init_params(key):
    keys = jax.random.split(key, 4 + 6 * NLAYERS)
    ki = iter(keys)
    n = lambda shape: 0.02 * jax.random.normal(next(ki), shape, jnp.float32)
    scale = 1.0 / math.sqrt(HD)

    word_emb = _pad(n((VOCAB, H)), (VOCAB, HP))
    pos_emb = _pad(n((MAX_POS, H)), (MAX_POS, HP))
    type_emb = _pad(n((2, H)), (2, HP))
    params = {
        "word_emb": word_emb,
        # position + token-type(0) embeddings pre-combined for the fixed S
        "pos_type": pos_emb[:S] + type_emb[0:1],
        "emb_ln_g": _pad(jnp.ones((1, H), jnp.float32), (1, HP)),
        "emb_ln_b": jnp.zeros((1, HP), jnp.float32),
        "pooler_w": _pad(n((H, H)), (HP, HP)).astype(jnp.bfloat16),
        "pooler_b": jnp.zeros((1, HP), jnp.float32),
    }

    wqkv, bqkv, wo, bo = [], [], [], []
    g1, be1, w1, b1, w2, b2, g2, be2 = [], [], [], [], [], [], [], []
    for _ in range(NLAYERS):
        # Q/K/V packed into ONE 128-lane output: Q lanes 0:H, K H:2H, V 2H:3H
        # (3H = 96 <= 128).  1/sqrt(HD) folded into Wq — valid because the Q
        # bias is zero here; with a real checkpoint scale the Q bias slice too.
        wq, wk, wv = n((H, H)) * scale, n((H, H)), n((H, H))
        wqkv_l = jnp.zeros((HP, HP), jnp.float32)
        wqkv_l = wqkv_l.at[:H, 0:H].set(wq)
        wqkv_l = wqkv_l.at[:H, H:2 * H].set(wk)
        wqkv_l = wqkv_l.at[:H, 2 * H:3 * H].set(wv)
        wqkv.append(wqkv_l.astype(jnp.bfloat16))
        bqkv.append(jnp.zeros((1, HP), jnp.float32))
        wo.append(_pad(n((H, H)), (H, HP)).astype(jnp.bfloat16))
        bo.append(jnp.zeros((1, HP), jnp.float32))
        g1.append(_pad(jnp.ones((1, H), jnp.float32), (1, HP)))
        be1.append(jnp.zeros((1, HP), jnp.float32))
        w1.append(_pad(n((H, FFN)), (HP, FP)).astype(jnp.bfloat16))
        b1.append(jnp.zeros((1, FP), jnp.float32))
        w2.append(_pad(n((FFN, H)), (FP, HP)).astype(jnp.bfloat16))
        b2.append(jnp.zeros((1, HP), jnp.float32))
        g2.append(_pad(jnp.ones((1, H), jnp.float32), (1, HP)))
        be2.append(jnp.zeros((1, HP), jnp.float32))

    stk = lambda xs: jnp.stack(xs, axis=0)
    params.update(wqkv=stk(wqkv), bqkv=stk(bqkv), wo=stk(wo), bo=stk(bo),
                  ln1_g=stk(g1), ln1_b=stk(be1), w1=stk(w1), b1=stk(b1),
                  w2=stk(w2), b2=stk(b2), ln2_g=stk(g2), ln2_b=stk(be2))
    return params


# ---------------- forward (== BaseEncoder.forward) ---------------------------

def base_encoder_forward(params, input_ids, attention_mask):
    # Everything (embedding gather, mask build, embed-LN, all encoder layers,
    # pooler) runs inside ONE fused Pallas kernel; only the final un-padding
    # slices run as plain XLA ops.
    hid, pooled = fused_forward(input_ids.astype(jnp.int32),
                                attention_mask.astype(jnp.int32), params)
    return {"last_hidden_state": hid[:, :, :H],
            "pooler_output": pooled[:, :H]}


# ---------------- main -------------------------------------------------------

if __name__ == "__main__":
    key = jax.random.PRNGKey(0)
    k_param, k_ids = jax.random.split(key)

    params = init_params(k_param)
    input_ids = jax.random.randint(k_ids, (B, S), 0, VOCAB, dtype=jnp.int32)
    attention_mask = jnp.array(
        [[1, 1, 1, 1, 1, 1, 1, 1],
         [1, 1, 1, 1, 1, 0, 0, 0]], dtype=jnp.int32)

    out = base_encoder_forward(params, input_ids, attention_mask)
    jax.block_until_ready(out)
    assert out["last_hidden_state"].shape == (B, S, H)
    assert out["pooler_output"].shape == (B, H)
    assert bool(jnp.all(jnp.isfinite(out["last_hidden_state"])))
    assert bool(jnp.all(jnp.isfinite(out["pooler_output"])))
    print("KERNEL_OK")
</pallas_src>

<mosaic_0001>
module attributes {stable_mosaic.version = 11 : i64} {
  func.func @fused_encoder_kernel(%arg0: i32, %arg1: memref<2x8xi32, #tpu.memory_space<smem>>, %arg2: memref<2x8xi32, #tpu.memory_space<smem>>, %arg3: memref<100x128xf32, #tpu.memory_space<vmem>>, %arg4: memref<8x128xf32, #tpu.memory_space<vmem>>, %arg5: memref<1x128xf32, #tpu.memory_space<vmem>>, %arg6: memref<1x128xf32, #tpu.memory_space<vmem>>, %arg7: memref<2x128x128xbf16, #tpu.memory_space<vmem>>, %arg8: memref<2x1x128xf32, #tpu.memory_space<vmem>>, %arg9: memref<2x32x128xbf16, #tpu.memory_space<vmem>>, %arg10: memref<2x1x128xf32, #tpu.memory_space<vmem>>, %arg11: memref<2x1x128xf32, #tpu.memory_space<vmem>>, %arg12: memref<2x1x128xf32, #tpu.memory_space<vmem>>, %arg13: memref<2x128x128xbf16, #tpu.memory_space<vmem>>, %arg14: memref<2x1x128xf32, #tpu.memory_space<vmem>>, %arg15: memref<2x128x128xbf16, #tpu.memory_space<vmem>>, %arg16: memref<2x1x128xf32, #tpu.memory_space<vmem>>, %arg17: memref<2x1x128xf32, #tpu.memory_space<vmem>>, %arg18: memref<2x1x128xf32, #tpu.memory_space<vmem>>, %arg19: memref<128x128xbf16, #tpu.memory_space<vmem>>, %arg20: memref<1x128xf32, #tpu.memory_space<vmem>>, %arg21: memref<1x8x128xf32, #tpu.memory_space<vmem>>, %arg22: memref<1x1x128xf32, #tpu.memory_space<vmem>>) attributes {dimension_semantics = [#tpu.dimension_semantics<parallel>], iteration_bounds = array<i64: 2>, scalar_prefetch = 2 : i64, scratch_operands = 0 : i64, tpu.core_type = #tpu.core_type<tc>, window_params = [{pipeline_mode = #tpu.pipeline_mode<synchronous>, transform_indices = @transform_0, window_bounds = array<i64: 100, 128>}, {pipeline_mode = #tpu.pipeline_mode<synchronous>, transform_indices = @transform_1, window_bounds = array<i64: 8, 128>}, {pipeline_mode = #tpu.pipeline_mode<synchronous>, transform_indices = @transform_2, window_bounds = array<i64: 1, 128>}, {pipeline_mode = #tpu.pipeline_mode<synchronous>, transform_indices = @transform_3, window_bounds = array<i64: 1, 128>}, {pipeline_mode = #tpu.pipeline_mode<synchronous>, transform_indices = @transform_4, window_bounds = array<i64: 2, 128, 128>}, {pipeline_mode = #tpu.pipeline_mode<synchronous>, transform_indices = @transform_5, window_bounds = array<i64: 2, 1, 128>}, {pipeline_mode = #tpu.pipeline_mode<synchronous>, transform_indices = @transform_6, window_bounds = array<i64: 2, 32, 128>}, {pipeline_mode = #tpu.pipeline_mode<synchronous>, transform_indices = @transform_7, window_bounds = array<i64: 2, 1, 128>}, {pipeline_mode = #tpu.pipeline_mode<synchronous>, transform_indices = @transform_8, window_bounds = array<i64: 2, 1, 128>}, {pipeline_mode = #tpu.pipeline_mode<synchronous>, transform_indices = @transform_9, window_bounds = array<i64: 2, 1, 128>}, {pipeline_mode = #tpu.pipeline_mode<synchronous>, transform_indices = @transform_10, window_bounds = array<i64: 2, 128, 128>}, {pipeline_mode = #tpu.pipeline_mode<synchronous>, transform_indices = @transform_11, window_bounds = array<i64: 2, 1, 128>}, {pipeline_mode = #tpu.pipeline_mode<synchronous>, transform_indices = @transform_12, window_bounds = array<i64: 2, 128, 128>}, {pipeline_mode = #tpu.pipeline_mode<synchronous>, transform_indices = @transform_13, window_bounds = array<i64: 2, 1, 128>}, {pipeline_mode = #tpu.pipeline_mode<synchronous>, transform_indices = @transform_14, window_bounds = array<i64: 2, 1, 128>}, {pipeline_mode = #tpu.pipeline_mode<synchronous>, transform_indices = @transform_15, window_bounds = array<i64: 2, 1, 128>}, {pipeline_mode = #tpu.pipeline_mode<synchronous>, transform_indices = @transform_16, window_bounds = array<i64: 128, 128>}, {pipeline_mode = #tpu.pipeline_mode<synchronous>, transform_indices = @transform_17, window_bounds = array<i64: 1, 128>}, {transform_indices = @transform_18, window_bounds = array<i64: 1, 8, 128>}, {transform_indices = @transform_19, window_bounds = array<i64: 1, 1, 128>}]} {
    %0 = arith.index_cast %arg0 : i32 to index
    %c0 = arith.constant 0 : index
    %1 = memref.load %arg1[%0, %c0] : memref<2x8xi32, #tpu.memory_space<smem>>
    %2 = arith.index_cast %1 : i32 to index
    %c0_0 = arith.constant 0 : index
    %3 = vector.load %arg3[%2, %c0_0] : memref<100x128xf32, #tpu.memory_space<vmem>>, vector<1x128xf32>
    %4 = arith.index_cast %arg0 : i32 to index
    %c1 = arith.constant 1 : index
    %5 = memref.load %arg1[%4, %c1] : memref<2x8xi32, #tpu.memory_space<smem>>
    %6 = arith.index_cast %5 : i32 to index
    %c0_1 = arith.constant 0 : index
    %7 = vector.load %arg3[%6, %c0_1] : memref<100x128xf32, #tpu.memory_space<vmem>>, vector<1x128xf32>
    %8 = arith.index_cast %arg0 : i32 to index
    %c2 = arith.constant 2 : index
    %9 = memref.load %arg1[%8, %c2] : memref<2x8xi32, #tpu.memory_space<smem>>
    %10 = arith.index_cast %9 : i32 to index
    %c0_2 = arith.constant 0 : index
    %11 = vector.load %arg3[%10, %c0_2] : memref<100x128xf32, #tpu.memory_space<vmem>>, vector<1x128xf32>
    %12 = arith.index_cast %arg0 : i32 to index
    %c3 = arith.constant 3 : index
    %13 = memref.load %arg1[%12, %c3] : memref<2x8xi32, #tpu.memory_space<smem>>
    %14 = arith.index_cast %13 : i32 to index
    %c0_3 = arith.constant 0 : index
    %15 = vector.load %arg3[%14, %c0_3] : memref<100x128xf32, #tpu.memory_space<vmem>>, vector<1x128xf32>
    %16 = arith.index_cast %arg0 : i32 to index
    %c4 = arith.constant 4 : index
    %17 = memref.load %arg1[%16, %c4] : memref<2x8xi32, #tpu.memory_space<smem>>
    %18 = arith.index_cast %17 : i32 to index
    %c0_4 = arith.constant 0 : index
    %19 = vector.load %arg3[%18, %c0_4] : memref<100x128xf32, #tpu.memory_space<vmem>>, vector<1x128xf32>
    %20 = arith.index_cast %arg0 : i32 to index
    %c5 = arith.constant 5 : index
    %21 = memref.load %arg1[%20, %c5] : memref<2x8xi32, #tpu.memory_space<smem>>
    %22 = arith.index_cast %21 : i32 to index
    %c0_5 = arith.constant 0 : index
    %23 = vector.load %arg3[%22, %c0_5] : memref<100x128xf32, #tpu.memory_space<vmem>>, vector<1x128xf32>
    %24 = arith.index_cast %arg0 : i32 to index
    %c6 = arith.constant 6 : index
    %25 = memref.load %arg1[%24, %c6] : memref<2x8xi32, #tpu.memory_space<smem>>
    %26 = arith.index_cast %25 : i32 to index
    %c0_6 = arith.constant 0 : index
    %27 = vector.load %arg3[%26, %c0_6] : memref<100x128xf32, #tpu.memory_space<vmem>>, vector<1x128xf32>
    %28 = arith.index_cast %arg0 : i32 to index
    %c7 = arith.constant 7 : index
    %29 = memref.load %arg1[%28, %c7] : memref<2x8xi32, #tpu.memory_space<smem>>
    %30 = arith.index_cast %29 : i32 to index
    %c0_7 = arith.constant 0 : index
    %31 = vector.load %arg3[%30, %c0_7] : memref<100x128xf32, #tpu.memory_space<vmem>>, vector<1x128xf32>
    %32 = tpu.concatenate %3, %7, %11, %15, %19, %23, %27, %31 in 0 : vector<1x128xf32>, vector<1x128xf32>, vector<1x128xf32>, vector<1x128xf32>, vector<1x128xf32>, vector<1x128xf32>, vector<1x128xf32>, vector<1x128xf32> -> vector<8x128xf32>
    %c0_8 = arith.constant 0 : index
    %c0_9 = arith.constant 0 : index
    %33 = vector.load %arg4[%c0_8, %c0_9] : memref<8x128xf32, #tpu.memory_space<vmem>>, vector<8x128xf32>
    %34 = arith.addf %32, %33 : vector<8x128xf32>
    %c0_10 = arith.constant 0 : index
    %c0_11 = arith.constant 0 : index
    %35 = vector.load %arg5[%c0_10, %c0_11] : memref<1x128xf32, #tpu.memory_space<vmem>>, vector<1x128xf32>
    %c0_12 = arith.constant 0 : index
    %c0_13 = arith.constant 0 : index
    %36 = vector.load %arg6[%c0_12, %c0_13] : memref<1x128xf32, #tpu.memory_space<vmem>>, vector<1x128xf32>
    %cst = arith.constant dense<0.000000e+00> : vector<8xf32>
    %37 = vector.multi_reduction <add>, %34, %cst [1] : vector<8x128xf32> to vector<8xf32>
    %38 = vector.shape_cast %37 : vector<8xf32> to vector<8x1xf32>
    %cst_14 = arith.constant 3.125000e-02 : f32
    %39 = vector.broadcast %cst_14 : f32 to vector<8x1xf32>
    %40 = arith.mulf %38, %39 : vector<8x1xf32>
    %41 = arith.mulf %34, %34 : vector<8x128xf32>
    %cst_15 = arith.constant dense<0.000000e+00> : vector<8xf32>
    %42 = vector.multi_reduction <add>, %41, %cst_15 [1] : vector<8x128xf32> to vector<8xf32>
    %43 = vector.shape_cast %42 : vector<8xf32> to vector<8x1xf32>
    %cst_16 = arith.constant 3.125000e-02 : f32
    %44 = vector.broadcast %cst_16 : f32 to vector<8x1xf32>
    %45 = arith.mulf %43, %44 : vector<8x1xf32>
    %46 = arith.mulf %40, %40 : vector<8x1xf32>
    %47 = arith.subf %45, %46 : vector<8x1xf32>
    %48 = vector.broadcast %40 : vector<8x1xf32> to vector<8x128xf32>
    %49 = arith.subf %34, %48 : vector<8x128xf32>
    %cst_17 = arith.constant 9.99999996E-13 : f32
    %50 = vector.broadcast %cst_17 : f32 to vector<8x1xf32>
    %51 = arith.addf %47, %50 : vector<8x1xf32>
    %52 = math.rsqrt %51 : vector<8x1xf32>
    %53 = vector.broadcast %52 : vector<8x1xf32> to vector<8x128xf32>
    %54 = arith.mulf %49, %53 : vector<8x128xf32>
    %55 = vector.broadcast %35 : vector<1x128xf32> to vector<8x128xf32>
    %56 = arith.mulf %54, %55 : vector<8x128xf32>
    %57 = vector.broadcast %36 : vector<1x128xf32> to vector<8x128xf32>
    %58 = arith.addf %56, %57 : vector<8x128xf32>
    %59 = tpu.iota {dimensions = array<i32: 1>} : vector<1x8xi32>
    %cst_18 = arith.constant 0.000000e+00 : f32
    %60 = vector.broadcast %cst_18 : f32 to vector<1x8xf32>
    %61 = arith.index_cast %arg0 : i32 to index
    %c0_19 = arith.constant 0 : index
    %62 = memref.load %arg2[%61, %c0_19] : memref<2x8xi32, #tpu.memory_space<smem>>
    %c0_i32 = arith.constant 0 : i32
    %63 = arith.cmpi sgt, %62, %c0_i32 : i32
    %cst_20 = arith.constant 0.000000e+00 : f32
    %cst_21 = arith.constant -1.000000e+09 : f32
    %64 = arith.select %63, %cst_20, %cst_21 : f32
    %c0_i32_22 = arith.constant 0 : i32
    %65 = vector.broadcast %c0_i32_22 : i32 to vector<1x8xi32>
    %66 = arith.cmpi eq, %59, %65 : vector<1x8xi32>
    %67 = vector.broadcast %64 : f32 to vector<1x8xf32>
    %68 = arith.select %66, %67, %60 : vector<1x8xi1>, vector<1x8xf32>
    %69 = arith.index_cast %arg0 : i32 to index
    %c1_23 = arith.constant 1 : index
    %70 = memref.load %arg2[%69, %c1_23] : memref<2x8xi32, #tpu.memory_space<smem>>
    %c0_i32_24 = arith.constant 0 : i32
    %71 = arith.cmpi sgt, %70, %c0_i32_24 : i32
    %cst_25 = arith.constant 0.000000e+00 : f32
    %cst_26 = arith.constant -1.000000e+09 : f32
    %72 = arith.select %71, %cst_25, %cst_26 : f32
    %c1_i32 = arith.constant 1 : i32
    %73 = vector.broadcast %c1_i32 : i32 to vector<1x8xi32>
    %74 = arith.cmpi eq, %59, %73 : vector<1x8xi32>
    %75 = vector.broadcast %72 : f32 to vector<1x8xf32>
    %76 = arith.select %74, %75, %68 : vector<1x8xi1>, vector<1x8xf32>
    %77 = arith.index_cast %arg0 : i32 to index
    %c2_27 = arith.constant 2 : index
    %78 = memref.load %arg2[%77, %c2_27] : memref<2x8xi32, #tpu.memory_space<smem>>
    %c0_i32_28 = arith.constant 0 : i32
    %79 = arith.cmpi sgt, %78, %c0_i32_28 : i32
    %cst_29 = arith.constant 0.000000e+00 : f32
    %cst_30 = arith.constant -1.000000e+09 : f32
    %80 = arith.select %79, %cst_29, %cst_30 : f32
    %c2_i32 = arith.constant 2 : i32
    %81 = vector.broadcast %c2_i32 : i32 to vector<1x8xi32>
    %82 = arith.cmpi eq, %59, %81 : vector<1x8xi32>
    %83 = vector.broadcast %80 : f32 to vector<1x8xf32>
    %84 = arith.select %82, %83, %76 : vector<1x8xi1>, vector<1x8xf32>
    %85 = arith.index_cast %arg0 : i32 to index
    %c3_31 = arith.constant 3 : index
    %86 = memref.load %arg2[%85, %c3_31] : memref<2x8xi32, #tpu.memory_space<smem>>
    %c0_i32_32 = arith.constant 0 : i32
    %87 = arith.cmpi sgt, %86, %c0_i32_32 : i32
    %cst_33 = arith.constant 0.000000e+00 : f32
    %cst_34 = arith.constant -1.000000e+09 : f32
    %88 = arith.select %87, %cst_33, %cst_34 : f32
    %c3_i32 = arith.constant 3 : i32
    %89 = vector.broadcast %c3_i32 : i32 to vector<1x8xi32>
    %90 = arith.cmpi eq, %59, %89 : vector<1x8xi32>
    %91 = vector.broadcast %88 : f32 to vector<1x8xf32>
    %92 = arith.select %90, %91, %84 : vector<1x8xi1>, vector<1x8xf32>
    %93 = arith.index_cast %arg0 : i32 to index
    %c4_35 = arith.constant 4 : index
    %94 = memref.load %arg2[%93, %c4_35] : memref<2x8xi32, #tpu.memory_space<smem>>
    %c0_i32_36 = arith.constant 0 : i32
    %95 = arith.cmpi sgt, %94, %c0_i32_36 : i32
    %cst_37 = arith.constant 0.000000e+00 : f32
    %cst_38 = arith.constant -1.000000e+09 : f32
    %96 = arith.select %95, %cst_37, %cst_38 : f32
    %c4_i32 = arith.constant 4 : i32
    %97 = vector.broadcast %c4_i32 : i32 to vector<1x8xi32>
    %98 = arith.cmpi eq, %59, %97 : vector<1x8xi32>
    %99 = vector.broadcast %96 : f32 to vector<1x8xf32>
    %100 = arith.select %98, %99, %92 : vector<1x8xi1>, vector<1x8xf32>
    %101 = arith.index_cast %arg0 : i32 to index
    %c5_39 = arith.constant 5 : index
    %102 = memref.load %arg2[%101, %c5_39] : memref<2x8xi32, #tpu.memory_space<smem>>
    %c0_i32_40 = arith.constant 0 : i32
    %103 = arith.cmpi sgt, %102, %c0_i32_40 : i32
    %cst_41 = arith.constant 0.000000e+00 : f32
    %cst_42 = arith.constant -1.000000e+09 : f32
    %104 = arith.select %103, %cst_41, %cst_42 : f32
    %c5_i32 = arith.constant 5 : i32
    %105 = vector.broadcast %c5_i32 : i32 to vector<1x8xi32>
    %106 = arith.cmpi eq, %59, %105 : vector<1x8xi32>
    %107 = vector.broadcast %104 : f32 to vector<1x8xf32>
    %108 = arith.select %106, %107, %100 : vector<1x8xi1>, vector<1x8xf32>
    %109 = arith.index_cast %arg0 : i32 to index
    %c6_43 = arith.constant 6 : index
    %110 = memref.load %arg2[%109, %c6_43] : memref<2x8xi32, #tpu.memory_space<smem>>
    %c0_i32_44 = arith.constant 0 : i32
    %111 = arith.cmpi sgt, %110, %c0_i32_44 : i32
    %cst_45 = arith.constant 0.000000e+00 : f32
    %cst_46 = arith.constant -1.000000e+09 : f32
    %112 = arith.select %111, %cst_45, %cst_46 : f32
    %c6_i32 = arith.constant 6 : i32
    %113 = vector.broadcast %c6_i32 : i32 to vector<1x8xi32>
    %114 = arith.cmpi eq, %59, %113 : vector<1x8xi32>
    %115 = vector.broadcast %112 : f32 to vector<1x8xf32>
    %116 = arith.select %114, %115, %108 : vector<1x8xi1>, vector<1x8xf32>
    %117 = arith.index_cast %arg0 : i32 to index
    %c7_47 = arith.constant 7 : index
    %118 = memref.load %arg2[%117, %c7_47] : memref<2x8xi32, #tpu.memory_space<smem>>
    %c0_i32_48 = arith.constant 0 : i32
    %119 = arith.cmpi sgt, %118, %c0_i32_48 : i32
    %cst_49 = arith.constant 0.000000e+00 : f32
    %cst_50 = arith.constant -1.000000e+09 : f32
    %120 = arith.select %119, %cst_49, %cst_50 : f32
    %c7_i32 = arith.constant 7 : i32
    %121 = vector.broadcast %c7_i32 : i32 to vector<1x8xi32>
    %122 = arith.cmpi eq, %59, %121 : vector<1x8xi32>
    %123 = vector.broadcast %120 : f32 to vector<1x8xf32>
    %124 = arith.select %122, %123, %116 : vector<1x8xi1>, vector<1x8xf32>
    %125 = vector.shape_cast %124 : vector<1x8xf32> to vector<1x1x8xf32>
    %126 = arith.truncf %58 : vector<8x128xf32> to vector<8x128xbf16>
    %c0_51 = arith.constant 0 : index
    %c0_52 = arith.constant 0 : index
    %c0_53 = arith.constant 0 : index
    %127 = vector.load %arg7[%c0_51, %c0_52, %c0_53] : memref<2x128x128xbf16, #tpu.memory_space<vmem>>, vector<1x128x128xbf16>
    %128 = vector.shape_cast %127 : vector<1x128x128xbf16> to vector<128x128xbf16>
    %cst_54 = arith.constant dense<0.000000e+00> : vector<8x128xf32>
    %129 = tpu.matmul %126, %128, %cst_54 {dimension_numbers = #tpu.dot_dimension_numbers<[1], [0], [0], [1], [0, 0, 1, 1], [], []>} : vector<8x128xbf16>, vector<128x128xbf16>, vector<8x128xf32> -> vector<8x128xf32>
    %c0_55 = arith.constant 0 : index
    %c0_56 = arith.constant 0 : index
    %c0_57 = arith.constant 0 : index
    %130 = vector.load %arg8[%c0_55, %c0_56, %c0_57] : memref<2x1x128xf32, #tpu.memory_space<vmem>>, vector<1x1x128xf32>
    %131 = vector.shape_cast %130 : vector<1x1x128xf32> to vector<1x128xf32>
    %132 = vector.broadcast %131 : vector<1x128xf32> to vector<8x128xf32>
    %133 = arith.addf %129, %132 : vector<8x128xf32>
    %134 = vector.extract_strided_slice %133 {offsets = [0, 0], sizes = [8, 32], strides = [1, 1]} : vector<8x128xf32> to vector<8x32xf32>
    %135 = vector.extract_strided_slice %134 {offsets = [0, 0], sizes = [8, 16], strides = [1, 1]} : vector<8x32xf32> to vector<8x16xf32>
    %136 = vector.extract_strided_slice %134 {offsets = [0, 16], sizes = [8, 16], strides = [1, 1]} : vector<8x32xf32> to vector<8x16xf32>
    %137 = vector.shape_cast %135 : vector<8x16xf32> to vector<1x8x16xf32>
    %138 = vector.shape_cast %136 : vector<8x16xf32> to vector<1x8x16xf32>
    %139 = tpu.concatenate %137, %138 in 0 : vector<1x8x16xf32>, vector<1x8x16xf32> -> vector<2x8x16xf32>
    %140 = arith.truncf %139 : vector<2x8x16xf32> to vector<2x8x16xbf16>
    %141 = vector.extract_strided_slice %133 {offsets = [0, 32], sizes = [8, 32], strides = [1, 1]} : vector<8x128xf32> to vector<8x32xf32>
    %142 = vector.extract_strided_slice %141 {offsets = [0, 0], sizes = [8, 16], strides = [1, 1]} : vector<8x32xf32> to vector<8x16xf32>
    %143 = vector.extract_strided_slice %141 {offsets = [0, 16], sizes = [8, 16], strides = [1, 1]} : vector<8x32xf32> to vector<8x16xf32>
    %144 = vector.shape_cast %142 : vector<8x16xf32> to vector<1x8x16xf32>
    %145 = vector.shape_cast %143 : vector<8x16xf32> to vector<1x8x16xf32>
    %146 = tpu.concatenate %144, %145 in 0 : vector<1x8x16xf32>, vector<1x8x16xf32> -> vector<2x8x16xf32>
    %147 = arith.truncf %146 : vector<2x8x16xf32> to vector<2x8x16xbf16>
    %148 = vector.extract_strided_slice %133 {offsets = [0, 64], sizes = [8, 32], strides = [1, 1]} : vector<8x128xf32> to vector<8x32xf32>
    %149 = vector.extract_strided_slice %148 {offsets = [0, 0], sizes = [8, 16], strides = [1, 1]} : vector<8x32xf32> to vector<8x16xf32>
    %150 = vector.extract_strided_slice %148 {offsets = [0, 16], sizes = [8, 16], strides = [1, 1]} : vector<8x32xf32> to vector<8x16xf32>
    %151 = vector.shape_cast %149 : vector<8x16xf32> to vector<1x8x16xf32>
    %152 = vector.shape_cast %150 : vector<8x16xf32> to vector<1x8x16xf32>
    %153 = tpu.concatenate %151, %152 in 0 : vector<1x8x16xf32>, vector<1x8x16xf32> -> vector<2x8x16xf32>
    %154 = arith.truncf %153 : vector<2x8x16xf32> to vector<2x8x16xbf16>
    "tpu.trace_start"() <{level = 10 : i32, message = "hqd,hkd->hqk"}> : () -> ()
    %cst_58 = arith.constant dense<0.000000e+00> : vector<2x8x8xf32>
    %155 = tpu.matmul %140, %147, %cst_58 {dimension_numbers = #tpu.dot_dimension_numbers<[2], [2], [1], [1], [0, 0, 0, 1, 1, 1], [0], [0]>} : vector<2x8x16xbf16>, vector<2x8x16xbf16>, vector<2x8x8xf32> -> vector<2x8x8xf32>
    "tpu.trace_stop"() : () -> ()
    %156 = vector.broadcast %125 : vector<1x1x8xf32> to vector<2x8x8xf32>
    %157 = arith.addf %155, %156 : vector<2x8x8xf32>
    %cst_59 = arith.constant dense<0xFF800000> : vector<2x8xf32>
    %158 = vector.multi_reduction <maximumf>, %157, %cst_59 [2] : vector<2x8x8xf32> to vector<2x8xf32>
    %159 = vector.shape_cast %158 : vector<2x8xf32> to vector<2x8x1xf32>
    %160 = vector.broadcast %159 : vector<2x8x1xf32> to vector<2x8x8xf32>
    %161 = arith.subf %157, %160 : vector<2x8x8xf32>
    %162 = math.exp %161 : vector<2x8x8xf32>
    %cst_60 = arith.constant dense<0.000000e+00> : vector<2x8xf32>
    %163 = vector.multi_reduction <add>, %162, %cst_60 [2] : vector<2x8x8xf32> to vector<2x8xf32>
    %164 = vector.shape_cast %163 : vector<2x8xf32> to vector<2x8x1xf32>
    %165 = tpu.reciprocal %164 {approx = true} : vector<2x8x1xf32> -> vector<2x8x1xf32>
    %166 = vector.broadcast %165 : vector<2x8x1xf32> to vector<2x8x8xf32>
    %167 = arith.mulf %162, %166 : vector<2x8x8xf32>
    %168 = arith.truncf %167 : vector<2x8x8xf32> to vector<2x8x8xbf16>
    "tpu.trace_start"() <{level = 10 : i32, message = "hqk,hkd->hqd"}> : () -> ()
    %cst_61 = arith.constant dense<0.000000e+00> : vector<2x8x16xf32>
    %169 = tpu.matmul %168, %154, %cst_61 {dimension_numbers = #tpu.dot_dimension_numbers<[2], [1], [1], [2], [0, 0, 0, 1, 1, 2], [0], [0]>} : vector<2x8x8xbf16>, vector<2x8x16xbf16>, vector<2x8x16xf32> -> vector<2x8x16xf32>
    "tpu.trace_stop"() : () -> ()
    %170 = vector.extract_strided_slice %169 {offsets = [0, 0, 0], sizes = [1, 8, 16], strides = [1, 1, 1]} : vector<2x8x16xf32> to vector<1x8x16xf32>
    %171 = vector.shape_cast %170 : vector<1x8x16xf32> to vector<8x16xf32>
    %172 = vector.extract_strided_slice %169 {offsets = [1, 0, 0], sizes = [1, 8, 16], strides = [1, 1, 1]} : vector<2x8x16xf32> to vector<1x8x16xf32>
    %173 = vector.shape_cast %172 : vector<1x8x16xf32> to vector<8x16xf32>
    %174 = tpu.concatenate %171, %173 in 1 : vector<8x16xf32>, vector<8x16xf32> -> vector<8x32xf32>
    %175 = arith.truncf %174 : vector<8x32xf32> to vector<8x32xbf16>
    %c0_62 = arith.constant 0 : index
    %c0_63 = arith.constant 0 : index
    %c0_64 = arith.constant 0 : index
    %176 = vector.load %arg9[%c0_62, %c0_63, %c0_64] : memref<2x32x128xbf16, #tpu.memory_space<vmem>>, vector<1x32x128xbf16>
    %177 = vector.shape_cast %176 : vector<1x32x128xbf16> to vector<32x128xbf16>
    %cst_65 = arith.constant dense<0.000000e+00> : vector<8x128xf32>
    %178 = tpu.matmul %175, %177, %cst_65 {dimension_numbers = #tpu.dot_dimension_numbers<[1], [0], [0], [1], [0, 0, 1, 1], [], []>} : vector<8x32xbf16>, vector<32x128xbf16>, vector<8x128xf32> -> vector<8x128xf32>
    %c0_66 = arith.constant 0 : index
    %c0_67 = arith.constant 0 : index
    %c0_68 = arith.constant 0 : index
    %179 = vector.load %arg10[%c0_66, %c0_67, %c0_68] : memref<2x1x128xf32, #tpu.memory_space<vmem>>, vector<1x1x128xf32>
    %180 = vector.shape_cast %179 : vector<1x1x128xf32> to vector<1x128xf32>
    %181 = vector.broadcast %180 : vector<1x128xf32> to vector<8x128xf32>
    %182 = arith.addf %178, %181 : vector<8x128xf32>
    %183 = arith.addf %58, %182 : vector<8x128xf32>
    %c0_69 = arith.constant 0 : index
    %c0_70 = arith.constant 0 : index
    %c0_71 = arith.constant 0 : index
    %184 = vector.load %arg11[%c0_69, %c0_70, %c0_71] : memref<2x1x128xf32, #tpu.memory_space<vmem>>, vector<1x1x128xf32>
    %185 = vector.shape_cast %184 : vector<1x1x128xf32> to vector<1x128xf32>
    %c0_72 = arith.constant 0 : index
    %c0_73 = arith.constant 0 : index
    %c0_74 = arith.constant 0 : index
    %186 = vector.load %arg12[%c0_72, %c0_73, %c0_74] : memref<2x1x128xf32, #tpu.memory_space<vmem>>, vector<1x1x128xf32>
    %187 = vector.shape_cast %186 : vector<1x1x128xf32> to vector<1x128xf32>
    %cst_75 = arith.constant dense<0.000000e+00> : vector<8xf32>
    %188 = vector.multi_reduction <add>, %183, %cst_75 [1] : vector<8x128xf32> to vector<8xf32>
    %189 = vector.shape_cast %188 : vector<8xf32> to vector<8x1xf32>
    %cst_76 = arith.constant 3.125000e-02 : f32
    %190 = vector.broadcast %cst_76 : f32 to vector<8x1xf32>
    %191 = arith.mulf %189, %190 : vector<8x1xf32>
    %192 = arith.mulf %183, %183 : vector<8x128xf32>
    %cst_77 = arith.constant dense<0.000000e+00> : vector<8xf32>
    %193 = vector.multi_reduction <add>, %192, %cst_77 [1] : vector<8x128xf32> to vector<8xf32>
    %194 = vector.shape_cast %193 : vector<8xf32> to vector<8x1xf32>
    %cst_78 = arith.constant 3.125000e-02 : f32
    %195 = vector.broadcast %cst_78 : f32 to vector<8x1xf32>
    %196 = arith.mulf %194, %195 : vector<8x1xf32>
    %197 = arith.mulf %191, %191 : vector<8x1xf32>
    %198 = arith.subf %196, %197 : vector<8x1xf32>
    %199 = vector.broadcast %191 : vector<8x1xf32> to vector<8x128xf32>
    %200 = arith.subf %183, %199 : vector<8x128xf32>
    %cst_79 = arith.constant 9.99999996E-13 : f32
    %201 = vector.broadcast %cst_79 : f32 to vector<8x1xf32>
    %202 = arith.addf %198, %201 : vector<8x1xf32>
    %203 = math.rsqrt %202 : vector<8x1xf32>
    %204 = vector.broadcast %203 : vector<8x1xf32> to vector<8x128xf32>
    %205 = arith.mulf %200, %204 : vector<8x128xf32>
    %206 = vector.broadcast %185 : vector<1x128xf32> to vector<8x128xf32>
    %207 = arith.mulf %205, %206 : vector<8x128xf32>
    %208 = vector.broadcast %187 : vector<1x128xf32> to vector<8x128xf32>
    %209 = arith.addf %207, %208 : vector<8x128xf32>
    %210 = arith.truncf %209 : vector<8x128xf32> to vector<8x128xbf16>
    %c0_80 = arith.constant 0 : index
    %c0_81 = arith.constant 0 : index
    %c0_82 = arith.constant 0 : index
    %211 = vector.load %arg13[%c0_80, %c0_81, %c0_82] : memref<2x128x128xbf16, #tpu.memory_space<vmem>>, vector<1x128x128xbf16>
    %212 = vector.shape_cast %211 : vector<1x128x128xbf16> to vector<128x128xbf16>
    %cst_83 = arith.constant dense<0.000000e+00> : vector<8x128xf32>
    %213 = tpu.matmul %210, %212, %cst_83 {dimension_numbers = #tpu.dot_dimension_numbers<[1], [0], [0], [1], [0, 0, 1, 1], [], []>} : vector<8x128xbf16>, vector<128x128xbf16>, vector<8x128xf32> -> vector<8x128xf32>
    %c0_84 = arith.constant 0 : index
    %c0_85 = arith.constant 0 : index
    %c0_86 = arith.constant 0 : index
    %214 = vector.load %arg14[%c0_84, %c0_85, %c0_86] : memref<2x1x128xf32, #tpu.memory_space<vmem>>, vector<1x1x128xf32>
    %215 = vector.shape_cast %214 : vector<1x1x128xf32> to vector<1x128xf32>
    %216 = vector.broadcast %215 : vector<1x128xf32> to vector<8x128xf32>
    %217 = arith.addf %213, %216 : vector<8x128xf32>
    %218 = arith.mulf %217, %217 : vector<8x128xf32>
    %219 = arith.mulf %217, %218 : vector<8x128xf32>
    %cst_87 = arith.constant 4.471500e-02 : f32
    %220 = vector.broadcast %cst_87 : f32 to vector<8x128xf32>
    %221 = arith.mulf %220, %219 : vector<8x128xf32>
    %222 = arith.addf %217, %221 : vector<8x128xf32>
    %cst_88 = arith.constant 0.797884583 : f32
    %223 = vector.broadcast %cst_88 : f32 to vector<8x128xf32>
    %224 = arith.mulf %223, %222 : vector<8x128xf32>
    %225 = math.tanh %224 : vector<8x128xf32>
    %cst_89 = arith.constant 1.000000e+00 : f32
    %226 = vector.broadcast %cst_89 : f32 to vector<8x128xf32>
    %227 = arith.addf %226, %225 : vector<8x128xf32>
    %cst_90 = arith.constant 5.000000e-01 : f32
    %228 = vector.broadcast %cst_90 : f32 to vector<8x128xf32>
    %229 = arith.mulf %228, %227 : vector<8x128xf32>
    %230 = arith.mulf %217, %229 : vector<8x128xf32>
    %231 = arith.truncf %230 : vector<8x128xf32> to vector<8x128xbf16>
    %c0_91 = arith.constant 0 : index
    %c0_92 = arith.constant 0 : index
    %c0_93 = arith.constant 0 : index
    %232 = vector.load %arg15[%c0_91, %c0_92, %c0_93] : memref<2x128x128xbf16, #tpu.memory_space<vmem>>, vector<1x128x128xbf16>
    %233 = vector.shape_cast %232 : vector<1x128x128xbf16> to vector<128x128xbf16>
    %cst_94 = arith.constant dense<0.000000e+00> : vector<8x128xf32>
    %234 = tpu.matmul %231, %233, %cst_94 {dimension_numbers = #tpu.dot_dimension_numbers<[1], [0], [0], [1], [0, 0, 1, 1], [], []>} : vector<8x128xbf16>, vector<128x128xbf16>, vector<8x128xf32> -> vector<8x128xf32>
    %c0_95 = arith.constant 0 : index
    %c0_96 = arith.constant 0 : index
    %c0_97 = arith.constant 0 : index
    %235 = vector.load %arg16[%c0_95, %c0_96, %c0_97] : memref<2x1x128xf32, #tpu.memory_space<vmem>>, vector<1x1x128xf32>
    %236 = vector.shape_cast %235 : vector<1x1x128xf32> to vector<1x128xf32>
    %237 = vector.broadcast %236 : vector<1x128xf32> to vector<8x128xf32>
    %238 = arith.addf %234, %237 : vector<8x128xf32>
    %239 = arith.addf %209, %238 : vector<8x128xf32>
    %c0_98 = arith.constant 0 : index
    %c0_99 = arith.constant 0 : index
    %c0_100 = arith.constant 0 : index
    %240 = vector.load %arg17[%c0_98, %c0_99, %c0_100] : memref<2x1x128xf32, #tpu.memory_space<vmem>>, vector<1x1x128xf32>
    %241 = vector.shape_cast %240 : vector<1x1x128xf32> to vector<1x128xf32>
    %c0_101 = arith.constant 0 : index
    %c0_102 = arith.constant 0 : index
    %c0_103 = arith.constant 0 : index
    %242 = vector.load %arg18[%c0_101, %c0_102, %c0_103] : memref<2x1x128xf32, #tpu.memory_space<vmem>>, vector<1x1x128xf32>
    %243 = vector.shape_cast %242 : vector<1x1x128xf32> to vector<1x128xf32>
    %cst_104 = arith.constant dense<0.000000e+00> : vector<8xf32>
    %244 = vector.multi_reduction <add>, %239, %cst_104 [1] : vector<8x128xf32> to vector<8xf32>
    %245 = vector.shape_cast %244 : vector<8xf32> to vector<8x1xf32>
    %cst_105 = arith.constant 3.125000e-02 : f32
    %246 = vector.broadcast %cst_105 : f32 to vector<8x1xf32>
    %247 = arith.mulf %245, %246 : vector<8x1xf32>
    %248 = arith.mulf %239, %239 : vector<8x128xf32>
    %cst_106 = arith.constant dense<0.000000e+00> : vector<8xf32>
    %249 = vector.multi_reduction <add>, %248, %cst_106 [1] : vector<8x128xf32> to vector<8xf32>
    %250 = vector.shape_cast %249 : vector<8xf32> to vector<8x1xf32>
    %cst_107 = arith.constant 3.125000e-02 : f32
    %251 = vector.broadcast %cst_107 : f32 to vector<8x1xf32>
    %252 = arith.mulf %250, %251 : vector<8x1xf32>
    %253 = arith.mulf %247, %247 : vector<8x1xf32>
    %254 = arith.subf %252, %253 : vector<8x1xf32>
    %255 = vector.broadcast %247 : vector<8x1xf32> to vector<8x128xf32>
    %256 = arith.subf %239, %255 : vector<8x128xf32>
    %cst_108 = arith.constant 9.99999996E-13 : f32
    %257 = vector.broadcast %cst_108 : f32 to vector<8x1xf32>
    %258 = arith.addf %254, %257 : vector<8x1xf32>
    %259 = math.rsqrt %258 : vector<8x1xf32>
    %260 = vector.broadcast %259 : vector<8x1xf32> to vector<8x128xf32>
    %261 = arith.mulf %256, %260 : vector<8x128xf32>
    %262 = vector.broadcast %241 : vector<1x128xf32> to vector<8x128xf32>
    %263 = arith.mulf %261, %262 : vector<8x128xf32>
    %264 = vector.broadcast %243 : vector<1x128xf32> to vector<8x128xf32>
    %265 = arith.addf %263, %264 : vector<8x128xf32>
    %266 = arith.truncf %265 : vector<8x128xf32> to vector<8x128xbf16>
    %c1_109 = arith.constant 1 : index
    %c0_110 = arith.constant 0 : index
    %c0_111 = arith.constant 0 : index
    %267 = vector.load %arg7[%c1_109, %c0_110, %c0_111] : memref<2x128x128xbf16, #tpu.memory_space<vmem>>, vector<1x128x128xbf16>
    %268 = vector.shape_cast %267 : vector<1x128x128xbf16> to vector<128x128xbf16>
    %cst_112 = arith.constant dense<0.000000e+00> : vector<8x128xf32>
    %269 = tpu.matmul %266, %268, %cst_112 {dimension_numbers = #tpu.dot_dimension_numbers<[1], [0], [0], [1], [0, 0, 1, 1], [], []>} : vector<8x128xbf16>, vector<128x128xbf16>, vector<8x128xf32> -> vector<8x128xf32>
    %c1_113 = arith.constant 1 : index
    %c0_114 = arith.constant 0 : index
    %c0_115 = arith.constant 0 : index
    %270 = vector.load %arg8[%c1_113, %c0_114, %c0_115] : memref<2x1x128xf32, #tpu.memory_space<vmem>>, vector<1x1x128xf32>
    %271 = vector.shape_cast %270 : vector<1x1x128xf32> to vector<1x128xf32>
    %272 = vector.broadcast %271 : vector<1x128xf32> to vector<8x128xf32>
    %273 = arith.addf %269, %272 : vector<8x128xf32>
    %274 = vector.extract_strided_slice %273 {offsets = [0, 0], sizes = [8, 32], strides = [1, 1]} : vector<8x128xf32> to vector<8x32xf32>
    %275 = vector.extract_strided_slice %274 {offsets = [0, 0], sizes = [8, 16], strides = [1, 1]} : vector<8x32xf32> to vector<8x16xf32>
    %276 = vector.extract_strided_slice %274 {offsets = [0, 16], sizes = [8, 16], strides = [1, 1]} : vector<8x32xf32> to vector<8x16xf32>
    %277 = vector.shape_cast %275 : vector<8x16xf32> to vector<1x8x16xf32>
    %278 = vector.shape_cast %276 : vector<8x16xf32> to vector<1x8x16xf32>
    %279 = tpu.concatenate %277, %278 in 0 : vector<1x8x16xf32>, vector<1x8x16xf32> -> vector<2x8x16xf32>
    %280 = arith.truncf %279 : vector<2x8x16xf32> to vector<2x8x16xbf16>
    %281 = vector.extract_strided_slice %273 {offsets = [0, 32], sizes = [8, 32], strides = [1, 1]} : vector<8x128xf32> to vector<8x32xf32>
    %282 = vector.extract_strided_slice %281 {offsets = [0, 0], sizes = [8, 16], strides = [1, 1]} : vector<8x32xf32> to vector<8x16xf32>
    %283 = vector.extract_strided_slice %281 {offsets = [0, 16], sizes = [8, 16], strides = [1, 1]} : vector<8x32xf32> to vector<8x16xf32>
    %284 = vector.shape_cast %282 : vector<8x16xf32> to vector<1x8x16xf32>
    %285 = vector.shape_cast %283 : vector<8x16xf32> to vector<1x8x16xf32>
    %286 = tpu.concatenate %284, %285 in 0 : vector<1x8x16xf32>, vector<1x8x16xf32> -> vector<2x8x16xf32>
    %287 = arith.truncf %286 : vector<2x8x16xf32> to vector<2x8x16xbf16>
    %288 = vector.extract_strided_slice %273 {offsets = [0, 64], sizes = [8, 32], strides = [1, 1]} : vector<8x128xf32> to vector<8x32xf32>
    %289 = vector.extract_strided_slice %288 {offsets = [0, 0], sizes = [8, 16], strides = [1, 1]} : vector<8x32xf32> to vector<8x16xf32>
    %290 = vector.extract_strided_slice %288 {offsets = [0, 16], sizes = [8, 16], strides = [1, 1]} : vector<8x32xf32> to vector<8x16xf32>
    %291 = vector.shape_cast %289 : vector<8x16xf32> to vector<1x8x16xf32>
    %292 = vector.shape_cast %290 : vector<8x16xf32> to vector<1x8x16xf32>
    %293 = tpu.concatenate %291, %292 in 0 : vector<1x8x16xf32>, vector<1x8x16xf32> -> vector<2x8x16xf32>
    %294 = arith.truncf %293 : vector<2x8x16xf32> to vector<2x8x16xbf16>
    "tpu.trace_start"() <{level = 10 : i32, message = "hqd,hkd->hqk"}> : () -> ()
    %cst_116 = arith.constant dense<0.000000e+00> : vector<2x8x8xf32>
    %295 = tpu.matmul %280, %287, %cst_116 {dimension_numbers = #tpu.dot_dimension_numbers<[2], [2], [1], [1], [0, 0, 0, 1, 1, 1], [0], [0]>} : vector<2x8x16xbf16>, vector<2x8x16xbf16>, vector<2x8x8xf32> -> vector<2x8x8xf32>
    "tpu.trace_stop"() : () -> ()
    %296 = vector.broadcast %125 : vector<1x1x8xf32> to vector<2x8x8xf32>
    %297 = arith.addf %295, %296 : vector<2x8x8xf32>
    %cst_117 = arith.constant dense<0xFF800000> : vector<2x8xf32>
    %298 = vector.multi_reduction <maximumf>, %297, %cst_117 [2] : vector<2x8x8xf32> to vector<2x8xf32>
    %299 = vector.shape_cast %298 : vector<2x8xf32> to vector<2x8x1xf32>
    %300 = vector.broadcast %299 : vector<2x8x1xf32> to vector<2x8x8xf32>
    %301 = arith.subf %297, %300 : vector<2x8x8xf32>
    %302 = math.exp %301 : vector<2x8x8xf32>
    %cst_118 = arith.constant dense<0.000000e+00> : vector<2x8xf32>
    %303 = vector.multi_reduction <add>, %302, %cst_118 [2] : vector<2x8x8xf32> to vector<2x8xf32>
    %304 = vector.shape_cast %303 : vector<2x8xf32> to vector<2x8x1xf32>
    %305 = tpu.reciprocal %304 {approx = true} : vector<2x8x1xf32> -> vector<2x8x1xf32>
    %306 = vector.broadcast %305 : vector<2x8x1xf32> to vector<2x8x8xf32>
    %307 = arith.mulf %302, %306 : vector<2x8x8xf32>
    %308 = arith.truncf %307 : vector<2x8x8xf32> to vector<2x8x8xbf16>
    "tpu.trace_start"() <{level = 10 : i32, message = "hqk,hkd->hqd"}> : () -> ()
    %cst_119 = arith.constant dense<0.000000e+00> : vector<2x8x16xf32>
    %309 = tpu.matmul %308, %294, %cst_119 {dimension_numbers = #tpu.dot_dimension_numbers<[2], [1], [1], [2], [0, 0, 0, 1, 1, 2], [0], [0]>} : vector<2x8x8xbf16>, vector<2x8x16xbf16>, vector<2x8x16xf32> -> vector<2x8x16xf32>
    "tpu.trace_stop"() : () -> ()
    %310 = vector.extract_strided_slice %309 {offsets = [0, 0, 0], sizes = [1, 8, 16], strides = [1, 1, 1]} : vector<2x8x16xf32> to vector<1x8x16xf32>
    %311 = vector.shape_cast %310 : vector<1x8x16xf32> to vector<8x16xf32>
    %312 = vector.extract_strided_slice %309 {offsets = [1, 0, 0], sizes = [1, 8, 16], strides = [1, 1, 1]} : vector<2x8x16xf32> to vector<1x8x16xf32>
    %313 = vector.shape_cast %312 : vector<1x8x16xf32> to vector<8x16xf32>
    %314 = tpu.concatenate %311, %313 in 1 : vector<8x16xf32>, vector<8x16xf32> -> vector<8x32xf32>
    %315 = arith.truncf %314 : vector<8x32xf32> to vector<8x32xbf16>
    %c1_120 = arith.constant 1 : index
    %c0_121 = arith.constant 0 : index
    %c0_122 = arith.constant 0 : index
    %316 = vector.load %arg9[%c1_120, %c0_121, %c0_122] : memref<2x32x128xbf16, #tpu.memory_space<vmem>>, vector<1x32x128xbf16>
    %317 = vector.shape_cast %316 : vector<1x32x128xbf16> to vector<32x128xbf16>
    %cst_123 = arith.constant dense<0.000000e+00> : vector<8x128xf32>
    %318 = tpu.matmul %315, %317, %cst_123 {dimension_numbers = #tpu.dot_dimension_numbers<[1], [0], [0], [1], [0, 0, 1, 1], [], []>} : vector<8x32xbf16>, vector<32x128xbf16>, vector<8x128xf32> -> vector<8x128xf32>
    %c1_124 = arith.constant 1 : index
    %c0_125 = arith.constant 0 : index
    %c0_126 = arith.constant 0 : index
    %319 = vector.load %arg10[%c1_124, %c0_125, %c0_126] : memref<2x1x128xf32, #tpu.memory_space<vmem>>, vector<1x1x128xf32>
    %320 = vector.shape_cast %319 : vector<1x1x128xf32> to vector<1x128xf32>
    %321 = vector.broadcast %320 : vector<1x128xf32> to vector<8x128xf32>
    %322 = arith.addf %318, %321 : vector<8x128xf32>
    %323 = arith.addf %265, %322 : vector<8x128xf32>
    %c1_127 = arith.constant 1 : index
    %c0_128 = arith.constant 0 : index
    %c0_129 = arith.constant 0 : index
    %324 = vector.load %arg11[%c1_127, %c0_128, %c0_129] : memref<2x1x128xf32, #tpu.memory_space<vmem>>, vector<1x1x128xf32>
    %325 = vector.shape_cast %324 : vector<1x1x128xf32> to vector<1x128xf32>
    %c1_130 = arith.constant 1 : index
    %c0_131 = arith.constant 0 : index
    %c0_132 = arith.constant 0 : index
    %326 = vector.load %arg12[%c1_130, %c0_131, %c0_132] : memref<2x1x128xf32, #tpu.memory_space<vmem>>, vector<1x1x128xf32>
    %327 = vector.shape_cast %326 : vector<1x1x128xf32> to vector<1x128xf32>
    %cst_133 = arith.constant dense<0.000000e+00> : vector<8xf32>
    %328 = vector.multi_reduction <add>, %323, %cst_133 [1] : vector<8x128xf32> to vector<8xf32>
    %329 = vector.shape_cast %328 : vector<8xf32> to vector<8x1xf32>
    %cst_134 = arith.constant 3.125000e-02 : f32
    %330 = vector.broadcast %cst_134 : f32 to vector<8x1xf32>
    %331 = arith.mulf %329, %330 : vector<8x1xf32>
    %332 = arith.mulf %323, %323 : vector<8x128xf32>
    %cst_135 = arith.constant dense<0.000000e+00> : vector<8xf32>
    %333 = vector.multi_reduction <add>, %332, %cst_135 [1] : vector<8x128xf32> to vector<8xf32>
    %334 = vector.shape_cast %333 : vector<8xf32> to vector<8x1xf32>
    %cst_136 = arith.constant 3.125000e-02 : f32
    %335 = vector.broadcast %cst_136 : f32 to vector<8x1xf32>
    %336 = arith.mulf %334, %335 : vector<8x1xf32>
    %337 = arith.mulf %331, %331 : vector<8x1xf32>
    %338 = arith.subf %336, %337 : vector<8x1xf32>
    %339 = vector.broadcast %331 : vector<8x1xf32> to vector<8x128xf32>
    %340 = arith.subf %323, %339 : vector<8x128xf32>
    %cst_137 = arith.constant 9.99999996E-13 : f32
    %341 = vector.broadcast %cst_137 : f32 to vector<8x1xf32>
    %342 = arith.addf %338, %341 : vector<8x1xf32>
    %343 = math.rsqrt %342 : vector<8x1xf32>
    %344 = vector.broadcast %343 : vector<8x1xf32> to vector<8x128xf32>
    %345 = arith.mulf %340, %344 : vector<8x128xf32>
    %346 = vector.broadcast %325 : vector<1x128xf32> to vector<8x128xf32>
    %347 = arith.mulf %345, %346 : vector<8x128xf32>
    %348 = vector.broadcast %327 : vector<1x128xf32> to vector<8x128xf32>
    %349 = arith.addf %347, %348 : vector<8x128xf32>
    %350 = arith.truncf %349 : vector<8x128xf32> to vector<8x128xbf16>
    %c1_138 = arith.constant 1 : index
    %c0_139 = arith.constant 0 : index
    %c0_140 = arith.constant 0 : index
    %351 = vector.load %arg13[%c1_138, %c0_139, %c0_140] : memref<2x128x128xbf16, #tpu.memory_space<vmem>>, vector<1x128x128xbf16>
    %352 = vector.shape_cast %351 : vector<1x128x128xbf16> to vector<128x128xbf16>
    %cst_141 = arith.constant dense<0.000000e+00> : vector<8x128xf32>
    %353 = tpu.matmul %350, %352, %cst_141 {dimension_numbers = #tpu.dot_dimension_numbers<[1], [0], [0], [1], [0, 0, 1, 1], [], []>} : vector<8x128xbf16>, vector<128x128xbf16>, vector<8x128xf32> -> vector<8x128xf32>
    %c1_142 = arith.constant 1 : index
    %c0_143 = arith.constant 0 : index
    %c0_144 = arith.constant 0 : index
    %354 = vector.load %arg14[%c1_142, %c0_143, %c0_144] : memref<2x1x128xf32, #tpu.memory_space<vmem>>, vector<1x1x128xf32>
    %355 = vector.shape_cast %354 : vector<1x1x128xf32> to vector<1x128xf32>
    %356 = vector.broadcast %355 : vector<1x128xf32> to vector<8x128xf32>
    %357 = arith.addf %353, %356 : vector<8x128xf32>
    %358 = arith.mulf %357, %357 : vector<8x128xf32>
    %359 = arith.mulf %357, %358 : vector<8x128xf32>
    %cst_145 = arith.constant 4.471500e-02 : f32
    %360 = vector.broadcast %cst_145 : f32 to vector<8x128xf32>
    %361 = arith.mulf %360, %359 : vector<8x128xf32>
    %362 = arith.addf %357, %361 : vector<8x128xf32>
    %cst_146 = arith.constant 0.797884583 : f32
    %363 = vector.broadcast %cst_146 : f32 to vector<8x128xf32>
    %364 = arith.mulf %363, %362 : vector<8x128xf32>
    %365 = math.tanh %364 : vector<8x128xf32>
    %cst_147 = arith.constant 1.000000e+00 : f32
    %366 = vector.broadcast %cst_147 : f32 to vector<8x128xf32>
    %367 = arith.addf %366, %365 : vector<8x128xf32>
    %cst_148 = arith.constant 5.000000e-01 : f32
    %368 = vector.broadcast %cst_148 : f32 to vector<8x128xf32>
    %369 = arith.mulf %368, %367 : vector<8x128xf32>
    %370 = arith.mulf %357, %369 : vector<8x128xf32>
    %371 = arith.truncf %370 : vector<8x128xf32> to vector<8x128xbf16>
    %c1_149 = arith.constant 1 : index
    %c0_150 = arith.constant 0 : index
    %c0_151 = arith.constant 0 : index
    %372 = vector.load %arg15[%c1_149, %c0_150, %c0_151] : memref<2x128x128xbf16, #tpu.memory_space<vmem>>, vector<1x128x128xbf16>
    %373 = vector.shape_cast %372 : vector<1x128x128xbf16> to vector<128x128xbf16>
    %cst_152 = arith.constant dense<0.000000e+00> : vector<8x128xf32>
    %374 = tpu.matmul %371, %373, %cst_152 {dimension_numbers = #tpu.dot_dimension_numbers<[1], [0], [0], [1], [0, 0, 1, 1], [], []>} : vector<8x128xbf16>, vector<128x128xbf16>, vector<8x128xf32> -> vector<8x128xf32>
    %c1_153 = arith.constant 1 : index
    %c0_154 = arith.constant 0 : index
    %c0_155 = arith.constant 0 : index
    %375 = vector.load %arg16[%c1_153, %c0_154, %c0_155] : memref<2x1x128xf32, #tpu.memory_space<vmem>>, vector<1x1x128xf32>
    %376 = vector.shape_cast %375 : vector<1x1x128xf32> to vector<1x128xf32>
    %377 = vector.broadcast %376 : vector<1x128xf32> to vector<8x128xf32>
    %378 = arith.addf %374, %377 : vector<8x128xf32>
    %379 = arith.addf %349, %378 : vector<8x128xf32>
    %c1_156 = arith.constant 1 : index
    %c0_157 = arith.constant 0 : index
    %c0_158 = arith.constant 0 : index
    %380 = vector.load %arg17[%c1_156, %c0_157, %c0_158] : memref<2x1x128xf32, #tpu.memory_space<vmem>>, vector<1x1x128xf32>
    %381 = vector.shape_cast %380 : vector<1x1x128xf32> to vector<1x128xf32>
    %c1_159 = arith.constant 1 : index
    %c0_160 = arith.constant 0 : index
    %c0_161 = arith.constant 0 : index
    %382 = vector.load %arg18[%c1_159, %c0_160, %c0_161] : memref<2x1x128xf32, #tpu.memory_space<vmem>>, vector<1x1x128xf32>
    %383 = vector.shape_cast %382 : vector<1x1x128xf32> to vector<1x128xf32>
    %cst_162 = arith.constant dense<0.000000e+00> : vector<8xf32>
    %384 = vector.multi_reduction <add>, %379, %cst_162 [1] : vector<8x128xf32> to vector<8xf32>
    %385 = vector.shape_cast %384 : vector<8xf32> to vector<8x1xf32>
    %cst_163 = arith.constant 3.125000e-02 : f32
    %386 = vector.broadcast %cst_163 : f32 to vector<8x1xf32>
    %387 = arith.mulf %385, %386 : vector<8x1xf32>
    %388 = arith.mulf %379, %379 : vector<8x128xf32>
    %cst_164 = arith.constant dense<0.000000e+00> : vector<8xf32>
    %389 = vector.multi_reduction <add>, %388, %cst_164 [1] : vector<8x128xf32> to vector<8xf32>
    %390 = vector.shape_cast %389 : vector<8xf32> to vector<8x1xf32>
    %cst_165 = arith.constant 3.125000e-02 : f32
    %391 = vector.broadcast %cst_165 : f32 to vector<8x1xf32>
    %392 = arith.mulf %390, %391 : vector<8x1xf32>
    %393 = arith.mulf %387, %387 : vector<8x1xf32>
    %394 = arith.subf %392, %393 : vector<8x1xf32>
    %395 = vector.broadcast %387 : vector<8x1xf32> to vector<8x128xf32>
    %396 = arith.subf %379, %395 : vector<8x128xf32>
    %cst_166 = arith.constant 9.99999996E-13 : f32
    %397 = vector.broadcast %cst_166 : f32 to vector<8x1xf32>
    %398 = arith.addf %394, %397 : vector<8x1xf32>
    %399 = math.rsqrt %398 : vector<8x1xf32>
    %400 = vector.broadcast %399 : vector<8x1xf32> to vector<8x128xf32>
    %401 = arith.mulf %396, %400 : vector<8x128xf32>
    %402 = vector.broadcast %381 : vector<1x128xf32> to vector<8x128xf32>
    %403 = arith.mulf %401, %402 : vector<8x128xf32>
    %404 = vector.broadcast %383 : vector<1x128xf32> to vector<8x128xf32>
    %405 = arith.addf %403, %404 : vector<8x128xf32>
    %c0_167 = arith.constant 0 : index
    %c0_168 = arith.constant 0 : index
    %c0_169 = arith.constant 0 : index
    %406 = vector.load %arg21[%c0_167, %c0_168, %c0_169] : memref<1x8x128xf32, #tpu.memory_space<vmem>>, vector<1x8x128xf32>
    %407 = vector.shape_cast %406 : vector<1x8x128xf32> to vector<8x128xf32>
    %408 = vector.shape_cast %405 : vector<8x128xf32> to vector<1x8x128xf32>
    tpu.vector_store %arg21[%c0_167, %c0_168, %c0_169], %408 {strides = array<i32>} : memref<1x8x128xf32, #tpu.memory_space<vmem>>, vector<1x8x128xf32>,
    %409 = vector.extract_strided_slice %405 {offsets = [0, 0], sizes = [1, 128], strides = [1, 1]} : vector<8x128xf32> to vector<1x128xf32>
    %410 = arith.truncf %409 : vector<1x128xf32> to vector<1x128xbf16>
    %c0_170 = arith.constant 0 : index
    %c0_171 = arith.constant 0 : index
    %411 = vector.load %arg19[%c0_170, %c0_171] : memref<128x128xbf16, #tpu.memory_space<vmem>>, vector<128x128xbf16>
    %cst_172 = arith.constant dense<0.000000e+00> : vector<1x128xf32>
    %412 = tpu.matmul %410, %411, %cst_172 {dimension_numbers = #tpu.dot_dimension_numbers<[1], [0], [0], [1], [0, 0, 1, 1], [], []>} : vector<1x128xbf16>, vector<128x128xbf16>, vector<1x128xf32> -> vector<1x128xf32>
    %c0_173 = arith.constant 0 : index
    %c0_174 = arith.constant 0 : index
    %413 = vector.load %arg20[%c0_173, %c0_174] : memref<1x128xf32, #tpu.memory_space<vmem>>, vector<1x128xf32>
    %414 = arith.addf %412, %413 : vector<1x128xf32>
    %415 = math.tanh %414 : vector<1x128xf32>
    %c0_175 = arith.constant 0 : index
    %c0_176 = arith.constant 0 : index
    %c0_177 = arith.constant 0 : index
    %416 = vector.load %arg22[%c0_175, %c0_176, %c0_177] : memref<1x1x128xf32, #tpu.memory_space<vmem>>, vector<1x1x128xf32>
    %417 = vector.shape_cast %416 : vector<1x1x128xf32> to vector<1x128xf32>
    %418 = vector.shape_cast %415 : vector<1x128xf32> to vector<1x1x128xf32>
    tpu.vector_store %arg22[%c0_175, %c0_176, %c0_177], %418 {strides = array<i32>} : memref<1x1x128xf32, #tpu.memory_space<vmem>>, vector<1x1x128xf32>,
    return
  }
  func.func @transform_0(%arg0: i32, %arg1: memref<2x8xi32, #tpu.memory_space<smem>>, %arg2: memref<2x8xi32, #tpu.memory_space<smem>>) -> (i32, i32) {
    %c0_i32 = arith.constant 0 : i32
    %c0_i32_0 = arith.constant 0 : i32
    %c0_i32_1 = arith.constant 0 : i32
    return %c0_i32, %c0_i32_0 : i32, i32
  }
  func.func @transform_1(%arg0: i32, %arg1: memref<2x8xi32, #tpu.memory_space<smem>>, %arg2: memref<2x8xi32, #tpu.memory_space<smem>>) -> (i32, i32) {
    %c0_i32 = arith.constant 0 : i32
    %c0_i32_0 = arith.constant 0 : i32
    %c0_i32_1 = arith.constant 0 : i32
    return %c0_i32, %c0_i32_0 : i32, i32
  }
  func.func @transform_2(%arg0: i32, %arg1: memref<2x8xi32, #tpu.memory_space<smem>>, %arg2: memref<2x8xi32, #tpu.memory_space<smem>>) -> (i32, i32) {
    %c0_i32 = arith.constant 0 : i32
    %c0_i32_0 = arith.constant 0 : i32
    %c0_i32_1 = arith.constant 0 : i32
    return %c0_i32, %c0_i32_0 : i32, i32
  }
  func.func @transform_3(%arg0: i32, %arg1: memref<2x8xi32, #tpu.memory_space<smem>>, %arg2: memref<2x8xi32, #tpu.memory_space<smem>>) -> (i32, i32) {
    %c0_i32 = arith.constant 0 : i32
    %c0_i32_0 = arith.constant 0 : i32
    %c0_i32_1 = arith.constant 0 : i32
    return %c0_i32, %c0_i32_0 : i32, i32
  }
  func.func @transform_4(%arg0: i32, %arg1: memref<2x8xi32, #tpu.memory_space<smem>>, %arg2: memref<2x8xi32, #tpu.memory_space<smem>>) -> (i32, i32, i32) {
    %c0_i32 = arith.constant 0 : i32
    %c0_i32_0 = arith.constant 0 : i32
    %c0_i32_1 = arith.constant 0 : i32
    %c0_i32_2 = arith.constant 0 : i32
    return %c0_i32, %c0_i32_0, %c0_i32_1 : i32, i32, i32
  }
  func.func @transform_5(%arg0: i32, %arg1: memref<2x8xi32, #tpu.memory_space<smem>>, %arg2: memref<2x8xi32, #tpu.memory_space<smem>>) -> (i32, i32, i32) {
    %c0_i32 = arith.constant 0 : i32
    %c0_i32_0 = arith.constant 0 : i32
    %c0_i32_1 = arith.constant 0 : i32
    %c0_i32_2 = arith.constant 0 : i32
    return %c0_i32, %c0_i32_0, %c0_i32_1 : i32, i32, i32
  }
  func.func @transform_6(%arg0: i32, %arg1: memref<2x8xi32, #tpu.memory_space<smem>>, %arg2: memref<2x8xi32, #tpu.memory_space<smem>>) -> (i32, i32, i32) {
    %c0_i32 = arith.constant 0 : i32
    %c0_i32_0 = arith.constant 0 : i32
    %c0_i32_1 = arith.constant 0 : i32
    %c0_i32_2 = arith.constant 0 : i32
    return %c0_i32, %c0_i32_0, %c0_i32_1 : i32, i32, i32
  }
  func.func @transform_7(%arg0: i32, %arg1: memref<2x8xi32, #tpu.memory_space<smem>>, %arg2: memref<2x8xi32, #tpu.memory_space<smem>>) -> (i32, i32, i32) {
    %c0_i32 = arith.constant 0 : i32
    %c0_i32_0 = arith.constant 0 : i32
    %c0_i32_1 = arith.constant 0 : i32
    %c0_i32_2 = arith.constant 0 : i32
    return %c0_i32, %c0_i32_0, %c0_i32_1 : i32, i32, i32
  }
  func.func @transform_8(%arg0: i32, %arg1: memref<2x8xi32, #tpu.memory_space<smem>>, %arg2: memref<2x8xi32, #tpu.memory_space<smem>>) -> (i32, i32, i32) {
    %c0_i32 = arith.constant 0 : i32
    %c0_i32_0 = arith.constant 0 : i32
    %c0_i32_1 = arith.constant 0 : i32
    %c0_i32_2 = arith.constant 0 : i32
    return %c0_i32, %c0_i32_0, %c0_i32_1 : i32, i32, i32
  }
  func.func @transform_9(%arg0: i32, %arg1: memref<2x8xi32, #tpu.memory_space<smem>>, %arg2: memref<2x8xi32, #tpu.memory_space<smem>>) -> (i32, i32, i32) {
    %c0_i32 = arith.constant 0 : i32
    %c0_i32_0 = arith.constant 0 : i32
    %c0_i32_1 = arith.constant 0 : i32
    %c0_i32_2 = arith.constant 0 : i32
    return %c0_i32, %c0_i32_0, %c0_i32_1 : i32, i32, i32
  }
  func.func @transform_10(%arg0: i32, %arg1: memref<2x8xi32, #tpu.memory_space<smem>>, %arg2: memref<2x8xi32, #tpu.memory_space<smem>>) -> (i32, i32, i32) {
    %c0_i32 = arith.constant 0 : i32
    %c0_i32_0 = arith.constant 0 : i32
    %c0_i32_1 = arith.constant 0 : i32
    %c0_i32_2 = arith.constant 0 : i32
    return %c0_i32, %c0_i32_0, %c0_i32_1 : i32, i32, i32
  }
  func.func @transform_11(%arg0: i32, %arg1: memref<2x8xi32, #tpu.memory_space<smem>>, %arg2: memref<2x8xi32, #tpu.memory_space<smem>>) -> (i32, i32, i32) {
    %c0_i32 = arith.constant 0 : i32
    %c0_i32_0 = arith.constant 0 : i32
    %c0_i32_1 = arith.constant 0 : i32
    %c0_i32_2 = arith.constant 0 : i32
    return %c0_i32, %c0_i32_0, %c0_i32_1 : i32, i32, i32
  }
  func.func @transform_12(%arg0: i32, %arg1: memref<2x8xi32, #tpu.memory_space<smem>>, %arg2: memref<2x8xi32, #tpu.memory_space<smem>>) -> (i32, i32, i32) {
    %c0_i32 = arith.constant 0 : i32
    %c0_i32_0 = arith.constant 0 : i32
    %c0_i32_1 = arith.constant 0 : i32
    %c0_i32_2 = arith.constant 0 : i32
    return %c0_i32, %c0_i32_0, %c0_i32_1 : i32, i32, i32
  }
  func.func @transform_13(%arg0: i32, %arg1: memref<2x8xi32, #tpu.memory_space<smem>>, %arg2: memref<2x8xi32, #tpu.memory_space<smem>>) -> (i32, i32, i32) {
    %c0_i32 = arith.constant 0 : i32
    %c0_i32_0 = arith.constant 0 : i32
    %c0_i32_1 = arith.constant 0 : i32
    %c0_i32_2 = arith.constant 0 : i32
    return %c0_i32, %c0_i32_0, %c0_i32_1 : i32, i32, i32
  }
  func.func @transform_14(%arg0: i32, %arg1: memref<2x8xi32, #tpu.memory_space<smem>>, %arg2: memref<2x8xi32, #tpu.memory_space<smem>>) -> (i32, i32, i32) {
    %c0_i32 = arith.constant 0 : i32
    %c0_i32_0 = arith.constant 0 : i32
    %c0_i32_1 = arith.constant 0 : i32
    %c0_i32_2 = arith.constant 0 : i32
    return %c0_i32, %c0_i32_0, %c0_i32_1 : i32, i32, i32
  }
  func.func @transform_15(%arg0: i32, %arg1: memref<2x8xi32, #tpu.memory_space<smem>>, %arg2: memref<2x8xi32, #tpu.memory_space<smem>>) -> (i32, i32, i32) {
    %c0_i32 = arith.constant 0 : i32
    %c0_i32_0 = arith.constant 0 : i32
    %c0_i32_1 = arith.constant 0 : i32
    %c0_i32_2 = arith.constant 0 : i32
    return %c0_i32, %c0_i32_0, %c0_i32_1 : i32, i32, i32
  }
  func.func @transform_16(%arg0: i32, %arg1: memref<2x8xi32, #tpu.memory_space<smem>>, %arg2: memref<2x8xi32, #tpu.memory_space<smem>>) -> (i32, i32) {
    %c0_i32 = arith.constant 0 : i32
    %c0_i32_0 = arith.constant 0 : i32
    %c0_i32_1 = arith.constant 0 : i32
    return %c0_i32, %c0_i32_0 : i32, i32
  }
  func.func @transform_17(%arg0: i32, %arg1: memref<2x8xi32, #tpu.memory_space<smem>>, %arg2: memref<2x8xi32, #tpu.memory_space<smem>>) -> (i32, i32) {
    %c0_i32 = arith.constant 0 : i32
    %c0_i32_0 = arith.constant 0 : i32
    %c0_i32_1 = arith.constant 0 : i32
    return %c0_i32, %c0_i32_0 : i32, i32
  }
  func.func @transform_18(%arg0: i32, %arg1: memref<2x8xi32, #tpu.memory_space<smem>>, %arg2: memref<2x8xi32, #tpu.memory_space<smem>>) -> (i32, i32, i32) {
    %c0_i32 = arith.constant 0 : i32
    %c0_i32_0 = arith.constant 0 : i32
    %c0_i32_1 = arith.constant 0 : i32
    return %arg0, %c0_i32, %c0_i32_0 : i32, i32, i32
  }
  func.func @transform_19(%arg0: i32, %arg1: memref<2x8xi32, #tpu.memory_space<smem>>, %arg2: memref<2x8xi32, #tpu.memory_space<smem>>) -> (i32, i32, i32) {
    %c0_i32 = arith.constant 0 : i32
    %c0_i32_0 = arith.constant 0 : i32
    %c0_i32_1 = arith.constant 0 : i32
    return %arg0, %c0_i32, %c0_i32_0 : i32, i32, i32
  }
}

</mosaic_0001>

<llo_original>
// kernel: tpu_custom_call.1
$region0: #{tpu_custom_call.1}
  #allocation0 [shape = 'u32[]', space=smem, size = 0x4, offset = 0x4, fixed_abs, tag = 'smem constant byte address 0x4 - core index']
  #allocation1 [shape = 'u32[144,128]{1,0:T(1,128)}', space=vmem, size = 0x12000, scoped, tag = 'internal scratch']
  #allocation2 [shape = 's32[1]{0}', space=sflag, size = 0x4, scoped, tag = 'scoped memory for tpu_custom_call.1']
  #allocation3 [shape = 'u8[1024]{0}', space=smem, size = 0x400, scoped, tag = 'prefetched SMEM operand 0']
  #allocation4 [shape = 'u8[1024]{0}', space=smem, size = 0x400, scoped, tag = 'prefetched SMEM operand 1']
  %s0 = inlined_call_operand.hbm [shape: s32[2,8], index: 0, kind: input, shape index: {}]
  %s1 = inlined_call_operand.vmem [shape: s32[2,8], index: 1, kind: input, shape index: {}]
  %s2 = inlined_call_operand.hbm [shape: f32[100,128], index: 2, kind: input, shape index: {}]
  %s3 = inlined_call_operand.hbm [shape: f32[8,128], index: 3, kind: input, shape index: {}]
  %s4 = inlined_call_operand.hbm [shape: f32[1,128], index: 4, kind: input, shape index: {}]
  %s5 = inlined_call_operand.hbm [shape: f32[1,128], index: 5, kind: input, shape index: {}]
  %s6 = inlined_call_operand.hbm [shape: bf16[2,128,128], index: 6, kind: input, shape index: {}]
  %s7 = inlined_call_operand.vmem [shape: f32[2,1,128], index: 7, kind: input, shape index: {}]
  %s8 = inlined_call_operand.hbm [shape: bf16[2,32,128], index: 8, kind: input, shape index: {}]
  %s9 = inlined_call_operand.hbm [shape: f32[2,1,128], index: 9, kind: input, shape index: {}]
  %s10 = inlined_call_operand.hbm [shape: f32[2,1,128], index: 10, kind: input, shape index: {}]
  %s11 = inlined_call_operand.hbm [shape: f32[2,1,128], index: 11, kind: input, shape index: {}]
  %s12 = inlined_call_operand.hbm [shape: bf16[2,128,128], index: 12, kind: input, shape index: {}]
  %s13 = inlined_call_operand.hbm [shape: f32[2,1,128], index: 13, kind: input, shape index: {}]
  %s14 = inlined_call_operand.hbm [shape: bf16[2,128,128], index: 14, kind: input, shape index: {}]
  %s15 = inlined_call_operand.hbm [shape: f32[2,1,128], index: 15, kind: input, shape index: {}]
  %s16 = inlined_call_operand.hbm [shape: f32[2,1,128], index: 16, kind: input, shape index: {}]
  %s17 = inlined_call_operand.hbm [shape: f32[2,1,128], index: 17, kind: input, shape index: {}]
  %s18 = inlined_call_operand.vmem [shape: bf16[128,128], index: 18, kind: input, shape index: {}]
  %s19 = inlined_call_operand.vmem [shape: f32[1,128], index: 19, kind: input, shape index: {}]
  %s20 = inlined_call_operand.hbm [shape: f32[2,8,128], index: 20, kind: output, shape index: {0}]
  %s21 = inlined_call_operand.hbm [shape: f32[2,1,128], index: 21, kind: output, shape index: {1}]
  %22 = xla_tuple %s20, %s21
  %s23 = sld [smem:[#allocation0]]
  $region173: #{tpu_custom_call.1} parent=0
    _
  %s25 = ssub.s32 1, %s23
  %s26 = scalar_select 0, %s25, %s23
  %28 = dma.hbm_to_smem %s0, 32, [#allocation3], [#allocation2]
  %s29 = sshll.u32 %s1, 4
  %s30 = int_to_ptr.vmem [resolvable:$true] %s29
  %32 = dma.vmem_to_smem %s30, 32, [#allocation4], [#allocation2]
  %33 = dma.done [#allocation2], 64
  %34 = sfence
  $region1: #{tpu_custom_call.1} parent=0
    #allocation5 [shape = 'u8[53248]{0}', space=vmem, size = 0xd000, scoped, tag = 'input window, operand 2, single buffered']
    #allocation6 [shape = 's32[2]{0}', space=sflag, size = 0x8, scoped, tag = 'scoped memory for tpu_custom_call.1']
    #allocation7 [shape = 's32[2]{0}', space=sflag, size = 0x8, scoped, tag = 'scoped memory for tpu_custom_call.1']
    #allocation8 [shape = 'u8[4096]{0}', space=vmem, size = 0x1000, scoped, tag = 'input window, operand 3, single buffered']
    #allocation9 [shape = 's32[1]{0}', space=sflag, size = 0x4, scoped, tag = 'scoped memory for tpu_custom_call.1']
    #allocation10 [shape = 'u8[512]{0}', space=vmem, size = 0x400, scoped, tag = 'input window, operand 4, single buffered']
    #allocation11 [shape = 'u8[512]{0}', space=vmem, size = 0x400, scoped, tag = 'input window, operand 5, single buffered']
    #allocation12 [shape = 's32[1]{0}', space=sflag, size = 0x4, scoped, tag = 'scoped memory for tpu_custom_call.1']
    #allocation13 [shape = 'u8[65536]{0}', space=vmem, size = 0x10000, scoped, tag = 'input window, operand 6, single buffered']
    #allocation14 [shape = 'u8[16384]{0}', space=vmem, size = 0x4000, scoped, tag = 'input window, operand 8, single buffered']
    #allocation15 [shape = 's32[1]{0}', space=sflag, size = 0x4, scoped, tag = 'scoped memory for tpu_custom_call.1']
    #allocation16 [shape = 'u8[1024]{0}', space=vmem, size = 0x400, scoped, tag = 'input window, operand 9, single buffered']
    #allocation17 [shape = 'u8[1024]{0}', space=vmem, size = 0x400, scoped, tag = 'input window, operand 10, single buffered']
    #allocation18 [shape = 's32[1]{0}', space=sflag, size = 0x4, scoped, tag = 'scoped memory for tpu_custom_call.1']
    #allocation19 [shape = 'u8[1024]{0}', space=vmem, size = 0x400, scoped, tag = 'input window, operand 11, single buffered']
    #allocation20 [shape = 'u8[65536]{0}', space=vmem, size = 0x10000, scoped, tag = 'input window, operand 12, single buffered']
    #allocation21 [shape = 's32[1]{0}', space=sflag, size = 0x4, scoped, tag = 'scoped memory for tpu_custom_call.1']
    #allocation22 [shape = 'u8[1024]{0}', space=vmem, size = 0x400, scoped, tag = 'input window, operand 13, single buffered']
    #allocation23 [shape = 'u8[65536]{0}', space=vmem, size = 0x10000, scoped, tag = 'input window, operand 14, single buffered']
    #allocation24 [shape = 's32[1]{0}', space=sflag, size = 0x4, scoped, tag = 'scoped memory for tpu_custom_call.1']
    #allocation25 [shape = 'u8[1024]{0}', space=vmem, size = 0x400, scoped, tag = 'input window, operand 15, single buffered']
    #allocation26 [shape = 'u8[1024]{0}', space=vmem, size = 0x400, scoped, tag = 'input window, operand 16, single buffered']
    #allocation27 [shape = 's32[1]{0}', space=sflag, size = 0x4, scoped, tag = 'scoped memory for tpu_custom_call.1']
    #allocation28 [shape = 'u8[1024]{0}', space=vmem, size = 0x400, scoped, tag = 'input window, operand 17, single buffered']
    #allocation29 [shape = 'u8[8192]{0}', space=vmem, size = 0x2000, scoped, tag = 'output window, operand 0']
    #allocation30 [shape = 'u8[1024]{0}', space=vmem, size = 0x400, scoped, tag = 'output window, operand 1']
    #allocation31 [shape = 's32[2]{0}', space=sflag, size = 0x8, scoped, tag = 'scoped memory for tpu_custom_call.1']
    %35 = vsyncpa [#allocation6], 0
    %36 = vsyncpa [#allocation9], 0
    %37 = vsyncpa [#allocation12], 0
    %38 = vsyncpa [#allocation15], 0
    %39 = vsyncpa [#allocation18], 0
    %40 = vsyncpa [#allocation21], 0
    %41 = vsyncpa [#allocation24], 0
    %42 = vsyncpa [#allocation27], 0
    %43 = vsyncpa [#allocation7], 0
    %s44 = scalar_lea.sflag [#allocation7], 1
    %45 = vsyncpa %s44, 0
    %46 = vsyncpa [#allocation31], 0
    %s47 = scalar_lea.sflag [#allocation31], 1
    %48 = vsyncpa %s47, 0
    loop: start=0, step=1, limit=4
    $region2: #{tpu_custom_call.1} parent=1 // loop_pre_header
      _
    $region3: #{tpu_custom_call.1} parent=1 // loop_header
      %s50 = sphi 0, %s54
      %p51 = scmp.ge.s32.totalorder %s50, 4
      %s58 = sphi 0, %s58
      %s60 = sphi 0, %s58
      %s61 = sphi 0, %s60
      %s75 = sphi 0, %s61
      %s79 = sphi 0, %s79
      %s81 = sphi 0, %s79
      %s82 = sphi 0, %s81
      %s96 = sphi 0, %s82
      %s100 = sphi 0, %s100
      %s102 = sphi 0, %s100
      %s103 = sphi 0, %s102
      %s117 = sphi 0, %s103
      %s121 = sphi 0, %s121
      %s123 = sphi 0, %s121
      %s124 = sphi 0, %s123
      %s138 = sphi 0, %s124
      %s142 = sphi 0, %s142
      %s144 = sphi 0, %s142
      %s145 = sphi 0, %s144
      %s159 = sphi 0, %s145
      %s163 = sphi 0, %s163
      %s165 = sphi 0, %s163
      %s166 = sphi 0, %s165
      %s180 = sphi 0, %s166
      %s184 = sphi 0, %s184
      %s186 = sphi 0, %s184
      %s187 = sphi 0, %s186
      %s201 = sphi 0, %s187
      %s205 = sphi 0, %s205
      %s207 = sphi 0, %s205
      %s208 = sphi 0, %s207
      %s222 = sphi 0, %s208
      %s226 = sphi 0, %s226
      %s228 = sphi 0, %s226
      %s229 = sphi 0, %s228
      %s243 = sphi 0, %s229
      %s247 = sphi 0, %s247
      %s249 = sphi 0, %s247
      %s250 = sphi 0, %s249
      %s264 = sphi 0, %s250
      %s268 = sphi 0, %s268
      %s270 = sphi 0, %s268
      %s271 = sphi 0, %s270
      %s285 = sphi 0, %s271
      %s289 = sphi 0, %s289
      %s291 = sphi 0, %s289
      %s292 = sphi 0, %s291
      %s306 = sphi 0, %s292
      %s310 = sphi 0, %s310
      %s312 = sphi 0, %s310
      %s313 = sphi 0, %s312
      %s327 = sphi 0, %s313
      %s331 = sphi 0, %s331
      %s333 = sphi 0, %s331
      %s334 = sphi 0, %s333
      %s348 = sphi 0, %s334
      %s352 = sphi 0, %s352
      %s354 = sphi 0, %s352
      %s355 = sphi 0, %s354
      %s369 = sphi 0, %s355
      %s373 = sphi 0, %s373
      %s375 = sphi 0, %s373
      %s376 = sphi 0, %s375
      %s390 = sphi 0, %s376
      %s394 = sphi 0, %s394
      %s396 = sphi 0, %s394
      %s397 = sphi 0, %s396
      %s411 = sphi 0, %s397
      %s415 = sphi 0, %s415
      %s417 = sphi 0, %s415
      %s418 = sphi 0, %s417
      %s432 = sphi 0, %s418
      %s438 = sphi 0, %s440
      %s441 = sphi 0, %s438
      %s442 = sphi 0, %s441
      %s458 = sphi 0, %s442
      %s464 = sphi 0, %s466
      %s467 = sphi 0, %s464
      %s468 = sphi 0, %s467
      %s484 = sphi 0, %s468
    $region4: #{tpu_custom_call.1} parent=1 // loop_header_branch
      %53 = sbr.rel (%p51) target = $region8
    $region5: #{tpu_custom_call.1} parent=1 // loop_body
      %s55 = ssub.s32 %s50, 1
      %s56 = ssub.s32 %s50, 2
      %s57 = sadd.s32 %s50, 1
      %s59 = sadd.s32 %s58, 1
      %p62 = scmp.eq.s32.totalorder %s50, 1
      %p63 = scmp.ne.s32.totalorder %s58, %s60
      %p64 = scmp.eq.s32.totalorder %s50, 0
      %p65 = por %p63, %p64
      %p66 = scmp.ne.s32.totalorder %s58, %s60
      %p67 = scmp.eq.s32.totalorder %s55, 1
      %p68 = por %p66, %p67
      %p69 = scmp.ne.s32.totalorder %s60, %s61
      %p70 = scmp.eq.s32.totalorder %s55, 0
      %p71 = por %p69, %p70
      %p72 = scmp.ne.s32.totalorder %s60, %s61
      %p73 = scmp.eq.s32.totalorder %s56, 1
      %p74 = por %p72, %p73
      %p76 = scmp.ne.s32.totalorder %s61, %s75
      %p77 = scmp.eq.s32.totalorder %s56, 0
      %p78 = por %p76, %p77
      %s80 = sadd.s32 %s79, 1
      %p83 = scmp.eq.s32.totalorder %s50, 1
      %p84 = scmp.ne.s32.totalorder %s79, %s81
      %p85 = scmp.eq.s32.totalorder %s50, 0
      %p86 = por %p84, %p85
      %p87 = scmp.ne.s32.totalorder %s79, %s81
      %p88 = scmp.eq.s32.totalorder %s55, 1
      %p89 = por %p87, %p88
      %p90 = scmp.ne.s32.totalorder %s81, %s82
      %p91 = scmp.eq.s32.totalorder %s55, 0
      %p92 = por %p90, %p91
      %p93 = scmp.ne.s32.totalorder %s81, %s82
      %p94 = scmp.eq.s32.totalorder %s56, 1
      %p95 = por %p93, %p94
      %p97 = scmp.ne.s32.totalorder %s82, %s96
      %p98 = scmp.eq.s32.totalorder %s56, 0
      %p99 = por %p97, %p98
      %s101 = sadd.s32 %s100, 1
      %p104 = scmp.eq.s32.totalorder %s50, 1
      %p105 = scmp.ne.s32.totalorder %s100, %s102
      %p106 = scmp.eq.s32.totalorder %s50, 0
      %p107 = por %p105, %p106
      %p108 = scmp.ne.s32.totalorder %s100, %s102
      %p109 = scmp.eq.s32.totalorder %s55, 1
      %p110 = por %p108, %p109
      %p111 = scmp.ne.s32.totalorder %s102, %s103
      %p112 = scmp.eq.s32.totalorder %s55, 0
      %p113 = por %p111, %p112
      %p114 = scmp.ne.s32.totalorder %s102, %s103
      %p115 = scmp.eq.s32.totalorder %s56, 1
      %p116 = por %p114, %p115
      %p118 = scmp.ne.s32.totalorder %s103, %s117
      %p119 = scmp.eq.s32.totalorder %s56, 0
      %p120 = por %p118, %p119
      %s122 = sadd.s32 %s121, 1
      %p125 = scmp.eq.s32.totalorder %s50, 1
      %p126 = scmp.ne.s32.totalorder %s121, %s123
      %p127 = scmp.eq.s32.totalorder %s50, 0
      %p128 = por %p126, %p127
      %p129 = scmp.ne.s32.totalorder %s121, %s123
      %p130 = scmp.eq.s32.totalorder %s55, 1
      %p131 = por %p129, %p130
      %p132 = scmp.ne.s32.totalorder %s123, %s124
      %p133 = scmp.eq.s32.totalorder %s55, 0
      %p134 = por %p132, %p133
      %p135 = scmp.ne.s32.totalorder %s123, %s124
      %p136 = scmp.eq.s32.totalorder %s56, 1
      %p137 = por %p135, %p136
      %p139 = scmp.ne.s32.totalorder %s124, %s138
      %p140 = scmp.eq.s32.totalorder %s56, 0
      %p141 = por %p139, %p140
      %s143 = sadd.s32 %s142, 1
      %p146 = scmp.eq.s32.totalorder %s50, 1
      %p147 = scmp.ne.s32.totalorder %s142, %s144
      %p148 = scmp.eq.s32.totalorder %s50, 0
      %p149 = por %p147, %p148
      %p150 = scmp.ne.s32.totalorder %s142, %s144
      %p151 = scmp.eq.s32.totalorder %s55, 1
      %p152 = por %p150, %p151
      %p153 = scmp.ne.s32.totalorder %s144, %s145
      %p154 = scmp.eq.s32.totalorder %s55, 0
      %p155 = por %p153, %p154
      %p156 = scmp.ne.s32.totalorder %s144, %s145
      %p157 = scmp.eq.s32.totalorder %s56, 1
      %p158 = por %p156, %p157
      %p160 = scmp.ne.s32.totalorder %s145, %s159
      %p161 = scmp.eq.s32.totalorder %s56, 0
      %p162 = por %p160, %p161
      %s164 = sadd.s32 %s163, 1
      %p167 = scmp.eq.s32.totalorder %s50, 1
      %p168 = scmp.ne.s32.totalorder %s163, %s165
      %p169 = scmp.eq.s32.totalorder %s50, 0
      %p170 = por %p168, %p169
      %p171 = scmp.ne.s32.totalorder %s163, %s165
      %p172 = scmp.eq.s32.totalorder %s55, 1
      %p173 = por %p171, %p172
      %p174 = scmp.ne.s32.totalorder %s165, %s166
      %p175 = scmp.eq.s32.totalorder %s55, 0
      %p176 = por %p174, %p175
      %p177 = scmp.ne.s32.totalorder %s165, %s166
      %p178 = scmp.eq.s32.totalorder %s56, 1
      %p179 = por %p177, %p178
      %p181 = scmp.ne.s32.totalorder %s166, %s180
      %p182 = scmp.eq.s32.totalorder %s56, 0
      %p183 = por %p181, %p182
      %s185 = sadd.s32 %s184, 1
      %p188 = scmp.eq.s32.totalorder %s50, 1
      %p189 = scmp.ne.s32.totalorder %s184, %s186
      %p190 = scmp.eq.s32.totalorder %s50, 0
      %p191 = por %p189, %p190
      %p192 = scmp.ne.s32.totalorder %s184, %s186
      %p193 = scmp.eq.s32.totalorder %s55, 1
      %p194 = por %p192, %p193
      %p195 = scmp.ne.s32.totalorder %s186, %s187
      %p196 = scmp.eq.s32.totalorder %s55, 0
      %p197 = por %p195, %p196
      %p198 = scmp.ne.s32.totalorder %s186, %s187
      %p199 = scmp.eq.s32.totalorder %s56, 1
      %p200 = por %p198, %p199
      %p202 = scmp.ne.s32.totalorder %s187, %s201
      %p203 = scmp.eq.s32.totalorder %s56, 0
      %p204 = por %p202, %p203
      %s206 = sadd.s32 %s205, 1
      %p209 = scmp.eq.s32.totalorder %s50, 1
      %p210 = scmp.ne.s32.totalorder %s205, %s207
      %p211 = scmp.eq.s32.totalorder %s50, 0
      %p212 = por %p210, %p211
      %p213 = scmp.ne.s32.totalorder %s205, %s207
      %p214 = scmp.eq.s32.totalorder %s55, 1
      %p215 = por %p213, %p214
      %p216 = scmp.ne.s32.totalorder %s207, %s208
      %p217 = scmp.eq.s32.totalorder %s55, 0
      %p218 = por %p216, %p217
      %p219 = scmp.ne.s32.totalorder %s207, %s208
      %p220 = scmp.eq.s32.totalorder %s56, 1
      %p221 = por %p219, %p220
      %p223 = scmp.ne.s32.totalorder %s208, %s222
      %p224 = scmp.eq.s32.totalorder %s56, 0
      %p225 = por %p223, %p224
      %s227 = sadd.s32 %s226, 1
      %p230 = scmp.eq.s32.totalorder %s50, 1
      %p231 = scmp.ne.s32.totalorder %s226, %s228
      %p232 = scmp.eq.s32.totalorder %s50, 0
      %p233 = por %p231, %p232
      %p234 = scmp.ne.s32.totalorder %s226, %s228
      %p235 = scmp.eq.s32.totalorder %s55, 1
      %p236 = por %p234, %p235
      %p237 = scmp.ne.s32.totalorder %s228, %s229
      %p238 = scmp.eq.s32.totalorder %s55, 0
      %p239 = por %p237, %p238
      %p240 = scmp.ne.s32.totalorder %s228, %s229
      %p241 = scmp.eq.s32.totalorder %s56, 1
      %p242 = por %p240, %p241
      %p244 = scmp.ne.s32.totalorder %s229, %s243
      %p245 = scmp.eq.s32.totalorder %s56, 0
      %p246 = por %p244, %p245
      %s248 = sadd.s32 %s247, 1
      %p251 = scmp.eq.s32.totalorder %s50, 1
      %p252 = scmp.ne.s32.totalorder %s247, %s249
      %p253 = scmp.eq.s32.totalorder %s50, 0
      %p254 = por %p252, %p253
      %p255 = scmp.ne.s32.totalorder %s247, %s249
      %p256 = scmp.eq.s32.totalorder %s55, 1
      %p257 = por %p255, %p256
      %p258 = scmp.ne.s32.totalorder %s249, %s250
      %p259 = scmp.eq.s32.totalorder %s55, 0
      %p260 = por %p258, %p259
      %p261 = scmp.ne.s32.totalorder %s249, %s250
      %p262 = scmp.eq.s32.totalorder %s56, 1
      %p263 = por %p261, %p262
      %p265 = scmp.ne.s32.totalorder %s250, %s264
      %p266 = scmp.eq.s32.totalorder %s56, 0
      %p267 = por %p265, %p266
      %s269 = sadd.s32 %s268, 1
      %p272 = scmp.eq.s32.totalorder %s50, 1
      %p273 = scmp.ne.s32.totalorder %s268, %s270
      %p274 = scmp.eq.s32.totalorder %s50, 0
      %p275 = por %p273, %p274
      %p276 = scmp.ne.s32.totalorder %s268, %s270
      %p277 = scmp.eq.s32.totalorder %s55, 1
      %p278 = por %p276, %p277
      %p279 = scmp.ne.s32.totalorder %s270, %s271
      %p280 = scmp.eq.s32.totalorder %s55, 0
      %p281 = por %p279, %p280
      %p282 = scmp.ne.s32.totalorder %s270, %s271
      %p283 = scmp.eq.s32.totalorder %s56, 1
      %p284 = por %p282, %p283
      %p286 = scmp.ne.s32.totalorder %s271, %s285
      %p287 = scmp.eq.s32.totalorder %s56, 0
      %p288 = por %p286, %p287
      %s290 = sadd.s32 %s289, 1
      %p293 = scmp.eq.s32.totalorder %s50, 1
      %p294 = scmp.ne.s32.totalorder %s289, %s291
      %p295 = scmp.eq.s32.totalorder %s50, 0
      %p296 = por %p294, %p295
      %p297 = scmp.ne.s32.totalorder %s289, %s291
      %p298 = scmp.eq.s32.totalorder %s55, 1
      %p299 = por %p297, %p298
      %p300 = scmp.ne.s32.totalorder %s291, %s292
      %p301 = scmp.eq.s32.totalorder %s55, 0
      %p302 = por %p300, %p301
      %p303 = scmp.ne.s32.totalorder %s291, %s292
      %p304 = scmp.eq.s32.totalorder %s56, 1
      %p305 = por %p303, %p304
      %p307 = scmp.ne.s32.totalorder %s292, %s306
      %p308 = scmp.eq.s32.totalorder %s56, 0
      %p309 = por %p307, %p308
      %s311 = sadd.s32 %s310, 1
      %p314 = scmp.eq.s32.totalorder %s50, 1
      %p315 = scmp.ne.s32.totalorder %s310, %s312
      %p316 = scmp.eq.s32.totalorder %s50, 0
      %p317 = por %p315, %p316
      %p318 = scmp.ne.s32.totalorder %s310, %s312
      %p319 = scmp.eq.s32.totalorder %s55, 1
      %p320 = por %p318, %p319
      %p321 = scmp.ne.s32.totalorder %s312, %s313
      %p322 = scmp.eq.s32.totalorder %s55, 0
      %p323 = por %p321, %p322
      %p324 = scmp.ne.s32.totalorder %s312, %s313
      %p325 = scmp.eq.s32.totalorder %s56, 1
      %p326 = por %p324, %p325
      %p328 = scmp.ne.s32.totalorder %s313, %s327
      %p329 = scmp.eq.s32.totalorder %s56, 0
      %p330 = por %p328, %p329
      %s332 = sadd.s32 %s331, 1
      %p335 = scmp.eq.s32.totalorder %s50, 1
      %p336 = scmp.ne.s32.totalorder %s331, %s333
      %p337 = scmp.eq.s32.totalorder %s50, 0
      %p338 = por %p336, %p337
      %p339 = scmp.ne.s32.totalorder %s331, %s333
      %p340 = scmp.eq.s32.totalorder %s55, 1
      %p341 = por %p339, %p340
      %p342 = scmp.ne.s32.totalorder %s333, %s334
      %p343 = scmp.eq.s32.totalorder %s55, 0
      %p344 = por %p342, %p343
      %p345 = scmp.ne.s32.totalorder %s333, %s334
      %p346 = scmp.eq.s32.totalorder %s56, 1
      %p347 = por %p345, %p346
      %p349 = scmp.ne.s32.totalorder %s334, %s348
      %p350 = scmp.eq.s32.totalorder %s56, 0
      %p351 = por %p349, %p350
      %s353 = sadd.s32 %s352, 1
      %p356 = scmp.eq.s32.totalorder %s50, 1
      %p357 = scmp.ne.s32.totalorder %s352, %s354
      %p358 = scmp.eq.s32.totalorder %s50, 0
      %p359 = por %p357, %p358
      %p360 = scmp.ne.s32.totalorder %s352, %s354
      %p361 = scmp.eq.s32.totalorder %s55, 1
      %p362 = por %p360, %p361
      %p363 = scmp.ne.s32.totalorder %s354, %s355
      %p364 = scmp.eq.s32.totalorder %s55, 0
      %p365 = por %p363, %p364
      %p366 = scmp.ne.s32.totalorder %s354, %s355
      %p367 = scmp.eq.s32.totalorder %s56, 1
      %p368 = por %p366, %p367
      %p370 = scmp.ne.s32.totalorder %s355, %s369
      %p371 = scmp.eq.s32.totalorder %s56, 0
      %p372 = por %p370, %p371
      %s374 = sadd.s32 %s373, 1
      %p377 = scmp.eq.s32.totalorder %s50, 1
      %p378 = scmp.ne.s32.totalorder %s373, %s375
      %p379 = scmp.eq.s32.totalorder %s50, 0
      %p380 = por %p378, %p379
      %p381 = scmp.ne.s32.totalorder %s373, %s375
      %p382 = scmp.eq.s32.totalorder %s55, 1
      %p383 = por %p381, %p382
      %p384 = scmp.ne.s32.totalorder %s375, %s376
      %p385 = scmp.eq.s32.totalorder %s55, 0
      %p386 = por %p384, %p385
      %p387 = scmp.ne.s32.totalorder %s375, %s376
      %p388 = scmp.eq.s32.totalorder %s56, 1
      %p389 = por %p387, %p388
      %p391 = scmp.ne.s32.totalorder %s376, %s390
      %p392 = scmp.eq.s32.totalorder %s56, 0
      %p393 = por %p391, %p392
      %s395 = sadd.s32 %s394, 1
      %p398 = scmp.eq.s32.totalorder %s50, 1
      %p399 = scmp.ne.s32.totalorder %s394, %s396
      %p400 = scmp.eq.s32.totalorder %s50, 0
      %p401 = por %p399, %p400
      %p402 = scmp.ne.s32.totalorder %s394, %s396
      %p403 = scmp.eq.s32.totalorder %s55, 1
      %p404 = por %p402, %p403
      %p405 = scmp.ne.s32.totalorder %s396, %s397
      %p406 = scmp.eq.s32.totalorder %s55, 0
      %p407 = por %p405, %p406
      %p408 = scmp.ne.s32.totalorder %s396, %s397
      %p409 = scmp.eq.s32.totalorder %s56, 1
      %p410 = por %p408, %p409
      %p412 = scmp.ne.s32.totalorder %s397, %s411
      %p413 = scmp.eq.s32.totalorder %s56, 0
      %p414 = por %p412, %p413
      %s416 = sadd.s32 %s415, 1
      %p419 = scmp.eq.s32.totalorder %s50, 1
      %p420 = scmp.ne.s32.totalorder %s415, %s417
      %p421 = scmp.eq.s32.totalorder %s50, 0
      %p422 = por %p420, %p421
      %p423 = scmp.ne.s32.totalorder %s415, %s417
      %p424 = scmp.eq.s32.totalorder %s55, 1
      %p425 = por %p423, %p424
      %p426 = scmp.ne.s32.totalorder %s417, %s418
      %p427 = scmp.eq.s32.totalorder %s55, 0
      %p428 = por %p426, %p427
      %p429 = scmp.ne.s32.totalorder %s417, %s418
      %p430 = scmp.eq.s32.totalorder %s56, 1
      %p431 = por %p429, %p430
      %p433 = scmp.ne.s32.totalorder %s418, %s432
      %p434 = scmp.eq.s32.totalorder %s56, 0
      %p435 = por %p433, %p434
      %s436 = ssub.s32 %s50, %s57
      %p437 = scmp.eq.s32.totalorder %s436, 0
      %s439 = sadd.s32 %s438, 1
      %s440 = scalar_select %p437, %s438, %s439
      %p443 = pneg %p437
      %p444 = scmp.eq.s32.totalorder %s50, 1
      %p445 = por %p443, %p444
      %p446 = scmp.ne.s32.totalorder %s438, %s441
      %p447 = scmp.eq.s32.totalorder %s50, 0
      %p448 = por %p446, %p447
      %p449 = scmp.ne.s32.totalorder %s438, %s441
      %p450 = scmp.eq.s32.totalorder %s55, 1
      %p451 = por %p449, %p450
      %p452 = scmp.ne.s32.totalorder %s441, %s442
      %p453 = scmp.eq.s32.totalorder %s55, 0
      %p454 = por %p452, %p453
      %p455 = scmp.ne.s32.totalorder %s441, %s442
      %p456 = scmp.eq.s32.totalorder %s56, 1
      %p457 = por %p455, %p456
      %p459 = scmp.ne.s32.totalorder %s442, %s458
      %p460 = scmp.eq.s32.totalorder %s56, 0
      %p461 = por %p459, %p460
      %s462 = ssub.s32 %s50, %s57
      %p463 = scmp.eq.s32.totalorder %s462, 0
      %s465 = sadd.s32 %s464, 1
      %s466 = scalar_select %p463, %s464, %s465
      %p469 = pneg %p463
      %p470 = scmp.eq.s32.totalorder %s50, 1
      %p471 = por %p469, %p470
      %p472 = scmp.ne.s32.totalorder %s464, %s467
      %p473 = scmp.eq.s32.totalorder %s50, 0
      %p474 = por %p472, %p473
      %p475 = scmp.ne.s32.totalorder %s464, %s467
      %p476 = scmp.eq.s32.totalorder %s55, 1
      %p477 = por %p475, %p476
      %p478 = scmp.ne.s32.totalorder %s467, %s468
      %p479 = scmp.eq.s32.totalorder %s55, 0
      %p480 = por %p478, %p479
      %p481 = scmp.ne.s32.totalorder %s467, %s468
      %p482 = scmp.eq.s32.totalorder %s56, 1
      %p483 = por %p481, %p482
      %p485 = scmp.ne.s32.totalorder %s468, %s484
      %p486 = scmp.eq.s32.totalorder %s56, 0
      %p487 = por %p485, %p486
      %p488 = scmp.le.s32.totalorder 1, %s50
      %p489 = scmp.lt.s32.totalorder %s50, 3
      %p490 = pnand %p488, %p489
      %p491 = pneg %p490
      // Predicated region
      $region9: #{tpu_custom_call.1} parent=5 // pred_check
        _
      $region10: #{tpu_custom_call.1} parent=5 // pred_check_branch
        %493 = sbr.rel (%p490) target = $region12
      $region11: #{tpu_custom_call.1} parent=5 // pred_region
        %s494 = ssub.s32 %s50, 1
        // Predicated region
        $region13: #{tpu_custom_call.1} parent=11 // pred_check
          %p495 = pneg %p71
        $region14: #{tpu_custom_call.1} parent=11 // pred_check_branch
          %497 = sbr.rel (%p495) target = $region16
        $region15: #{tpu_custom_call.1} parent=11 // pred_region
          %s499 = ssub.s32 1664, 1664
          %500 = vsyncadd [#allocation6], %s499
          %s501 = sshll.u32 [#allocation5], 4
          %s502 = int_to_ptr.vmem [resolvable:$true] %s501
          %507 = dma.hbm_to_vmem [thread:$0]  %s2, 1664, %s502, [#allocation6], 128, 128, 8
        $region16: #{tpu_custom_call.1} parent=11 // pred_fallthru
          _
        // Predicated region
        $region17: #{tpu_custom_call.1} parent=11 // pred_check
          %p508 = pneg %p92
        $region18: #{tpu_custom_call.1} parent=11 // pred_check_branch
          %510 = sbr.rel (%p508) target = $region20
        $region19: #{tpu_custom_call.1} parent=11 // pred_region
          %s512 = ssub.s32 128, 128
          %513 = vsyncadd [#allocation9], %s512
          %s515 = sshll.u32 [#allocation8], 4
          %s516 = int_to_ptr.vmem [resolvable:$true] %s515
          %518 = dma.hbm_to_vmem [thread:$0]  %s3, 128, %s516, [#allocation9]
        $region20: #{tpu_custom_call.1} parent=11 // pred_fallthru
          _
        // Predicated region
        $region21: #{tpu_custom_call.1} parent=11 // pred_check
          %p519 = pneg %p113
        $region22: #{tpu_custom_call.1} parent=11 // pred_check_branch
          %521 = sbr.rel (%p519) target = $region24
        $region23: #{tpu_custom_call.1} parent=11 // pred_region
          %s523 = ssub.s32 16, 16
          %524 = vsyncadd [#allocation9], %s523
          %s526 = sshll.u32 [#allocation10], 4
          %s527 = int_to_ptr.vmem [resolvable:$true] %s526
          %529 = dma.hbm_to_vmem [thread:$0]  %s4, 16, %s527, [#allocation9]
        $region24: #{tpu_custom_call.1} parent=11 // pred_fallthru
          _
        // Predicated region
        $region25: #{tpu_custom_call.1} parent=11 // pred_check
          %p530 = pneg %p134
        $region26: #{tpu_custom_call.1} parent=11 // pred_check_branch
          %532 = sbr.rel (%p530) target = $region28
        $region27: #{tpu_custom_call.1} parent=11 // pred_region
          %s534 = ssub.s32 16, 16
          %535 = vsyncadd [#allocation12], %s534
          %s537 = sshll.u32 [#allocation11], 4
          %s538 = int_to_ptr.vmem [resolvable:$true] %s537
          %540 = dma.hbm_to_vmem [thread:$0]  %s5, 16, %s538, [#allocation12]
        $region28: #{tpu_custom_call.1} parent=11 // pred_fallthru
          _
        // Predicated region
        $region29: #{tpu_custom_call.1} parent=11 // pred_check
          %p541 = pneg %p155
        $region30: #{tpu_custom_call.1} parent=11 // pred_check_branch
          %543 = sbr.rel (%p541) target = $region32
        $region31: #{tpu_custom_call.1} parent=11 // pred_region
          %s545 = ssub.s32 2048, 2048
          %546 = vsyncadd [#allocation12], %s545
          %s547 = sshll.u32 [#allocation13], 4
          %s548 = int_to_ptr.vmem [resolvable:$true] %s547
          %553 = dma.hbm_to_vmem [thread:$0]  %s6, 2048, %s548, [#allocation12], 64, 64, 4
        $region32: #{tpu_custom_call.1} parent=11 // pred_fallthru
          _
        // Predicated region
        $region33: #{tpu_custom_call.1} parent=11 // pred_check
          %p554 = pneg %p176
        $region34: #{tpu_custom_call.1} parent=11 // pred_check_branch
          %556 = sbr.rel (%p554) target = $region36
        $region35: #{tpu_custom_call.1} parent=11 // pred_region
          _
        $region36: #{tpu_custom_call.1} parent=11 // pred_fallthru
          _
        // Predicated region
        $region37: #{tpu_custom_call.1} parent=11 // pred_check
          %p557 = pneg %p197
        $region38: #{tpu_custom_call.1} parent=11 // pred_check_branch
          %559 = sbr.rel (%p557) target = $region40
        $region39: #{tpu_custom_call.1} parent=11 // pred_region
          %s561 = ssub.s32 512, 512
          %562 = vsyncadd [#allocation15], %s561
          %s563 = sshll.u32 [#allocation14], 4
          %s564 = int_to_ptr.vmem [resolvable:$true] %s563
          %569 = dma.hbm_to_vmem [thread:$0]  %s8, 512, %s564, [#allocation15], 64, 64, 4
        $region40: #{tpu_custom_call.1} parent=11 // pred_fallthru
          _
        // Predicated region
        $region41: #{tpu_custom_call.1} parent=11 // pred_check
          %p570 = pneg %p218
        $region42: #{tpu_custom_call.1} parent=11 // pred_check_branch
          %572 = sbr.rel (%p570) target = $region44
        $region43: #{tpu_custom_call.1} parent=11 // pred_region
          %s574 = ssub.s32 32, 32
          %575 = vsyncadd [#allocation15], %s574
          %s576 = sshll.u32 [#allocation16], 4
          %s577 = int_to_ptr.vmem [resolvable:$true] %s576
          %582 = dma.hbm_to_vmem [thread:$0]  %s9, 32, %s577, [#allocation15], 16, 16, 1
        $region44: #{tpu_custom_call.1} parent=11 // pred_fallthru
          _
        // Predicated region
        $region45: #{tpu_custom_call.1} parent=11 // pred_check
          %p583 = pneg %p239
        $region46: #{tpu_custom_call.1} parent=11 // pred_check_branch
          %585 = sbr.rel (%p583) target = $region48
        $region47: #{tpu_custom_call.1} parent=11 // pred_region
          %s587 = ssub.s32 32, 32
          %588 = vsyncadd [#allocation18], %s587
          %s589 = sshll.u32 [#allocation17], 4
          %s590 = int_to_ptr.vmem [resolvable:$true] %s589
          %595 = dma.hbm_to_vmem [thread:$0]  %s10, 32, %s590, [#allocation18], 16, 16, 1
        $region48: #{tpu_custom_call.1} parent=11 // pred_fallthru
          _
        // Predicated region
        $region49: #{tpu_custom_call.1} parent=11 // pred_check
          %p596 = pneg %p260
        $region50: #{tpu_custom_call.1} parent=11 // pred_check_branch
          %598 = sbr.rel (%p596) target = $region52
        $region51: #{tpu_custom_call.1} parent=11 // pred_region
          %s600 = ssub.s32 32, 32
          %601 = vsyncadd [#allocation18], %s600
          %s602 = sshll.u32 [#allocation19], 4
          %s603 = int_to_ptr.vmem [resolvable:$true] %s602
          %608 = dma.hbm_to_vmem [thread:$0]  %s11, 32, %s603, [#allocation18], 16, 16, 1
        $region52: #{tpu_custom_call.1} parent=11 // pred_fallthru
          _
        // Predicated region
        $region53: #{tpu_custom_call.1} parent=11 // pred_check
          %p609 = pneg %p281
        $region54: #{tpu_custom_call.1} parent=11 // pred_check_branch
          %611 = sbr.rel (%p609) target = $region56
        $region55: #{tpu_custom_call.1} parent=11 // pred_region
          %s613 = ssub.s32 2048, 2048
          %614 = vsyncadd [#allocation21], %s613
          %s615 = sshll.u32 [#allocation20], 4
          %s616 = int_to_ptr.vmem [resolvable:$true] %s615
          %621 = dma.hbm_to_vmem [thread:$0]  %s12, 2048, %s616, [#allocation21], 64, 64, 4
        $region56: #{tpu_custom_call.1} parent=11 // pred_fallthru
          _
        // Predicated region
        $region57: #{tpu_custom_call.1} parent=11 // pred_check
          %p622 = pneg %p302
        $region58: #{tpu_custom_call.1} parent=11 // pred_check_branch
          %624 = sbr.rel (%p622) target = $region60
        $region59: #{tpu_custom_call.1} parent=11 // pred_region
          %s626 = ssub.s32 32, 32
          %627 = vsyncadd [#allocation21], %s626
          %s628 = sshll.u32 [#allocation22], 4
          %s629 = int_to_ptr.vmem [resolvable:$true] %s628
          %634 = dma.hbm_to_vmem [thread:$0]  %s13, 32, %s629, [#allocation21], 16, 16, 1
        $region60: #{tpu_custom_call.1} parent=11 // pred_fallthru
          _
        // Predicated region
        $region61: #{tpu_custom_call.1} parent=11 // pred_check
          %p635 = pneg %p323
        $region62: #{tpu_custom_call.1} parent=11 // pred_check_branch
          %637 = sbr.rel (%p635) target = $region64
        $region63: #{tpu_custom_call.1} parent=11 // pred_region
          %s639 = ssub.s32 2048, 2048
          %640 = vsyncadd [#allocation24], %s639
          %s641 = sshll.u32 [#allocation23], 4
          %s642 = int_to_ptr.vmem [resolvable:$true] %s641
          %647 = dma.hbm_to_vmem [thread:$0]  %s14, 2048, %s642, [#allocation24], 64, 64, 4
        $region64: #{tpu_custom_call.1} parent=11 // pred_fallthru
          _
        // Predicated region
        $region65: #{tpu_custom_call.1} parent=11 // pred_check
          %p648 = pneg %p344
        $region66: #{tpu_custom_call.1} parent=11 // pred_check_branch
          %650 = sbr.rel (%p648) target = $region68
        $region67: #{tpu_custom_call.1} parent=11 // pred_region
          %s652 = ssub.s32 32, 32
          %653 = vsyncadd [#allocation24], %s652
          %s654 = sshll.u32 [#allocation25], 4
          %s655 = int_to_ptr.vmem [resolvable:$true] %s654
          %660 = dma.hbm_to_vmem [thread:$0]  %s15, 32, %s655, [#allocation24], 16, 16, 1
        $region68: #{tpu_custom_call.1} parent=11 // pred_fallthru
          _
        // Predicated region
        $region69: #{tpu_custom_call.1} parent=11 // pred_check
          %p661 = pneg %p365
        $region70: #{tpu_custom_call.1} parent=11 // pred_check_branch
          %663 = sbr.rel (%p661) target = $region72
        $region71: #{tpu_custom_call.1} parent=11 // pred_region
          %s665 = ssub.s32 32, 32
          %666 = vsyncadd [#allocation27], %s665
          %s667 = sshll.u32 [#allocation26], 4
          %s668 = int_to_ptr.vmem [resolvable:$true] %s667
          %673 = dma.hbm_to_vmem [thread:$0]  %s16, 32, %s668, [#allocation27], 16, 16, 1
        $region72: #{tpu_custom_call.1} parent=11 // pred_fallthru
          _
        // Predicated region
        $region73: #{tpu_custom_call.1} parent=11 // pred_check
          %p674 = pneg %p386
        $region74: #{tpu_custom_call.1} parent=11 // pred_check_branch
          %676 = sbr.rel (%p674) target = $region76
        $region75: #{tpu_custom_call.1} parent=11 // pred_region
          %s678 = ssub.s32 32, 32
          %679 = vsyncadd [#allocation27], %s678
          %s680 = sshll.u32 [#allocation28], 4
          %s681 = int_to_ptr.vmem [resolvable:$true] %s680
          %686 = dma.hbm_to_vmem [thread:$0]  %s17, 32, %s681, [#allocation27], 16, 16, 1
        $region76: #{tpu_custom_call.1} parent=11 // pred_fallthru
          _
        // Predicated region
        $region77: #{tpu_custom_call.1} parent=11 // pred_check
          %p687 = pneg %p407
        $region78: #{tpu_custom_call.1} parent=11 // pred_check_branch
          %689 = sbr.rel (%p687) target = $region80
        $region79: #{tpu_custom_call.1} parent=11 // pred_region
          _
        $region80: #{tpu_custom_call.1} parent=11 // pred_fallthru
          _
        // Predicated region
        $region81: #{tpu_custom_call.1} parent=11 // pred_check
          %p690 = pneg %p428
        $region82: #{tpu_custom_call.1} parent=11 // pred_check_branch
          %692 = sbr.rel (%p690) target = $region84
        $region83: #{tpu_custom_call.1} parent=11 // pred_region
          _
        $region84: #{tpu_custom_call.1} parent=11 // pred_fallthru
          _
      $region12: #{tpu_custom_call.1} parent=5 // pred_fallthru
        _
      %p693 = scmp.lt.s32.totalorder %s50, 2
      // Predicated region
      $region85: #{tpu_custom_call.1} parent=5 // pred_check
        %p694 = pneg %p693
      $region86: #{tpu_custom_call.1} parent=5 // pred_check_branch
        %696 = sbr.rel (%p694) target = $region88
      $region87: #{tpu_custom_call.1} parent=5 // pred_region
        _
      $region88: #{tpu_custom_call.1} parent=5 // pred_fallthru
        _
      %p697 = scmp.le.s32.totalorder 1, %s50
      %p698 = scmp.lt.s32.totalorder %s50, 3
      %p699 = pnand %p697, %p698
      %p700 = pneg %p699
      // Predicated region
      $region89: #{tpu_custom_call.1} parent=5 // pred_check
        _
      $region90: #{tpu_custom_call.1} parent=5 // pred_check_branch
        %702 = sbr.rel (%p699) target = $region92
      $region91: #{tpu_custom_call.1} parent=5 // pred_region
        %s703 = ssub.s32 %s50, 1
        // Predicated region
        $region93: #{tpu_custom_call.1} parent=91 // pred_check
          %p704 = pneg %p71
        $region94: #{tpu_custom_call.1} parent=91 // pred_check_branch
          %706 = sbr.rel (%p704) target = $region96
        $region95: #{tpu_custom_call.1} parent=91 // pred_region
          %707 = dma.done [#allocation6], 1664
        $region96: #{tpu_custom_call.1} parent=91 // pred_fallthru
          _
        // Predicated region
        $region97: #{tpu_custom_call.1} parent=91 // pred_check
          %p708 = pneg %p92
        $region98: #{tpu_custom_call.1} parent=91 // pred_check_branch
          %710 = sbr.rel (%p708) target = $region100
        $region99: #{tpu_custom_call.1} parent=91 // pred_region
          %711 = dma.done [#allocation9], 128
        $region100: #{tpu_custom_call.1} parent=91 // pred_fallthru
          _
        // Predicated region
        $region101: #{tpu_custom_call.1} parent=91 // pred_check
          %p712 = pneg %p113
        $region102: #{tpu_custom_call.1} parent=91 // pred_check_branch
          %714 = sbr.rel (%p712) target = $region104
        $region103: #{tpu_custom_call.1} parent=91 // pred_region
          %715 = dma.done [#allocation9], 16
        $region104: #{tpu_custom_call.1} parent=91 // pred_fallthru
          _
        // Predicated region
        $region105: #{tpu_custom_call.1} parent=91 // pred_check
          %p716 = pneg %p134
        $region106: #{tpu_custom_call.1} parent=91 // pred_check_branch
          %718 = sbr.rel (%p716) target = $region108
        $region107: #{tpu_custom_call.1} parent=91 // pred_region
          %719 = dma.done [#allocation12], 16
        $region108: #{tpu_custom_call.1} parent=91 // pred_fallthru
          _
        // Predicated region
        $region109: #{tpu_custom_call.1} parent=91 // pred_check
          %p720 = pneg %p155
        $region110: #{tpu_custom_call.1} parent=91 // pred_check_branch
          %722 = sbr.rel (%p720) target = $region112
        $region111: #{tpu_custom_call.1} parent=91 // pred_region
          %723 = dma.done [#allocation12], 2048
        $region112: #{tpu_custom_call.1} parent=91 // pred_fallthru
          _
        // Predicated region
        $region113: #{tpu_custom_call.1} parent=91 // pred_check
          %p724 = pneg %p197
        $region114: #{tpu_custom_call.1} parent=91 // pred_check_branch
          %726 = sbr.rel (%p724) target = $region116
        $region115: #{tpu_custom_call.1} parent=91 // pred_region
          %727 = dma.done [#allocation15], 512
        $region116: #{tpu_custom_call.1} parent=91 // pred_fallthru
          _
        // Predicated region
        $region117: #{tpu_custom_call.1} parent=91 // pred_check
          %p728 = pneg %p218
        $region118: #{tpu_custom_call.1} parent=91 // pred_check_branch
          %730 = sbr.rel (%p728) target = $region120
        $region119: #{tpu_custom_call.1} parent=91 // pred_region
          %731 = dma.done [#allocation15], 32
        $region120: #{tpu_custom_call.1} parent=91 // pred_fallthru
          _
        // Predicated region
        $region121: #{tpu_custom_call.1} parent=91 // pred_check
          %p732 = pneg %p239
        $region122: #{tpu_custom_call.1} parent=91 // pred_check_branch
          %734 = sbr.rel (%p732) target = $region124
        $region123: #{tpu_custom_call.1} parent=91 // pred_region
          %735 = dma.done [#allocation18], 32
        $region124: #{tpu_custom_call.1} parent=91 // pred_fallthru
          _
        // Predicated region
        $region125: #{tpu_custom_call.1} parent=91 // pred_check
          %p736 = pneg %p260
        $region126: #{tpu_custom_call.1} parent=91 // pred_check_branch
          %738 = sbr.rel (%p736) target = $region128
        $region127: #{tpu_custom_call.1} parent=91 // pred_region
          %739 = dma.done [#allocation18], 32
        $region128: #{tpu_custom_call.1} parent=91 // pred_fallthru
          _
        // Predicated region
        $region129: #{tpu_custom_call.1} parent=91 // pred_check
          %p740 = pneg %p281
        $region130: #{tpu_custom_call.1} parent=91 // pred_check_branch
          %742 = sbr.rel (%p740) target = $region132
        $region131: #{tpu_custom_call.1} parent=91 // pred_region
          %743 = dma.done [#allocation21], 2048
        $region132: #{tpu_custom_call.1} parent=91 // pred_fallthru
          _
        // Predicated region
        $region133: #{tpu_custom_call.1} parent=91 // pred_check
          %p744 = pneg %p302
        $region134: #{tpu_custom_call.1} parent=91 // pred_check_branch
          %746 = sbr.rel (%p744) target = $region136
        $region135: #{tpu_custom_call.1} parent=91 // pred_region
          %747 = dma.done [#allocation21], 32
        $region136: #{tpu_custom_call.1} parent=91 // pred_fallthru
          _
        // Predicated region
        $region137: #{tpu_custom_call.1} parent=91 // pred_check
          %p748 = pneg %p323
        $region138: #{tpu_custom_call.1} parent=91 // pred_check_branch
          %750 = sbr.rel (%p748) target = $region140
        $region139: #{tpu_custom_call.1} parent=91 // pred_region
          %751 = dma.done [#allocation24], 2048
        $region140: #{tpu_custom_call.1} parent=91 // pred_fallthru
          _
        // Predicated region
        $region141: #{tpu_custom_call.1} parent=91 // pred_check
          %p752 = pneg %p344
        $region142: #{tpu_custom_call.1} parent=91 // pred_check_branch
          %754 = sbr.rel (%p752) target = $region144
        $region143: #{tpu_custom_call.1} parent=91 // pred_region
          %755 = dma.done [#allocation24], 32
        $region144: #{tpu_custom_call.1} parent=91 // pred_fallthru
          _
        // Predicated region
        $region145: #{tpu_custom_call.1} parent=91 // pred_check
          %p756 = pneg %p365
        $region146: #{tpu_custom_call.1} parent=91 // pred_check_branch
          %758 = sbr.rel (%p756) target = $region148
        $region147: #{tpu_custom_call.1} parent=91 // pred_region
          %759 = dma.done [#allocation27], 32
        $region148: #{tpu_custom_call.1} parent=91 // pred_fallthru
          _
        // Predicated region
        $region149: #{tpu_custom_call.1} parent=91 // pred_check
          %p760 = pneg %p386
        $region150: #{tpu_custom_call.1} parent=91 // pred_check_branch
          %762 = sbr.rel (%p760) target = $region152
        $region151: #{tpu_custom_call.1} parent=91 // pred_region
          %763 = dma.done [#allocation27], 32
        $region152: #{tpu_custom_call.1} parent=91 // pred_fallthru
          _
        %p764 = pneg %p71
        %p765 = pneg %p68
        %p766 = pneg %p92
        %p767 = pneg %p89
        %p768 = pneg %p113
        %p769 = pneg %p110
        %p770 = pneg %p134
        %p771 = pneg %p131
        %p772 = pneg %p155
        %p773 = pneg %p152
        %p774 = pneg %p176
        %p775 = pneg %p173
        %p776 = pneg %p197
        %p777 = pneg %p194
        %p778 = pneg %p218
        %p779 = pneg %p215
        %p780 = pneg %p239
        %p781 = pneg %p236
        %p782 = pneg %p260
        %p783 = pneg %p257
        %p784 = pneg %p281
        %p785 = pneg %p278
        %p786 = pneg %p302
        %p787 = pneg %p299
        %p788 = pneg %p323
        %p789 = pneg %p320
        %p790 = pneg %p344
        %p791 = pneg %p341
        %p792 = pneg %p365
        %p793 = pneg %p362
        %p794 = pneg %p386
        %p795 = pneg %p383
        %p796 = pneg %p407
        %p797 = pneg %p404
        %p798 = pneg %p428
        %p799 = pneg %p425
        %p800 = pneg %p454
        %p801 = pneg %p451
        %s802 = sand.u32 %s441, 1
        %s803 = scalar_lea.sflag [#allocation7], %s802
        %s804 = sand.u32 %s441, 1
        %s805 = smul.addr %s804, 8
        %s806 = scalar_lea.vmem [#allocation29], %s805
        %p807 = pneg %p480
        %p808 = pneg %p477
        %s809 = sand.u32 %s467, 1
        %s810 = scalar_lea.sflag [#allocation31], %s809
        %s811 = sand.u32 %s467, 1
        %s812 = scalar_lea.vmem [#allocation30], %s811
        %s814 = smul.u32 %s55, 128
        %s815 = sld [smem:[#allocation3 + %s814]]
        %s816 = scalar_lea.vmem [#allocation5], %s815
        %v817 = vld [vmem:[%s816] sm:$0x1]
        %s818 = sadd.s32 %s814, 1
        %s819 = sld [smem:[#allocation3 + %s818]]
        %s820 = scalar_lea.vmem [#allocation5], %s819
        %v821 = vld [vmem:[%s820] sm:$0x1]
        %s822 = sadd.s32 %s814, 2
        %s823 = sld [smem:[#allocation3 + %s822]]
        %s824 = scalar_lea.vmem [#allocation5], %s823
        %v825 = vld [vmem:[%s824] sm:$0x1]
        %s826 = sadd.s32 %s814, 3
        %s827 = sld [smem:[#allocation3 + %s826]]
        %s828 = scalar_lea.vmem [#allocation5], %s827
        %v829 = vld [vmem:[%s828] sm:$0x1]
        %s830 = sadd.s32 %s814, 4
        %s831 = sld [smem:[#allocation3 + %s830]]
        %s832 = scalar_lea.vmem [#allocation5], %s831
        %v833 = vld [vmem:[%s832] sm:$0x1]
        %s834 = sadd.s32 %s814, 5
        %s835 = sld [smem:[#allocation3 + %s834]]
        %s836 = scalar_lea.vmem [#allocation5], %s835
        %v837 = vld [vmem:[%s836] sm:$0x1]
        %s838 = sadd.s32 %s814, 6
        %s839 = sld [smem:[#allocation3 + %s838]]
        %s840 = scalar_lea.vmem [#allocation5], %s839
        %v841 = vld [vmem:[%s840] sm:$0x1]
        %s842 = sadd.s32 %s814, 7
        %s843 = sld [smem:[#allocation3 + %s842]]
        %s844 = scalar_lea.vmem [#allocation5], %s843
        %v845 = vld [vmem:[%s844] sm:$0x1]
        %v847 = vrot.slane %v821, 7
        %v850 = vrot.slane %v825, 6
        %v853 = vrot.slane %v829, 5
        %v856 = vrot.slane %v833, 4
        %v859 = vrot.slane %v837, 3
        %v862 = vrot.slane %v841, 2
        %v865 = vrot.slane %v845, 1
        %vm867 = vcmask 1040384
        %v868 = vsel %vm867, %v817, %v847
        %vm869 = vcmask 1041408
        %v870 = vsel %vm869, %v868, %v850
        %vm871 = vcmask 1042432
        %v872 = vsel %vm871, %v870, %v853
        %vm873 = vcmask 1043456
        %v874 = vsel %vm873, %v872, %v856
        %vm875 = vcmask 1044480
        %v876 = vsel %vm875, %v874, %v859
        %vm877 = vcmask 1045504
        %v878 = vsel %vm877, %v876, %v862
        %vm879 = vcmask 1046528
        %v880 = vsel %vm879, %v878, %v865
        %v881 = vld [vmem:[#allocation8] sm:$0xff]
        %v882 = vadd.f32 %v880, %v881
        %v883 = vld [vmem:[#allocation10] sm:$0x1]
        %v884 = vld [vmem:[#allocation11] sm:$0x1]
        %885 = vadd.xlane.f32.xlu0 %v882
        %v886 = vpop.xlane.xlu0 %885
        %v887 = vmul.f32 %v886, 0.03125
        %v888 = vmul.f32 %v882, %v882
        %889 = vadd.xlane.f32.xlu0 %v888
        %v890 = vpop.xlane.xlu0 %889
        %v891 = vmul.f32 %v890, 0.03125
        %v892 = vmul.f32 %v887, %v887
        %v893 = vsub.f32 %v891, %v892
        %v894 = vsub.f32 %v882, %v887
        %v895 = vadd.f32 %v893, 1e-12
        %v896 = vrsqrt.pop %v895
        %v897 = vmul.f32 %v894, %v896
        %v899 = vlaneseq
        %v900 = vshrl.u32 %v899, 7
        %v901 = vsub.s32 0, %v900
        %v902 = vrot.slane %v883, %v901
        %v904 = vmul.f32 %v897, %v902
        %v906 = vlaneseq
        %v907 = vshrl.u32 %v906, 7
        %v908 = vsub.s32 0, %v907
        %v909 = vrot.slane %v884, %v908
        %v911 = vadd.f32 %v904, %v909
        %v912 = vlaneseq
        %v913 = vand.u32 %v912, 127
        %s914 = sld [smem:[#allocation4 + %s814]]
        %p915 = scmp.gt.s32.totalorder %s914, 0
        %s916 = scalar_select %p915, 0.0, -1e+09
        %vm917 = vcmp.eq.s32.totalorder %v913, 0
        %v918 = vstv %s916
        %v919 = vsel %vm917, %v918, 0.0
        %s920 = sld [smem:[#allocation4 + %s818]]
        %p921 = scmp.gt.s32.totalorder %s920, 0
        %s922 = scalar_select %p921, 0.0, -1e+09
        %vm923 = vcmp.eq.s32.totalorder %v913, 1
        %v924 = vstv %s922
        %v925 = vsel %vm923, %v924, %v919
        %s926 = sld [smem:[#allocation4 + %s822]]
        %p927 = scmp.gt.s32.totalorder %s926, 0
        %s928 = scalar_select %p927, 0.0, -1e+09
        %vm929 = vcmp.eq.s32.totalorder %v913, 2
        %v930 = vstv %s928
        %v931 = vsel %vm929, %v930, %v925
        %s932 = sld [smem:[#allocation4 + %s826]]
        %p933 = scmp.gt.s32.totalorder %s932, 0
        %s934 = scalar_select %p933, 0.0, -1e+09
        %vm935 = vcmp.eq.s32.totalorder %v913, 3
        %v936 = vstv %s934
        %v937 = vsel %vm935, %v936, %v931
        %s938 = sld [smem:[#allocation4 + %s830]]
        %p939 = scmp.gt.s32.totalorder %s938, 0
        %s940 = scalar_select %p939, 0.0, -1e+09
        %vm941 = vcmp.eq.s32.totalorder %v913, 4
        %v942 = vstv %s940
        %v943 = vsel %vm941, %v942, %v937
        %s944 = sld [smem:[#allocation4 + %s834]]
        %p945 = scmp.gt.s32.totalorder %s944, 0
        %s946 = scalar_select %p945, 0.0, -1e+09
        %vm947 = vcmp.eq.s32.totalorder %v913, 5
        %v948 = vstv %s946
        %v949 = vsel %vm947, %v948, %v943
        %s950 = sld [smem:[#allocation4 + %s838]]
        %p951 = scmp.gt.s32.totalorder %s950, 0
        %s952 = scalar_select %p951, 0.0, -1e+09
        %vm953 = vcmp.eq.s32.totalorder %v913, 6
        %v954 = vstv %s952
        %v955 = vsel %vm953, %v954, %v949
        %s956 = sld [smem:[#allocation4 + %s842]]
        %p957 = scmp.gt.s32.totalorder %s956, 0
        %s958 = scalar_select %p957, 0.0, -1e+09
        %vm959 = vcmp.eq.s32.totalorder %v913, 7
        %v960 = vstv %s958
        %v961 = vsel %vm959, %v960, %v955
        %v962 = vpack.c.bf16 %v911, %v911
        %v963 = vld [vmem:[#allocation13] sm:$0xf]
        %v964 = vld [vmem:[#allocation13 + $0x4] sm:$0xf]
        %v965 = vld [vmem:[#allocation13 + $0x8] sm:$0xf]
        %v966 = vld [vmem:[#allocation13 + $0xc] sm:$0xf]
        %v967 = vld [vmem:[#allocation13 + $0x10] sm:$0xf]
        %v968 = vld [vmem:[#allocation13 + $0x14] sm:$0xf]
        %v969 = vld [vmem:[#allocation13 + $0x18] sm:$0xf]
        %v970 = vld [vmem:[#allocation13 + $0x1c] sm:$0xf]
        %v971 = vld [vmem:[#allocation13 + $0x20] sm:$0xf]
        %v972 = vld [vmem:[#allocation13 + $0x24] sm:$0xf]
        %v973 = vld [vmem:[#allocation13 + $0x28] sm:$0xf]
        %v974 = vld [vmem:[#allocation13 + $0x2c] sm:$0xf]
        %v975 = vld [vmem:[#allocation13 + $0x30] sm:$0xf]
        %v976 = vld [vmem:[#allocation13 + $0x34] sm:$0xf]
        %v977 = vld [vmem:[#allocation13 + $0x38] sm:$0xf]
        %v978 = vld [vmem:[#allocation13 + $0x3c] sm:$0xf]
        %v979 = vld [vmem:[%s7] sm:$0x1]
        %v981 = vlaneseq
        %v982 = vshrl.u32 %v981, 7
        %v983 = vsub.s32 0, %v982
        %v984 = vrot.slane %v979, %v983
        %v1002 = vunpack.c.l.b16 %v963
        %v1003 = vunpack.c.l.b16 %v964
        %v1004 = vunpack.c.l.b16 %v965
        %v1005 = vunpack.c.l.b16 %v966
        %v1006 = vunpack.c.l.b16 %v967
        %v1007 = vunpack.c.l.b16 %v968
        %v1008 = vunpack.c.l.b16 %v969
        %v1009 = vunpack.c.l.b16 %v970
        %v1010 = vunpack.c.l.b16 %v971
        %v1011 = vunpack.c.l.b16 %v972
        %v1012 = vunpack.c.l.b16 %v973
        %v1013 = vunpack.c.l.b16 %v974
        %v1014 = vunpack.c.l.b16 %v975
        %v1015 = vunpack.c.l.b16 %v976
        %v1016 = vunpack.c.l.b16 %v977
        %v1017 = vunpack.c.l.b16 %v978
        %v1018 = vpack.c.b16 %v1003, %v1002
        %v1019 = vpack.c.b16 %v1005, %v1004
        %v1020 = vpack.c.b16 %v1007, %v1006
        %v1021 = vpack.c.b16 %v1009, %v1008
        %v1022 = vpack.c.b16 %v1011, %v1010
        %v1023 = vpack.c.b16 %v1013, %v1012
        %v1024 = vpack.c.b16 %v1015, %v1014
        %v1025 = vpack.c.b16 %v1017, %v1016
        %1034 = vmatprep.subr.bf16.mxu0 0
        %1035 = vmatpush1.bf16.msra.mxu0 %v1018
        %1036 = vmatprep.subr.bf16.mxu0 0
        %1037 = vmatpush1.bf16.msra.mxu0 %v1019
        %1038 = vmatprep.subr.bf16.mxu0 0
        %1039 = vmatpush1.bf16.msra.mxu0 %v1020
        %1040 = vmatprep.subr.bf16.mxu0 0
        %1041 = vmatpush1.bf16.msra.mxu0 %v1021
        %1042 = vmatprep.subr.bf16.mxu0 0
        %1043 = vmatpush1.bf16.msra.mxu0 %v1022
        %1044 = vmatprep.subr.bf16.mxu0 0
        %1045 = vmatpush1.bf16.msra.mxu0 %v1023
        %1046 = vmatprep.subr.bf16.mxu0 0
        %1047 = vmatpush1.bf16.msra.mxu0 %v1024
        %1048 = vmatprep.subr.bf16.mxu0 0
        %1049 = vmatpush1.bf16.msra.mxu0 %v1025
        %1050 = vmatprep.subr.bf16.mxu0 0
        %1051 = vmatpush1.bf16.msra.mxu0 0
        %1052 = vmatprep.subr.bf16.mxu0 0
        %1053 = vmatpush1.bf16.msra.mxu0 0
        %1054 = vmatprep.subr.bf16.mxu0 0
        %1055 = vmatpush1.bf16.msra.mxu0 0
        %1056 = vmatprep.subr.bf16.mxu0 0
        %1057 = vmatpush1.bf16.msra.mxu0 0
        %1058 = vmatprep.subr.bf16.mxu0 0
        %1059 = vmatpush1.bf16.msra.mxu0 0
        %1060 = vmatprep.subr.bf16.mxu0 0
        %1061 = vmatpush1.bf16.msra.mxu0 0
        %1062 = vmatprep.subr.bf16.mxu0 0
        %1063 = vmatpush1.bf16.msra.mxu0 0
        %1064 = vmatprep.subr.bf16.mxu0 0
        %1065 = vmatpush1.bf16.msra.mxu0 0
        %1066 = vmatprep.mubr.bf16.mxu0 0
        %1067 = vmatmul.mubr.bf16.gmra.mrb[0].mxu0 %v962
        %v1068 = vpop.f32.mrb[0].mxu0
        %v1069 = vadd.f32 %v984, %v1068
        %v1070 = vpop.f32.mrb[0].mxu0
        %v1071 = vpop.f32.mrb[0].mxu0
        %v1072 = vpop.f32.mrb[0].mxu0
        %1073 = vdwg.mxu0
        %1075 = vrot.lane.b32.xlu0 %v1069, 112
        %v1076 = vpop.permute.xlu0 %1075
        %v1078 = vpack.c.bf16 %v1069, %v1069
        %v1079 = vpack.c.bf16 %v1076, %v1076
        %1081 = vrot.lane.b32.xlu0 %v1078, 96
        %v1082 = vpop.permute.xlu0 %1081
        %vm1083 = vcmask 130048
        %v1085 = vsel %vm1083, %v1078, 0
        %v1088 = vsel %vm1083, %v1082, 0
        %1090 = vmatprep.subr.bf16.mxu0 0
        %1091 = vmatpush1.bf16.xpose.msra.mxu0 %v1088
        %1092 = vmatprep.subr.bf16.mxu0 0
        %1093 = vmatpush1.bf16.xpose.msra.mxu0 0
        %1094 = vmatprep.subr.bf16.mxu0 0
        %1095 = vmatpush1.bf16.xpose.msra.mxu0 0
        %1096 = vmatprep.subr.bf16.mxu0 0
        %1097 = vmatpush1.bf16.xpose.msra.mxu0 0
        %1098 = vmatprep.subr.bf16.mxu0 0
        %1099 = vmatpush1.bf16.xpose.msra.mxu0 0
        %1100 = vmatprep.subr.bf16.mxu0 0
        %1101 = vmatpush1.bf16.xpose.msra.mxu0 0
        %1102 = vmatprep.subr.bf16.mxu0 0
        %1103 = vmatpush1.bf16.xpose.msra.mxu0 0
        %1104 = vmatprep.subr.bf16.mxu0 0
        %1105 = vmatpush1.bf16.xpose.msra.mxu0 0
        %1106 = vmatprep.subr.bf16.mxu0 0
        %1107 = vmatpush1.bf16.xpose.msra.mxu0 0
        %1108 = vmatprep.subr.bf16.mxu0 0
        %1109 = vmatpush1.bf16.xpose.msra.mxu0 0
        %1110 = vmatprep.subr.bf16.mxu0 0
        %1111 = vmatpush1.bf16.xpose.msra.mxu0 0
        %1112 = vmatprep.subr.bf16.mxu0 0
        %1113 = vmatpush1.bf16.xpose.msra.mxu0 0
        %1114 = vmatprep.subr.bf16.mxu0 0
        %1115 = vmatpush1.bf16.xpose.msra.mxu0 0
        %1116 = vmatprep.subr.bf16.mxu0 0
        %1117 = vmatpush1.bf16.xpose.msra.mxu0 0
        %1118 = vmatprep.subr.bf16.mxu0 0
        %1119 = vmatpush1.bf16.xpose.msra.mxu0 0
        %1120 = vmatprep.subr.bf16.mxu0 0
        %1121 = vmatpush1.bf16.xpose.msra.mxu0 0
        %1122 = vmatprep.mubr.bf16.mxu0 0
        %1123 = vmatmul.mubr.bf16.gmra.mrb[0].mxu0 %v1085
        %v1124 = vpop.f32.mrb[0].mxu0
        %v1125 = vadd.f32 %v961, %v1124
        %v1126 = vpop.f32.mrb[0].mxu0
        %v1127 = vpop.f32.mrb[0].mxu0
        %v1128 = vpop.f32.mrb[0].mxu0
        %1129 = vdwg.mxu0
        %1131 = vrot.lane.b32.xlu0 %v1079, 96
        %v1132 = vpop.permute.xlu0 %1131
        %v1134 = vsel %vm1083, %v1079, 0
        %v1137 = vsel %vm1083, %v1132, 0
        %1139 = vmatprep.subr.bf16.mxu0 0
        %1140 = vmatpush1.bf16.xpose.msra.mxu0 %v1137
        %1141 = vmatprep.subr.bf16.mxu0 0
        %1142 = vmatpush1.bf16.xpose.msra.mxu0 0
        %1143 = vmatprep.subr.bf16.mxu0 0
        %1144 = vmatpush1.bf16.xpose.msra.mxu0 0
        %1145 = vmatprep.subr.bf16.mxu0 0
        %1146 = vmatpush1.bf16.xpose.msra.mxu0 0
        %1147 = vmatprep.subr.bf16.mxu0 0
        %1148 = vmatpush1.bf16.xpose.msra.mxu0 0
        %1149 = vmatprep.subr.bf16.mxu0 0
        %1150 = vmatpush1.bf16.xpose.msra.mxu0 0
        %1151 = vmatprep.subr.bf16.mxu0 0
        %1152 = vmatpush1.bf16.xpose.msra.mxu0 0
        %1153 = vmatprep.subr.bf16.mxu0 0
        %1154 = vmatpush1.bf16.xpose.msra.mxu0 0
        %1155 = vmatprep.subr.bf16.mxu0 0
        %1156 = vmatpush1.bf16.xpose.msra.mxu0 0
        %1157 = vmatprep.subr.bf16.mxu0 0
        %1158 = vmatpush1.bf16.xpose.msra.mxu0 0
        %1159 = vmatprep.subr.bf16.mxu0 0
        %1160 = vmatpush1.bf16.xpose.msra.mxu0 0
        %1161 = vmatprep.subr.bf16.mxu0 0
        %1162 = vmatpush1.bf16.xpose.msra.mxu0 0
        %1163 = vmatprep.subr.bf16.mxu0 0
        %1164 = vmatpush1.bf16.xpose.msra.mxu0 0
        %1165 = vmatprep.subr.bf16.mxu0 0
        %1166 = vmatpush1.bf16.xpose.msra.mxu0 0
        %1167 = vmatprep.subr.bf16.mxu0 0
        %1168 = vmatpush1.bf16.xpose.msra.mxu0 0
        %1169 = vmatprep.subr.bf16.mxu0 0
        %1170 = vmatpush1.bf16.xpose.msra.mxu0 0
        %1171 = vmatprep.mubr.bf16.mxu0 0
        %1172 = vmatmul.mubr.bf16.gmra.mrb[0].mxu0 %v1134
        %v1173 = vpop.f32.mrb[0].mxu0
        %v1174 = vadd.f32 %v961, %v1173
        %v1175 = vpop.f32.mrb[0].mxu0
        %v1176 = vpop.f32.mrb[0].mxu0
        %v1177 = vpop.f32.mrb[0].mxu0
        %1178 = vdwg.mxu0
        %vm1179 = vcmask 64512
        %v1180 = vsel %vm1179, %v1125, -inf
        %1181 = vmax.xlane.f32.xlu0 %v1180
        %v1182 = vpop.xlane.xlu0 %1181
        %v1183 = vsel %vm1179, %v1174, -inf
        %1184 = vmax.xlane.f32.xlu0 %v1183
        %v1185 = vpop.xlane.xlu0 %1184
        %v1186 = vsub.f32 %v1125, %v1182
        %v1187 = vsub.f32 %v1174, %v1185
        %v1188 = vmul.f32 %v1186, 1.442695
        %v1189 = vpow.pop %v1188
        %v1190 = vmul.f32 %v1187, 1.442695
        %v1191 = vpow.pop %v1190
        %v1192 = vsel %vm1179, %v1189, 0.0
        %1193 = vadd.xlane.f32.xlu0 %v1192
        %v1194 = vpop.xlane.xlu0 %1193
        %v1195 = vsel %vm1179, %v1191, 0.0
        %1196 = vadd.xlane.f32.xlu0 %v1195
        %v1197 = vpop.xlane.xlu0 %1196
        %v1198 = vrcp.pop %v1194
        %v1199 = vrcp.pop %v1197
        %v1200 = vmul.f32 %v1189, %v1198
        %v1201 = vmul.f32 %v1191, %v1199
        %v1202 = vpack.c.bf16 %v1200, %v1200
        %v1203 = vpack.c.bf16 %v1201, %v1201
        %1204 = vrot.lane.b32.xlu0 %v1078, 64
        %v1205 = vpop.permute.xlu0 %1204
        %v1207 = vsel %vm1179, %v1202, 0
        %v1210 = vsel %vm873, %v1205, 0
        %1212 = vmatprep.subr.bf16.mxu0 0
        %1213 = vmatpush1.bf16.msra.mxu0 %v1210
        %1214 = vmatprep.subr.bf16.mxu0 0
        %1215 = vmatpush1.bf16.msra.mxu0 0
        %1216 = vmatprep.subr.bf16.mxu0 0
        %1217 = vmatpush1.bf16.msra.mxu0 0
        %1218 = vmatprep.subr.bf16.mxu0 0
        %1219 = vmatpush1.bf16.msra.mxu0 0
        %1220 = vmatprep.subr.bf16.mxu0 0
        %1221 = vmatpush1.bf16.msra.mxu0 0
        %1222 = vmatprep.subr.bf16.mxu0 0
        %1223 = vmatpush1.bf16.msra.mxu0 0
        %1224 = vmatprep.subr.bf16.mxu0 0
        %1225 = vmatpush1.bf16.msra.mxu0 0
        %1226 = vmatprep.subr.bf16.mxu0 0
        %1227 = vmatpush1.bf16.msra.mxu0 0
        %1228 = vmatprep.subr.bf16.mxu0 0
        %1229 = vmatpush1.bf16.msra.mxu0 0
        %1230 = vmatprep.subr.bf16.mxu0 0
        %1231 = vmatpush1.bf16.msra.mxu0 0
        %1232 = vmatprep.subr.bf16.mxu0 0
        %1233 = vmatpush1.bf16.msra.mxu0 0
        %1234 = vmatprep.subr.bf16.mxu0 0
        %1235 = vmatpush1.bf16.msra.mxu0 0
        %1236 = vmatprep.subr.bf16.mxu0 0
        %1237 = vmatpush1.bf16.msra.mxu0 0
        %1238 = vmatprep.subr.bf16.mxu0 0
        %1239 = vmatpush1.bf16.msra.mxu0 0
        %1240 = vmatprep.subr.bf16.mxu0 0
        %1241 = vmatpush1.bf16.msra.mxu0 0
        %1242 = vmatprep.subr.bf16.mxu0 0
        %1243 = vmatpush1.bf16.msra.mxu0 0
        %1244 = vmatprep.mubr.bf16.mxu0 0
        %1245 = vmatmul.mubr.bf16.gmra.mrb[0].mxu0 %v1207
        %v1246 = vpop.f32.mrb[0].mxu0
        %v1247 = vadd.f32 0.0, %v1246
        %v1248 = vpop.f32.mrb[0].mxu0
        %v1249 = vpop.f32.mrb[0].mxu0
        %v1250 = vpop.f32.mrb[0].mxu0
        %1251 = vdwg.mxu0
        %1252 = vrot.lane.b32.xlu0 %v1079, 64
        %v1253 = vpop.permute.xlu0 %1252
        %v1255 = vsel %vm1179, %v1203, 0
        %v1258 = vsel %vm873, %v1253, 0
        %1260 = vmatprep.subr.bf16.mxu0 0
        %1261 = vmatpush1.bf16.msra.mxu0 %v1258
        %1262 = vmatprep.subr.bf16.mxu0 0
        %1263 = vmatpush1.bf16.msra.mxu0 0
        %1264 = vmatprep.subr.bf16.mxu0 0
        %1265 = vmatpush1.bf16.msra.mxu0 0
        %1266 = vmatprep.subr.bf16.mxu0 0
        %1267 = vmatpush1.bf16.msra.mxu0 0
        %1268 = vmatprep.subr.bf16.mxu0 0
        %1269 = vmatpush1.bf16.msra.mxu0 0
        %1270 = vmatprep.subr.bf16.mxu0 0
        %1271 = vmatpush1.bf16.msra.mxu0 0
        %1272 = vmatprep.subr.bf16.mxu0 0
        %1273 = vmatpush1.bf16.msra.mxu0 0
        %1274 = vmatprep.subr.bf16.mxu0 0
        %1275 = vmatpush1.bf16.msra.mxu0 0
        %1276 = vmatprep.subr.bf16.mxu0 0
        %1277 = vmatpush1.bf16.msra.mxu0 0
        %1278 = vmatprep.subr.bf16.mxu0 0
        %1279 = vmatpush1.bf16.msra.mxu0 0
        %1280 = vmatprep.subr.bf16.mxu0 0
        %1281 = vmatpush1.bf16.msra.mxu0 0
        %1282 = vmatprep.subr.bf16.mxu0 0
        %1283 = vmatpush1.bf16.msra.mxu0 0
        %1284 = vmatprep.subr.bf16.mxu0 0
        %1285 = vmatpush1.bf16.msra.mxu0 0
        %1286 = vmatprep.subr.bf16.mxu0 0
        %1287 = vmatpush1.bf16.msra.mxu0 0
        %1288 = vmatprep.subr.bf16.mxu0 0
        %1289 = vmatpush1.bf16.msra.mxu0 0
        %1290 = vmatprep.subr.bf16.mxu0 0
        %1291 = vmatpush1.bf16.msra.mxu0 0
        %1292 = vmatprep.mubr.bf16.mxu0 0
        %1293 = vmatmul.mubr.bf16.gmra.mrb[0].mxu0 %v1255
        %v1294 = vpop.f32.mrb[0].mxu0
        %v1295 = vadd.f32 0.0, %v1294
        %v1296 = vpop.f32.mrb[0].mxu0
        %v1297 = vpop.f32.mrb[0].mxu0
        %v1298 = vpop.f32.mrb[0].mxu0
        %1299 = vdwg.mxu0
        %1301 = vrot.lane.b32.xlu0 %v1295, 16
        %v1302 = vpop.permute.xlu0 %1301
        %v1304 = vsel %vm1083, %v1247, %v1302
        %v1305 = vpack.c.bf16 %v1304, %v1304
        %v1306 = vld [vmem:[#allocation14] sm:$0xf]
        %v1307 = vld [vmem:[#allocation14 + $0x4] sm:$0xf]
        %v1308 = vld [vmem:[#allocation14 + $0x8] sm:$0xf]
        %v1309 = vld [vmem:[#allocation14 + $0xc] sm:$0xf]
        %v1310 = vld [vmem:[#allocation16] sm:$0x1]
        %v1312 = vlaneseq
        %v1313 = vshrl.u32 %v1312, 7
        %v1314 = vsub.s32 0, %v1313
        %v1315 = vrot.slane %v1310, %v1314
        %v1321 = vunpack.c.l.b16 %v1306
        %v1322 = vunpack.c.l.b16 %v1307
        %v1323 = vunpack.c.l.b16 %v1308
        %v1324 = vunpack.c.l.b16 %v1309
        %v1325 = vpack.c.b16 %v1322, %v1321
        %v1326 = vpack.c.b16 %v1324, %v1323
        %vm1329 = vcmask 261120
        %v1331 = vsel %vm1329, %v1305, 0
        %1333 = vmatprep.subr.bf16.mxu0 0
        %1334 = vmatpush1.bf16.msra.mxu0 %v1325
        %1335 = vmatprep.subr.bf16.mxu0 0
        %1336 = vmatpush1.bf16.msra.mxu0 %v1326
        %1337 = vmatprep.subr.bf16.mxu0 0
        %1338 = vmatpush1.bf16.msra.mxu0 0
        %1339 = vmatprep.subr.bf16.mxu0 0
        %1340 = vmatpush1.bf16.msra.mxu0 0
        %1341 = vmatprep.subr.bf16.mxu0 0
        %1342 = vmatpush1.bf16.msra.mxu0 0
        %1343 = vmatprep.subr.bf16.mxu0 0
        %1344 = vmatpush1.bf16.msra.mxu0 0
        %1345 = vmatprep.subr.bf16.mxu0 0
        %1346 = vmatpush1.bf16.msra.mxu0 0
        %1347 = vmatprep.subr.bf16.mxu0 0
        %1348 = vmatpush1.bf16.msra.mxu0 0
        %1349 = vmatprep.subr.bf16.mxu0 0
        %1350 = vmatpush1.bf16.msra.mxu0 0
        %1351 = vmatprep.subr.bf16.mxu0 0
        %1352 = vmatpush1.bf16.msra.mxu0 0
        %1353 = vmatprep.subr.bf16.mxu0 0
        %1354 = vmatpush1.bf16.msra.mxu0 0
        %1355 = vmatprep.subr.bf16.mxu0 0
        %1356 = vmatpush1.bf16.msra.mxu0 0
        %1357 = vmatprep.subr.bf16.mxu0 0
        %1358 = vmatpush1.bf16.msra.mxu0 0
        %1359 = vmatprep.subr.bf16.mxu0 0
        %1360 = vmatpush1.bf16.msra.mxu0 0
        %1361 = vmatprep.subr.bf16.mxu0 0
        %1362 = vmatpush1.bf16.msra.mxu0 0
        %1363 = vmatprep.subr.bf16.mxu0 0
        %1364 = vmatpush1.bf16.msra.mxu0 0
        %1365 = vmatprep.mubr.bf16.mxu0 0
        %1366 = vmatmul.mubr.bf16.gmra.mrb[0].mxu0 %v1331
        %v1367 = vpop.f32.mrb[0].mxu0
        %v1368 = vadd.f32 %v1315, %v1367
        %v1369 = vpop.f32.mrb[0].mxu0
        %v1370 = vpop.f32.mrb[0].mxu0
        %v1371 = vpop.f32.mrb[0].mxu0
        %1372 = vdwg.mxu0
        %v1373 = vadd.f32 %v911, %v1368
        %v1374 = vld [vmem:[#allocation17] sm:$0x1]
        %v1375 = vld [vmem:[#allocation19] sm:$0x1]
        %1376 = vadd.xlane.f32.xlu0 %v1373
        %v1377 = vpop.xlane.xlu0 %1376
        %v1378 = vmul.f32 %v1377, 0.03125
        %v1379 = vmul.f32 %v1373, %v1373
        %1380 = vadd.xlane.f32.xlu0 %v1379
        %v1381 = vpop.xlane.xlu0 %1380
        %v1382 = vmul.f32 %v1381, 0.03125
        %v1383 = vmul.f32 %v1378, %v1378
        %v1384 = vsub.f32 %v1382, %v1383
        %v1385 = vsub.f32 %v1373, %v1378
        %v1386 = vadd.f32 %v1384, 1e-12
        %v1387 = vrsqrt.pop %v1386
        %v1388 = vmul.f32 %v1385, %v1387
        %v1390 = vlaneseq
        %v1391 = vshrl.u32 %v1390, 7
        %v1392 = vsub.s32 0, %v1391
        %v1393 = vrot.slane %v1374, %v1392
        %v1395 = vmul.f32 %v1388, %v1393
        %v1397 = vlaneseq
        %v1398 = vshrl.u32 %v1397, 7
        %v1399 = vsub.s32 0, %v1398
        %v1400 = vrot.slane %v1375, %v1399
        %v1402 = vadd.f32 %v1395, %v1400
        %v1403 = vpack.c.bf16 %v1402, %v1402
        %v1404 = vld [vmem:[#allocation20] sm:$0xf]
        %v1405 = vld [vmem:[#allocation20 + $0x4] sm:$0xf]
        %v1406 = vld [vmem:[#allocation20 + $0x8] sm:$0xf]
        %v1407 = vld [vmem:[#allocation20 + $0xc] sm:$0xf]
        %v1408 = vld [vmem:[#allocation20 + $0x10] sm:$0xf]
        %v1409 = vld [vmem:[#allocation20 + $0x14] sm:$0xf]
        %v1410 = vld [vmem:[#allocation20 + $0x18] sm:$0xf]
        %v1411 = vld [vmem:[#allocation20 + $0x1c] sm:$0xf]
        %v1412 = vld [vmem:[#allocation20 + $0x20] sm:$0xf]
        %v1413 = vld [vmem:[#allocation20 + $0x24] sm:$0xf]
        %v1414 = vld [vmem:[#allocation20 + $0x28] sm:$0xf]
        %v1415 = vld [vmem:[#allocation20 + $0x2c] sm:$0xf]
        %v1416 = vld [vmem:[#allocation20 + $0x30] sm:$0xf]
        %v1417 = vld [vmem:[#allocation20 + $0x34] sm:$0xf]
        %v1418 = vld [vmem:[#allocation20 + $0x38] sm:$0xf]
        %v1419 = vld [vmem:[#allocation20 + $0x3c] sm:$0xf]
        %v1420 = vld [vmem:[#allocation22] sm:$0x1]
        %v1422 = vlaneseq
        %v1423 = vshrl.u32 %v1422, 7
        %v1424 = vsub.s32 0, %v1423
        %v1425 = vrot.slane %v1420, %v1424
        %v1443 = vunpack.c.l.b16 %v1404
        %v1444 = vunpack.c.l.b16 %v1405
        %v1445 = vunpack.c.l.b16 %v1406
        %v1446 = vunpack.c.l.b16 %v1407
        %v1447 = vunpack.c.l.b16 %v1408
        %v1448 = vunpack.c.l.b16 %v1409
        %v1449 = vunpack.c.l.b16 %v1410
        %v1450 = vunpack.c.l.b16 %v1411
        %v1451 = vunpack.c.l.b16 %v1412
        %v1452 = vunpack.c.l.b16 %v1413
        %v1453 = vunpack.c.l.b16 %v1414
        %v1454 = vunpack.c.l.b16 %v1415
        %v1455 = vunpack.c.l.b16 %v1416
        %v1456 = vunpack.c.l.b16 %v1417
        %v1457 = vunpack.c.l.b16 %v1418
        %v1458 = vunpack.c.l.b16 %v1419
        %v1459 = vpack.c.b16 %v1444, %v1443
        %v1460 = vpack.c.b16 %v1446, %v1445
        %v1461 = vpack.c.b16 %v1448, %v1447
        %v1462 = vpack.c.b16 %v1450, %v1449
        %v1463 = vpack.c.b16 %v1452, %v1451
        %v1464 = vpack.c.b16 %v1454, %v1453
        %v1465 = vpack.c.b16 %v1456, %v1455
        %v1466 = vpack.c.b16 %v1458, %v1457
        %1475 = vmatprep.subr.bf16.mxu0 0
        %1476 = vmatpush1.bf16.msra.mxu0 %v1459
        %1477 = vmatprep.subr.bf16.mxu0 0
        %1478 = vmatpush1.bf16.msra.mxu0 %v1460
        %1479 = vmatprep.subr.bf16.mxu0 0
        %1480 = vmatpush1.bf16.msra.mxu0 %v1461
        %1481 = vmatprep.subr.bf16.mxu0 0
        %1482 = vmatpush1.bf16.msra.mxu0 %v1462
        %1483 = vmatprep.subr.bf16.mxu0 0
        %1484 = vmatpush1.bf16.msra.mxu0 %v1463
        %1485 = vmatprep.subr.bf16.mxu0 0
        %1486 = vmatpush1.bf16.msra.mxu0 %v1464
        %1487 = vmatprep.subr.bf16.mxu0 0
        %1488 = vmatpush1.bf16.msra.mxu0 %v1465
        %1489 = vmatprep.subr.bf16.mxu0 0
        %1490 = vmatpush1.bf16.msra.mxu0 %v1466
        %1491 = vmatprep.subr.bf16.mxu0 0
        %1492 = vmatpush1.bf16.msra.mxu0 0
        %1493 = vmatprep.subr.bf16.mxu0 0
        %1494 = vmatpush1.bf16.msra.mxu0 0
        %1495 = vmatprep.subr.bf16.mxu0 0
        %1496 = vmatpush1.bf16.msra.mxu0 0
        %1497 = vmatprep.subr.bf16.mxu0 0
        %1498 = vmatpush1.bf16.msra.mxu0 0
        %1499 = vmatprep.subr.bf16.mxu0 0
        %1500 = vmatpush1.bf16.msra.mxu0 0
        %1501 = vmatprep.subr.bf16.mxu0 0
        %1502 = vmatpush1.bf16.msra.mxu0 0
        %1503 = vmatprep.subr.bf16.mxu0 0
        %1504 = vmatpush1.bf16.msra.mxu0 0
        %1505 = vmatprep.subr.bf16.mxu0 0
        %1506 = vmatpush1.bf16.msra.mxu0 0
        %1507 = vmatprep.mubr.bf16.mxu0 0
        %1508 = vmatmul.mubr.bf16.gmra.mrb[0].mxu0 %v1403
        %v1509 = vpop.f32.mrb[0].mxu0
        %v1510 = vadd.f32 %v1425, %v1509
        %v1511 = vpop.f32.mrb[0].mxu0
        %v1512 = vpop.f32.mrb[0].mxu0
        %v1513 = vpop.f32.mrb[0].mxu0
        %1514 = vdwg.mxu0
        %v1515 = vmul.f32 %v1510, %v1510
        %v1516 = vmul.f32 %v1510, %v1515
        %v1517 = vmul.f32 %v1516, 0.044715
        %v1518 = vadd.f32 %v1510, %v1517
        %v1519 = vmul.f32 %v1518, 0.7978846
        %v1520 = vtanh.pop %v1519
        %v1521 = vadd.f32 %v1520, 1.0
        %v1522 = vmul.f32 %v1521, 0.5
        %v1523 = vmul.f32 %v1510, %v1522
        %v1524 = vpack.c.bf16 %v1523, %v1523
        %v1525 = vld [vmem:[#allocation23] sm:$0xf]
        %v1526 = vld [vmem:[#allocation23 + $0x4] sm:$0xf]
        %v1527 = vld [vmem:[#allocation23 + $0x8] sm:$0xf]
        %v1528 = vld [vmem:[#allocation23 + $0xc] sm:$0xf]
        %v1529 = vld [vmem:[#allocation23 + $0x10] sm:$0xf]
        %v1530 = vld [vmem:[#allocation23 + $0x14] sm:$0xf]
        %v1531 = vld [vmem:[#allocation23 + $0x18] sm:$0xf]
        %v1532 = vld [vmem:[#allocation23 + $0x1c] sm:$0xf]
        %v1533 = vld [vmem:[#allocation23 + $0x20] sm:$0xf]
        %v1534 = vld [vmem:[#allocation23 + $0x24] sm:$0xf]
        %v1535 = vld [vmem:[#allocation23 + $0x28] sm:$0xf]
        %v1536 = vld [vmem:[#allocation23 + $0x2c] sm:$0xf]
        %v1537 = vld [vmem:[#allocation23 + $0x30] sm:$0xf]
        %v1538 = vld [vmem:[#allocation23 + $0x34] sm:$0xf]
        %v1539 = vld [vmem:[#allocation23 + $0x38] sm:$0xf]
        %v1540 = vld [vmem:[#allocation23 + $0x3c] sm:$0xf]
        %v1541 = vld [vmem:[#allocation25] sm:$0x1]
        %v1543 = vlaneseq
        %v1544 = vshrl.u32 %v1543, 7
        %v1545 = vsub.s32 0, %v1544
        %v1546 = vrot.slane %v1541, %v1545
        %v1564 = vunpack.c.l.b16 %v1525
        %v1565 = vunpack.c.l.b16 %v1526
        %v1566 = vunpack.c.l.b16 %v1527
        %v1567 = vunpack.c.l.b16 %v1528
        %v1568 = vunpack.c.l.b16 %v1529
        %v1569 = vunpack.c.l.b16 %v1530
        %v1570 = vunpack.c.l.b16 %v1531
        %v1571 = vunpack.c.l.b16 %v1532
        %v1572 = vunpack.c.l.b16 %v1533
        %v1573 = vunpack.c.l.b16 %v1534
        %v1574 = vunpack.c.l.b16 %v1535
        %v1575 = vunpack.c.l.b16 %v1536
        %v1576 = vunpack.c.l.b16 %v1537
        %v1577 = vunpack.c.l.b16 %v1538
        %v1578 = vunpack.c.l.b16 %v1539
        %v1579 = vunpack.c.l.b16 %v1540
        %v1580 = vpack.c.b16 %v1565, %v1564
        %v1581 = vpack.c.b16 %v1567, %v1566
        %v1582 = vpack.c.b16 %v1569, %v1568
        %v1583 = vpack.c.b16 %v1571, %v1570
        %v1584 = vpack.c.b16 %v1573, %v1572
        %v1585 = vpack.c.b16 %v1575, %v1574
        %v1586 = vpack.c.b16 %v1577, %v1576
        %v1587 = vpack.c.b16 %v1579, %v1578
        %1596 = vmatprep.subr.bf16.mxu0 0
        %1597 = vmatpush1.bf16.msra.mxu0 %v1580
        %1598 = vmatprep.subr.bf16.mxu0 0
        %1599 = vmatpush1.bf16.msra.mxu0 %v1581
        %1600 = vmatprep.subr.bf16.mxu0 0
        %1601 = vmatpush1.bf16.msra.mxu0 %v1582
        %1602 = vmatprep.subr.bf16.mxu0 0
        %1603 = vmatpush1.bf16.msra.mxu0 %v1583
        %1604 = vmatprep.subr.bf16.mxu0 0
        %1605 = vmatpush1.bf16.msra.mxu0 %v1584
        %1606 = vmatprep.subr.bf16.mxu0 0
        %1607 = vmatpush1.bf16.msra.mxu0 %v1585
        %1608 = vmatprep.subr.bf16.mxu0 0
        %1609 = vmatpush1.bf16.msra.mxu0 %v1586
        %1610 = vmatprep.subr.bf16.mxu0 0
        %1611 = vmatpush1.bf16.msra.mxu0 %v1587
        %1612 = vmatprep.subr.bf16.mxu0 0
        %1613 = vmatpush1.bf16.msra.mxu0 0
        %1614 = vmatprep.subr.bf16.mxu0 0
        %1615 = vmatpush1.bf16.msra.mxu0 0
        %1616 = vmatprep.subr.bf16.mxu0 0
        %1617 = vmatpush1.bf16.msra.mxu0 0
        %1618 = vmatprep.subr.bf16.mxu0 0
        %1619 = vmatpush1.bf16.msra.mxu0 0
        %1620 = vmatprep.subr.bf16.mxu0 0
        %1621 = vmatpush1.bf16.msra.mxu0 0
        %1622 = vmatprep.subr.bf16.mxu0 0
        %1623 = vmatpush1.bf16.msra.mxu0 0
        %1624 = vmatprep.subr.bf16.mxu0 0
        %1625 = vmatpush1.bf16.msra.mxu0 0
        %1626 = vmatprep.subr.bf16.mxu0 0
        %1627 = vmatpush1.bf16.msra.mxu0 0
        %1628 = vmatprep.mubr.bf16.mxu0 0
        %1629 = vmatmul.mubr.bf16.gmra.mrb[0].mxu0 %v1524
        %v1630 = vpop.f32.mrb[0].mxu0
        %v1631 = vadd.f32 %v1546, %v1630
        %v1632 = vpop.f32.mrb[0].mxu0
        %v1633 = vpop.f32.mrb[0].mxu0
        %v1634 = vpop.f32.mrb[0].mxu0
        %1635 = vdwg.mxu0
        %v1636 = vadd.f32 %v1402, %v1631
        %v1637 = vld [vmem:[#allocation26] sm:$0x1]
        %v1638 = vld [vmem:[#allocation28] sm:$0x1]
        %1639 = vadd.xlane.f32.xlu0 %v1636
        %v1640 = vpop.xlane.xlu0 %1639
        %v1641 = vmul.f32 %v1640, 0.03125
        %v1642 = vmul.f32 %v1636, %v1636
        %1643 = vadd.xlane.f32.xlu0 %v1642
        %v1644 = vpop.xlane.xlu0 %1643
        %v1645 = vmul.f32 %v1644, 0.03125
        %v1646 = vmul.f32 %v1641, %v1641
        %v1647 = vsub.f32 %v1645, %v1646
        %v1648 = vsub.f32 %v1636, %v1641
        %v1649 = vadd.f32 %v1647, 1e-12
        %v1650 = vrsqrt.pop %v1649
        %v1651 = vmul.f32 %v1648, %v1650
        %v1653 = vlaneseq
        %v1654 = vshrl.u32 %v1653, 7
        %v1655 = vsub.s32 0, %v1654
        %v1656 = vrot.slane %v1637, %v1655
        %v1658 = vmul.f32 %v1651, %v1656
        %v1660 = vlaneseq
        %v1661 = vshrl.u32 %v1660, 7
        %v1662 = vsub.s32 0, %v1661
        %v1663 = vrot.slane %v1638, %v1662
        %v1665 = vadd.f32 %v1658, %v1663
        %v1666 = vpack.c.bf16 %v1665, %v1665
        %s1667 = scalar_lea.vmem [#allocation13], 64
        %v1668 = vld [vmem:[%s1667] sm:$0xf]
        %v1669 = vld [vmem:[%s1667 + $0x4] sm:$0xf]
        %v1670 = vld [vmem:[%s1667 + $0x8] sm:$0xf]
        %v1671 = vld [vmem:[%s1667 + $0xc] sm:$0xf]
        %v1672 = vld [vmem:[%s1667 + $0x10] sm:$0xf]
        %v1673 = vld [vmem:[%s1667 + $0x14] sm:$0xf]
        %v1674 = vld [vmem:[%s1667 + $0x18] sm:$0xf]
        %v1675 = vld [vmem:[%s1667 + $0x1c] sm:$0xf]
        %v1676 = vld [vmem:[%s1667 + $0x20] sm:$0xf]
        %v1677 = vld [vmem:[%s1667 + $0x24] sm:$0xf]
        %v1678 = vld [vmem:[%s1667 + $0x28] sm:$0xf]
        %v1679 = vld [vmem:[%s1667 + $0x2c] sm:$0xf]
        %v1680 = vld [vmem:[%s1667 + $0x30] sm:$0xf]
        %v1681 = vld [vmem:[%s1667 + $0x34] sm:$0xf]
        %v1682 = vld [vmem:[%s1667 + $0x38] sm:$0xf]
        %v1683 = vld [vmem:[%s1667 + $0x3c] sm:$0xf]
        %s1684 = scalar_lea.vmem %s7, 1
        %v1685 = vld [vmem:[%s1684] sm:$0x1]
        %v1687 = vlaneseq
        %v1688 = vshrl.u32 %v1687, 7
        %v1689 = vsub.s32 0, %v1688
        %v1690 = vrot.slane %v1685, %v1689
        %v1708 = vunpack.c.l.b16 %v1668
        %v1709 = vunpack.c.l.b16 %v1669
        %v1710 = vunpack.c.l.b16 %v1670
        %v1711 = vunpack.c.l.b16 %v1671
        %v1712 = vunpack.c.l.b16 %v1672
        %v1713 = vunpack.c.l.b16 %v1673
        %v1714 = vunpack.c.l.b16 %v1674
        %v1715 = vunpack.c.l.b16 %v1675
        %v1716 = vunpack.c.l.b16 %v1676
        %v1717 = vunpack.c.l.b16 %v1677
        %v1718 = vunpack.c.l.b16 %v1678
        %v1719 = vunpack.c.l.b16 %v1679
        %v1720 = vunpack.c.l.b16 %v1680
        %v1721 = vunpack.c.l.b16 %v1681
        %v1722 = vunpack.c.l.b16 %v1682
        %v1723 = vunpack.c.l.b16 %v1683
        %v1724 = vpack.c.b16 %v1709, %v1708
        %v1725 = vpack.c.b16 %v1711, %v1710
        %v1726 = vpack.c.b16 %v1713, %v1712
        %v1727 = vpack.c.b16 %v1715, %v1714
        %v1728 = vpack.c.b16 %v1717, %v1716
        %v1729 = vpack.c.b16 %v1719, %v1718
        %v1730 = vpack.c.b16 %v1721, %v1720
        %v1731 = vpack.c.b16 %v1723, %v1722
        %1740 = vmatprep.subr.bf16.mxu0 0
        %1741 = vmatpush1.bf16.msra.mxu0 %v1724
        %1742 = vmatprep.subr.bf16.mxu0 0
        %1743 = vmatpush1.bf16.msra.mxu0 %v1725
        %1744 = vmatprep.subr.bf16.mxu0 0
        %1745 = vmatpush1.bf16.msra.mxu0 %v1726
        %1746 = vmatprep.subr.bf16.mxu0 0
        %1747 = vmatpush1.bf16.msra.mxu0 %v1727
        %1748 = vmatprep.subr.bf16.mxu0 0
        %1749 = vmatpush1.bf16.msra.mxu0 %v1728
        %1750 = vmatprep.subr.bf16.mxu0 0
        %1751 = vmatpush1.bf16.msra.mxu0 %v1729
        %1752 = vmatprep.subr.bf16.mxu0 0
        %1753 = vmatpush1.bf16.msra.mxu0 %v1730
        %1754 = vmatprep.subr.bf16.mxu0 0
        %1755 = vmatpush1.bf16.msra.mxu0 %v1731
        %1756 = vmatprep.subr.bf16.mxu0 0
        %1757 = vmatpush1.bf16.msra.mxu0 0
        %1758 = vmatprep.subr.bf16.mxu0 0
        %1759 = vmatpush1.bf16.msra.mxu0 0
        %1760 = vmatprep.subr.bf16.mxu0 0
        %1761 = vmatpush1.bf16.msra.mxu0 0
        %1762 = vmatprep.subr.bf16.mxu0 0
        %1763 = vmatpush1.bf16.msra.mxu0 0
        %1764 = vmatprep.subr.bf16.mxu0 0
        %1765 = vmatpush1.bf16.msra.mxu0 0
        %1766 = vmatprep.subr.bf16.mxu0 0
        %1767 = vmatpush1.bf16.msra.mxu0 0
        %1768 = vmatprep.subr.bf16.mxu0 0
        %1769 = vmatpush1.bf16.msra.mxu0 0
        %1770 = vmatprep.subr.bf16.mxu0 0
        %1771 = vmatpush1.bf16.msra.mxu0 0
        %1772 = vmatprep.mubr.bf16.mxu0 0
        %1773 = vmatmul.mubr.bf16.gmra.mrb[0].mxu0 %v1666
        %v1774 = vpop.f32.mrb[0].mxu0
        %v1775 = vadd.f32 %v1690, %v1774
        %v1776 = vpop.f32.mrb[0].mxu0
        %v1777 = vpop.f32.mrb[0].mxu0
        %v1778 = vpop.f32.mrb[0].mxu0
        %1779 = vdwg.mxu0
        %1781 = vrot.lane.b32.xlu0 %v1775, 112
        %v1782 = vpop.permute.xlu0 %1781
        %v1784 = vpack.c.bf16 %v1775, %v1775
        %v1785 = vpack.c.bf16 %v1782, %v1782
        %1787 = vrot.lane.b32.xlu0 %v1784, 96
        %v1788 = vpop.permute.xlu0 %1787
        %v1790 = vsel %vm1083, %v1784, 0
        %v1793 = vsel %vm1083, %v1788, 0
        %1795 = vmatprep.subr.bf16.mxu0 0
        %1796 = vmatpush1.bf16.xpose.msra.mxu0 %v1793
        %1797 = vmatprep.subr.bf16.mxu0 0
        %1798 = vmatpush1.bf16.xpose.msra.mxu0 0
        %1799 = vmatprep.subr.bf16.mxu0 0
        %1800 = vmatpush1.bf16.xpose.msra.mxu0 0
        %1801 = vmatprep.subr.bf16.mxu0 0
        %1802 = vmatpush1.bf16.xpose.msra.mxu0 0
        %1803 = vmatprep.subr.bf16.mxu0 0
        %1804 = vmatpush1.bf16.xpose.msra.mxu0 0
        %1805 = vmatprep.subr.bf16.mxu0 0
        %1806 = vmatpush1.bf16.xpose.msra.mxu0 0
        %1807 = vmatprep.subr.bf16.mxu0 0
        %1808 = vmatpush1.bf16.xpose.msra.mxu0 0
        %1809 = vmatprep.subr.bf16.mxu0 0
        %1810 = vmatpush1.bf16.xpose.msra.mxu0 0
        %1811 = vmatprep.subr.bf16.mxu0 0
        %1812 = vmatpush1.bf16.xpose.msra.mxu0 0
        %1813 = vmatprep.subr.bf16.mxu0 0
        %1814 = vmatpush1.bf16.xpose.msra.mxu0 0
        %1815 = vmatprep.subr.bf16.mxu0 0
        %1816 = vmatpush1.bf16.xpose.msra.mxu0 0
        %1817 = vmatprep.subr.bf16.mxu0 0
        %1818 = vmatpush1.bf16.xpose.msra.mxu0 0
        %1819 = vmatprep.subr.bf16.mxu0 0
        %1820 = vmatpush1.bf16.xpose.msra.mxu0 0
        %1821 = vmatprep.subr.bf16.mxu0 0
        %1822 = vmatpush1.bf16.xpose.msra.mxu0 0
        %1823 = vmatprep.subr.bf16.mxu0 0
        %1824 = vmatpush1.bf16.xpose.msra.mxu0 0
        %1825 = vmatprep.subr.bf16.mxu0 0
        %1826 = vmatpush1.bf16.xpose.msra.mxu0 0
        %1827 = vmatprep.mubr.bf16.mxu0 0
        %1828 = vmatmul.mubr.bf16.gmra.mrb[0].mxu0 %v1790
        %v1829 = vpop.f32.mrb[0].mxu0
        %v1830 = vadd.f32 %v961, %v1829
        %v1831 = vpop.f32.mrb[0].mxu0
        %v1832 = vpop.f32.mrb[0].mxu0
        %v1833 = vpop.f32.mrb[0].mxu0
        %1834 = vdwg.mxu0
        %1836 = vrot.lane.b32.xlu0 %v1785, 96
        %v1837 = vpop.permute.xlu0 %1836
        %v1839 = vsel %vm1083, %v1785, 0
        %v1842 = vsel %vm1083, %v1837, 0
        %1844 = vmatprep.subr.bf16.mxu0 0
        %1845 = vmatpush1.bf16.xpose.msra.mxu0 %v1842
        %1846 = vmatprep.subr.bf16.mxu0 0
        %1847 = vmatpush1.bf16.xpose.msra.mxu0 0
        %1848 = vmatprep.subr.bf16.mxu0 0
        %1849 = vmatpush1.bf16.xpose.msra.mxu0 0
        %1850 = vmatprep.subr.bf16.mxu0 0
        %1851 = vmatpush1.bf16.xpose.msra.mxu0 0
        %1852 = vmatprep.subr.bf16.mxu0 0
        %1853 = vmatpush1.bf16.xpose.msra.mxu0 0
        %1854 = vmatprep.subr.bf16.mxu0 0
        %1855 = vmatpush1.bf16.xpose.msra.mxu0 0
        %1856 = vmatprep.subr.bf16.mxu0 0
        %1857 = vmatpush1.bf16.xpose.msra.mxu0 0
        %1858 = vmatprep.subr.bf16.mxu0 0
        %1859 = vmatpush1.bf16.xpose.msra.mxu0 0
        %1860 = vmatprep.subr.bf16.mxu0 0
        %1861 = vmatpush1.bf16.xpose.msra.mxu0 0
        %1862 = vmatprep.subr.bf16.mxu0 0
        %1863 = vmatpush1.bf16.xpose.msra.mxu0 0
        %1864 = vmatprep.subr.bf16.mxu0 0
        %1865 = vmatpush1.bf16.xpose.msra.mxu0 0
        %1866 = vmatprep.subr.bf16.mxu0 0
        %1867 = vmatpush1.bf16.xpose.msra.mxu0 0
        %1868 = vmatprep.subr.bf16.mxu0 0
        %1869 = vmatpush1.bf16.xpose.msra.mxu0 0
        %1870 = vmatprep.subr.bf16.mxu0 0
        %1871 = vmatpush1.bf16.xpose.msra.mxu0 0
        %1872 = vmatprep.subr.bf16.mxu0 0
        %1873 = vmatpush1.bf16.xpose.msra.mxu0 0
        %1874 = vmatprep.subr.bf16.mxu0 0
        %1875 = vmatpush1.bf16.xpose.msra.mxu0 0
        %1876 = vmatprep.mubr.bf16.mxu0 0
        %1877 = vmatmul.mubr.bf16.gmra.mrb[0].mxu0 %v1839
        %v1878 = vpop.f32.mrb[0].mxu0
        %v1879 = vadd.f32 %v961, %v1878
        %v1880 = vpop.f32.mrb[0].mxu0
        %v1881 = vpop.f32.mrb[0].mxu0
        %v1882 = vpop.f32.mrb[0].mxu0
        %1883 = vdwg.mxu0
        %v1884 = vsel %vm1179, %v1830, -inf
        %1885 = vmax.xlane.f32.xlu0 %v1884
        %v1886 = vpop.xlane.xlu0 %1885
        %v1887 = vsel %vm1179, %v1879, -inf
        %1888 = vmax.xlane.f32.xlu0 %v1887
        %v1889 = vpop.xlane.xlu0 %1888
        %v1890 = vsub.f32 %v1830, %v1886
        %v1891 = vsub.f32 %v1879, %v1889
        %v1892 = vmul.f32 %v1890, 1.442695
        %v1893 = vpow.pop %v1892
        %v1894 = vmul.f32 %v1891, 1.442695
        %v1895 = vpow.pop %v1894
        %v1896 = vsel %vm1179, %v1893, 0.0
        %1897 = vadd.xlane.f32.xlu0 %v1896
        %v1898 = vpop.xlane.xlu0 %1897
        %v1899 = vsel %vm1179, %v1895, 0.0
        %1900 = vadd.xlane.f32.xlu0 %v1899
        %v1901 = vpop.xlane.xlu0 %1900
        %v1902 = vrcp.pop %v1898
        %v1903 = vrcp.pop %v1901
        %v1904 = vmul.f32 %v1893, %v1902
        %v1905 = vmul.f32 %v1895, %v1903
        %v1906 = vpack.c.bf16 %v1904, %v1904
        %v1907 = vpack.c.bf16 %v1905, %v1905
        %1908 = vrot.lane.b32.xlu0 %v1784, 64
        %v1909 = vpop.permute.xlu0 %1908
        %v1911 = vsel %vm1179, %v1906, 0
        %v1914 = vsel %vm873, %v1909, 0
        %1916 = vmatprep.subr.bf16.mxu0 0
        %1917 = vmatpush1.bf16.msra.mxu0 %v1914
        %1918 = vmatprep.subr.bf16.mxu0 0
        %1919 = vmatpush1.bf16.msra.mxu0 0
        %1920 = vmatprep.subr.bf16.mxu0 0
        %1921 = vmatpush1.bf16.msra.mxu0 0
        %1922 = vmatprep.subr.bf16.mxu0 0
        %1923 = vmatpush1.bf16.msra.mxu0 0
        %1924 = vmatprep.subr.bf16.mxu0 0
        %1925 = vmatpush1.bf16.msra.mxu0 0
        %1926 = vmatprep.subr.bf16.mxu0 0
        %1927 = vmatpush1.bf16.msra.mxu0 0
        %1928 = vmatprep.subr.bf16.mxu0 0
        %1929 = vmatpush1.bf16.msra.mxu0 0
        %1930 = vmatprep.subr.bf16.mxu0 0
        %1931 = vmatpush1.bf16.msra.mxu0 0
        %1932 = vmatprep.subr.bf16.mxu0 0
        %1933 = vmatpush1.bf16.msra.mxu0 0
        %1934 = vmatprep.subr.bf16.mxu0 0
        %1935 = vmatpush1.bf16.msra.mxu0 0
        %1936 = vmatprep.subr.bf16.mxu0 0
        %1937 = vmatpush1.bf16.msra.mxu0 0
        %1938 = vmatprep.subr.bf16.mxu0 0
        %1939 = vmatpush1.bf16.msra.mxu0 0
        %1940 = vmatprep.subr.bf16.mxu0 0
        %1941 = vmatpush1.bf16.msra.mxu0 0
        %1942 = vmatprep.subr.bf16.mxu0 0
        %1943 = vmatpush1.bf16.msra.mxu0 0
        %1944 = vmatprep.subr.bf16.mxu0 0
        %1945 = vmatpush1.bf16.msra.mxu0 0
        %1946 = vmatprep.subr.bf16.mxu0 0
        %1947 = vmatpush1.bf16.msra.mxu0 0
        %1948 = vmatprep.mubr.bf16.mxu0 0
        %1949 = vmatmul.mubr.bf16.gmra.mrb[0].mxu0 %v1911
        %v1950 = vpop.f32.mrb[0].mxu0
        %v1951 = vadd.f32 0.0, %v1950
        %v1952 = vpop.f32.mrb[0].mxu0
        %v1953 = vpop.f32.mrb[0].mxu0
        %v1954 = vpop.f32.mrb[0].mxu0
        %1955 = vdwg.mxu0
        %1956 = vrot.lane.b32.xlu0 %v1785, 64
        %v1957 = vpop.permute.xlu0 %1956
        %v1959 = vsel %vm1179, %v1907, 0
        %v1962 = vsel %vm873, %v1957, 0
        %1964 = vmatprep.subr.bf16.mxu0 0
        %1965 = vmatpush1.bf16.msra.mxu0 %v1962
        %1966 = vmatprep.subr.bf16.mxu0 0
        %1967 = vmatpush1.bf16.msra.mxu0 0
        %1968 = vmatprep.subr.bf16.mxu0 0
        %1969 = vmatpush1.bf16.msra.mxu0 0
        %1970 = vmatprep.subr.bf16.mxu0 0
        %1971 = vmatpush1.bf16.msra.mxu0 0
        %1972 = vmatprep.subr.bf16.mxu0 0
        %1973 = vmatpush1.bf16.msra.mxu0 0
        %1974 = vmatprep.subr.bf16.mxu0 0
        %1975 = vmatpush1.bf16.msra.mxu0 0
        %1976 = vmatprep.subr.bf16.mxu0 0
        %1977 = vmatpush1.bf16.msra.mxu0 0
        %1978 = vmatprep.subr.bf16.mxu0 0
        %1979 = vmatpush1.bf16.msra.mxu0 0
        %1980 = vmatprep.subr.bf16.mxu0 0
        %1981 = vmatpush1.bf16.msra.mxu0 0
        %1982 = vmatprep.subr.bf16.mxu0 0
        %1983 = vmatpush1.bf16.msra.mxu0 0
        %1984 = vmatprep.subr.bf16.mxu0 0
        %1985 = vmatpush1.bf16.msra.mxu0 0
        %1986 = vmatprep.subr.bf16.mxu0 0
        %1987 = vmatpush1.bf16.msra.mxu0 0
        %1988 = vmatprep.subr.bf16.mxu0 0
        %1989 = vmatpush1.bf16.msra.mxu0 0
        %1990 = vmatprep.subr.bf16.mxu0 0
        %1991 = vmatpush1.bf16.msra.mxu0 0
        %1992 = vmatprep.subr.bf16.mxu0 0
        %1993 = vmatpush1.bf16.msra.mxu0 0
        %1994 = vmatprep.subr.bf16.mxu0 0
        %1995 = vmatpush1.bf16.msra.mxu0 0
        %1996 = vmatprep.mubr.bf16.mxu0 0
        %1997 = vmatmul.mubr.bf16.gmra.mrb[0].mxu0 %v1959
        %v1998 = vpop.f32.mrb[0].mxu0
        %v1999 = vadd.f32 0.0, %v1998
        %v2000 = vpop.f32.mrb[0].mxu0
        %v2001 = vpop.f32.mrb[0].mxu0
        %v2002 = vpop.f32.mrb[0].mxu0
        %2003 = vdwg.mxu0
        %2005 = vrot.lane.b32.xlu0 %v1999, 16
        %v2006 = vpop.permute.xlu0 %2005
        %v2008 = vsel %vm1083, %v1951, %v2006
        %v2009 = vpack.c.bf16 %v2008, %v2008
        %s2010 = scalar_lea.vmem [#allocation14], 16
        %v2011 = vld [vmem:[%s2010] sm:$0xf]
        %v2012 = vld [vmem:[%s2010 + $0x4] sm:$0xf]
        %v2013 = vld [vmem:[%s2010 + $0x8] sm:$0xf]
        %v2014 = vld [vmem:[%s2010 + $0xc] sm:$0xf]
        %s2015 = scalar_lea.vmem [#allocation16], 1
        %v2016 = vld [vmem:[%s2015] sm:$0x1]
        %v2018 = vlaneseq
        %v2019 = vshrl.u32 %v2018, 7
        %v2020 = vsub.s32 0, %v2019
        %v2021 = vrot.slane %v2016, %v2020
        %v2027 = vunpack.c.l.b16 %v2011
        %v2028 = vunpack.c.l.b16 %v2012
        %v2029 = vunpack.c.l.b16 %v2013
        %v2030 = vunpack.c.l.b16 %v2014
        %v2031 = vpack.c.b16 %v2028, %v2027
        %v2032 = vpack.c.b16 %v2030, %v2029
        %v2036 = vsel %vm1329, %v2009, 0
        %2038 = vmatprep.subr.bf16.mxu0 0
        %2039 = vmatpush1.bf16.msra.mxu0 %v2031
        %2040 = vmatprep.subr.bf16.mxu0 0
        %2041 = vmatpush1.bf16.msra.mxu0 %v2032
        %2042 = vmatprep.subr.bf16.mxu0 0
        %2043 = vmatpush1.bf16.msra.mxu0 0
        %2044 = vmatprep.subr.bf16.mxu0 0
        %2045 = vmatpush1.bf16.msra.mxu0 0
        %2046 = vmatprep.subr.bf16.mxu0 0
        %2047 = vmatpush1.bf16.msra.mxu0 0
        %2048 = vmatprep.subr.bf16.mxu0 0
        %2049 = vmatpush1.bf16.msra.mxu0 0
        %2050 = vmatprep.subr.bf16.mxu0 0
        %2051 = vmatpush1.bf16.msra.mxu0 0
        %2052 = vmatprep.subr.bf16.mxu0 0
        %2053 = vmatpush1.bf16.msra.mxu0 0
        %2054 = vmatprep.subr.bf16.mxu0 0
        %2055 = vmatpush1.bf16.msra.mxu0 0
        %2056 = vmatprep.subr.bf16.mxu0 0
        %2057 = vmatpush1.bf16.msra.mxu0 0
        %2058 = vmatprep.subr.bf16.mxu0 0
        %2059 = vmatpush1.bf16.msra.mxu0 0
        %2060 = vmatprep.subr.bf16.mxu0 0
        %2061 = vmatpush1.bf16.msra.mxu0 0
        %2062 = vmatprep.subr.bf16.mxu0 0
        %2063 = vmatpush1.bf16.msra.mxu0 0
        %2064 = vmatprep.subr.bf16.mxu0 0
        %2065 = vmatpush1.bf16.msra.mxu0 0
        %2066 = vmatprep.subr.bf16.mxu0 0
        %2067 = vmatpush1.bf16.msra.mxu0 0
        %2068 = vmatprep.subr.bf16.mxu0 0
        %2069 = vmatpush1.bf16.msra.mxu0 0
        %2070 = vmatprep.mubr.bf16.mxu0 0
        %2071 = vmatmul.mubr.bf16.gmra.mrb[0].mxu0 %v2036
        %v2072 = vpop.f32.mrb[0].mxu0
        %v2073 = vadd.f32 %v2021, %v2072
        %v2074 = vpop.f32.mrb[0].mxu0
        %v2075 = vpop.f32.mrb[0].mxu0
        %v2076 = vpop.f32.mrb[0].mxu0
        %2077 = vdwg.mxu0
        %v2078 = vadd.f32 %v1665, %v2073
        %s2079 = scalar_lea.vmem [#allocation17], 1
        %v2080 = vld [vmem:[%s2079] sm:$0x1]
        %s2081 = scalar_lea.vmem [#allocation19], 1
        %v2082 = vld [vmem:[%s2081] sm:$0x1]
        %2083 = vadd.xlane.f32.xlu0 %v2078
        %v2084 = vpop.xlane.xlu0 %2083
        %v2085 = vmul.f32 %v2084, 0.03125
        %v2086 = vmul.f32 %v2078, %v2078
        %2087 = vadd.xlane.f32.xlu0 %v2086
        %v2088 = vpop.xlane.xlu0 %2087
        %v2089 = vmul.f32 %v2088, 0.03125
        %v2090 = vmul.f32 %v2085, %v2085
        %v2091 = vsub.f32 %v2089, %v2090
        %v2092 = vsub.f32 %v2078, %v2085
        %v2093 = vadd.f32 %v2091, 1e-12
        %v2094 = vrsqrt.pop %v2093
        %v2095 = vmul.f32 %v2092, %v2094
        %v2097 = vlaneseq
        %v2098 = vshrl.u32 %v2097, 7
        %v2099 = vsub.s32 0, %v2098
        %v2100 = vrot.slane %v2080, %v2099
        %v2102 = vmul.f32 %v2095, %v2100
        %v2104 = vlaneseq
        %v2105 = vshrl.u32 %v2104, 7
        %v2106 = vsub.s32 0, %v2105
        %v2107 = vrot.slane %v2082, %v2106
        %v2109 = vadd.f32 %v2102, %v2107
        %v2110 = vpack.c.bf16 %v2109, %v2109
        %s2111 = scalar_lea.vmem [#allocation20], 64
        %v2112 = vld [vmem:[%s2111] sm:$0xf]
        %v2113 = vld [vmem:[%s2111 + $0x4] sm:$0xf]
        %v2114 = vld [vmem:[%s2111 + $0x8] sm:$0xf]
        %v2115 = vld [vmem:[%s2111 + $0xc] sm:$0xf]
        %v2116 = vld [vmem:[%s2111 + $0x10] sm:$0xf]
        %v2117 = vld [vmem:[%s2111 + $0x14] sm:$0xf]
        %v2118 = vld [vmem:[%s2111 + $0x18] sm:$0xf]
        %v2119 = vld [vmem:[%s2111 + $0x1c] sm:$0xf]
        %v2120 = vld [vmem:[%s2111 + $0x20] sm:$0xf]
        %v2121 = vld [vmem:[%s2111 + $0x24] sm:$0xf]
        %v2122 = vld [vmem:[%s2111 + $0x28] sm:$0xf]
        %v2123 = vld [vmem:[%s2111 + $0x2c] sm:$0xf]
        %v2124 = vld [vmem:[%s2111 + $0x30] sm:$0xf]
        %v2125 = vld [vmem:[%s2111 + $0x34] sm:$0xf]
        %v2126 = vld [vmem:[%s2111 + $0x38] sm:$0xf]
        %v2127 = vld [vmem:[%s2111 + $0x3c] sm:$0xf]
        %s2128 = scalar_lea.vmem [#allocation22], 1
        %v2129 = vld [vmem:[%s2128] sm:$0x1]
        %v2131 = vlaneseq
        %v2132 = vshrl.u32 %v2131, 7
        %v2133 = vsub.s32 0, %v2132
        %v2134 = vrot.slane %v2129, %v2133
        %v2152 = vunpack.c.l.b16 %v2112
        %v2153 = vunpack.c.l.b16 %v2113
        %v2154 = vunpack.c.l.b16 %v2114
        %v2155 = vunpack.c.l.b16 %v2115
        %v2156 = vunpack.c.l.b16 %v2116
        %v2157 = vunpack.c.l.b16 %v2117
        %v2158 = vunpack.c.l.b16 %v2118
        %v2159 = vunpack.c.l.b16 %v2119
        %v2160 = vunpack.c.l.b16 %v2120
        %v2161 = vunpack.c.l.b16 %v2121
        %v2162 = vunpack.c.l.b16 %v2122
        %v2163 = vunpack.c.l.b16 %v2123
        %v2164 = vunpack.c.l.b16 %v2124
        %v2165 = vunpack.c.l.b16 %v2125
        %v2166 = vunpack.c.l.b16 %v2126
        %v2167 = vunpack.c.l.b16 %v2127
        %v2168 = vpack.c.b16 %v2153, %v2152
        %v2169 = vpack.c.b16 %v2155, %v2154
        %v2170 = vpack.c.b16 %v2157, %v2156
        %v2171 = vpack.c.b16 %v2159, %v2158
        %v2172 = vpack.c.b16 %v2161, %v2160
        %v2173 = vpack.c.b16 %v2163, %v2162
        %v2174 = vpack.c.b16 %v2165, %v2164
        %v2175 = vpack.c.b16 %v2167, %v2166
        %2184 = vmatprep.subr.bf16.mxu0 0
        %2185 = vmatpush1.bf16.msra.mxu0 %v2168
        %2186 = vmatprep.subr.bf16.mxu0 0
        %2187 = vmatpush1.bf16.msra.mxu0 %v2169
        %2188 = vmatprep.subr.bf16.mxu0 0
        %2189 = vmatpush1.bf16.msra.mxu0 %v2170
        %2190 = vmatprep.subr.bf16.mxu0 0
        %2191 = vmatpush1.bf16.msra.mxu0 %v2171
        %2192 = vmatprep.subr.bf16.mxu0 0
        %2193 = vmatpush1.bf16.msra.mxu0 %v2172
        %2194 = vmatprep.subr.bf16.mxu0 0
        %2195 = vmatpush1.bf16.msra.mxu0 %v2173
        %2196 = vmatprep.subr.bf16.mxu0 0
        %2197 = vmatpush1.bf16.msra.mxu0 %v2174
        %2198 = vmatprep.subr.bf16.mxu0 0
        %2199 = vmatpush1.bf16.msra.mxu0 %v2175
        %2200 = vmatprep.subr.bf16.mxu0 0
        %2201 = vmatpush1.bf16.msra.mxu0 0
        %2202 = vmatprep.subr.bf16.mxu0 0
        %2203 = vmatpush1.bf16.msra.mxu0 0
        %2204 = vmatprep.subr.bf16.mxu0 0
        %2205 = vmatpush1.bf16.msra.mxu0 0
        %2206 = vmatprep.subr.bf16.mxu0 0
        %2207 = vmatpush1.bf16.msra.mxu0 0
        %2208 = vmatprep.subr.bf16.mxu0 0
        %2209 = vmatpush1.bf16.msra.mxu0 0
        %2210 = vmatprep.subr.bf16.mxu0 0
        %2211 = vmatpush1.bf16.msra.mxu0 0
        %2212 = vmatprep.subr.bf16.mxu0 0
        %2213 = vmatpush1.bf16.msra.mxu0 0
        %2214 = vmatprep.subr.bf16.mxu0 0
        %2215 = vmatpush1.bf16.msra.mxu0 0
        %2216 = vmatprep.mubr.bf16.mxu0 0
        %2217 = vmatmul.mubr.bf16.gmra.mrb[0].mxu0 %v2110
        %v2218 = vpop.f32.mrb[0].mxu0
        %v2219 = vadd.f32 %v2134, %v2218
        %v2220 = vpop.f32.mrb[0].mxu0
        %v2221 = vpop.f32.mrb[0].mxu0
        %v2222 = vpop.f32.mrb[0].mxu0
        %2223 = vdwg.mxu0
        %v2224 = vmul.f32 %v2219, %v2219
        %v2225 = vmul.f32 %v2219, %v2224
        %v2226 = vmul.f32 %v2225, 0.044715
        %v2227 = vadd.f32 %v2219, %v2226
        %v2228 = vmul.f32 %v2227, 0.7978846
        %v2229 = vtanh.pop %v2228
        %v2230 = vadd.f32 %v2229, 1.0
        %v2231 = vmul.f32 %v2230, 0.5
        %v2232 = vmul.f32 %v2219, %v2231
        %v2233 = vpack.c.bf16 %v2232, %v2232
        %s2234 = scalar_lea.vmem [#allocation23], 64
        %v2235 = vld [vmem:[%s2234] sm:$0xf]
        %v2236 = vld [vmem:[%s2234 + $0x4] sm:$0xf]
        %v2237 = vld [vmem:[%s2234 + $0x8] sm:$0xf]
        %v2238 = vld [vmem:[%s2234 + $0xc] sm:$0xf]
        %v2239 = vld [vmem:[%s2234 + $0x10] sm:$0xf]
        %v2240 = vld [vmem:[%s2234 + $0x14] sm:$0xf]
        %v2241 = vld [vmem:[%s2234 + $0x18] sm:$0xf]
        %v2242 = vld [vmem:[%s2234 + $0x1c] sm:$0xf]
        %v2243 = vld [vmem:[%s2234 + $0x20] sm:$0xf]
        %v2244 = vld [vmem:[%s2234 + $0x24] sm:$0xf]
        %v2245 = vld [vmem:[%s2234 + $0x28] sm:$0xf]
        %v2246 = vld [vmem:[%s2234 + $0x2c] sm:$0xf]
        %v2247 = vld [vmem:[%s2234 + $0x30] sm:$0xf]
        %v2248 = vld [vmem:[%s2234 + $0x34] sm:$0xf]
        %v2249 = vld [vmem:[%s2234 + $0x38] sm:$0xf]
        %v2250 = vld [vmem:[%s2234 + $0x3c] sm:$0xf]
        %s2251 = scalar_lea.vmem [#allocation25], 1
        %v2252 = vld [vmem:[%s2251] sm:$0x1]
        %v2254 = vlaneseq
        %v2255 = vshrl.u32 %v2254, 7
        %v2256 = vsub.s32 0, %v2255
        %v2257 = vrot.slane %v2252, %v2256
        %v2275 = vunpack.c.l.b16 %v2235
        %v2276 = vunpack.c.l.b16 %v2236
        %v2277 = vunpack.c.l.b16 %v2237
        %v2278 = vunpack.c.l.b16 %v2238
        %v2279 = vunpack.c.l.b16 %v2239
        %v2280 = vunpack.c.l.b16 %v2240
        %v2281 = vunpack.c.l.b16 %v2241
        %v2282 = vunpack.c.l.b16 %v2242
        %v2283 = vunpack.c.l.b16 %v2243
        %v2284 = vunpack.c.l.b16 %v2244
        %v2285 = vunpack.c.l.b16 %v2245
        %v2286 = vunpack.c.l.b16 %v2246
        %v2287 = vunpack.c.l.b16 %v2247
        %v2288 = vunpack.c.l.b16 %v2248
        %v2289 = vunpack.c.l.b16 %v2249
        %v2290 = vunpack.c.l.b16 %v2250
        %v2291 = vpack.c.b16 %v2276, %v2275
        %v2292 = vpack.c.b16 %v2278, %v2277
        %v2293 = vpack.c.b16 %v2280, %v2279
        %v2294 = vpack.c.b16 %v2282, %v2281
        %v2295 = vpack.c.b16 %v2284, %v2283
        %v2296 = vpack.c.b16 %v2286, %v2285
        %v2297 = vpack.c.b16 %v2288, %v2287
        %v2298 = vpack.c.b16 %v2290, %v2289
        %2307 = vmatprep.subr.bf16.mxu0 0
        %2308 = vmatpush1.bf16.msra.mxu0 %v2291
        %2309 = vmatprep.subr.bf16.mxu0 0
        %2310 = vmatpush1.bf16.msra.mxu0 %v2292
        %2311 = vmatprep.subr.bf16.mxu0 0
        %2312 = vmatpush1.bf16.msra.mxu0 %v2293
        %2313 = vmatprep.subr.bf16.mxu0 0
        %2314 = vmatpush1.bf16.msra.mxu0 %v2294
        %2315 = vmatprep.subr.bf16.mxu0 0
        %2316 = vmatpush1.bf16.msra.mxu0 %v2295
        %2317 = vmatprep.subr.bf16.mxu0 0
        %2318 = vmatpush1.bf16.msra.mxu0 %v2296
        %2319 = vmatprep.subr.bf16.mxu0 0
        %2320 = vmatpush1.bf16.msra.mxu0 %v2297
        %2321 = vmatprep.subr.bf16.mxu0 0
        %2322 = vmatpush1.bf16.msra.mxu0 %v2298
        %2323 = vmatprep.subr.bf16.mxu0 0
        %2324 = vmatpush1.bf16.msra.mxu0 0
        %2325 = vmatprep.subr.bf16.mxu0 0
        %2326 = vmatpush1.bf16.msra.mxu0 0
        %2327 = vmatprep.subr.bf16.mxu0 0
        %2328 = vmatpush1.bf16.msra.mxu0 0
        %2329 = vmatprep.subr.bf16.mxu0 0
        %2330 = vmatpush1.bf16.msra.mxu0 0
        %2331 = vmatprep.subr.bf16.mxu0 0
        %2332 = vmatpush1.bf16.msra.mxu0 0
        %2333 = vmatprep.subr.bf16.mxu0 0
        %2334 = vmatpush1.bf16.msra.mxu0 0
        %2335 = vmatprep.subr.bf16.mxu0 0
        %2336 = vmatpush1.bf16.msra.mxu0 0
        %2337 = vmatprep.subr.bf16.mxu0 0
        %2338 = vmatpush1.bf16.msra.mxu0 0
        %2339 = vmatprep.mubr.bf16.mxu0 0
        %2340 = vmatmul.mubr.bf16.gmra.mrb[0].mxu0 %v2233
        %v2341 = vpop.f32.mrb[0].mxu0
        %v2342 = vadd.f32 %v2257, %v2341
        %v2343 = vpop.f32.mrb[0].mxu0
        %v2344 = vpop.f32.mrb[0].mxu0
        %v2345 = vpop.f32.mrb[0].mxu0
        %2346 = vdwg.mxu0
        %v2347 = vadd.f32 %v2109, %v2342
        %s2348 = scalar_lea.vmem [#allocation26], 1
        %v2349 = vld [vmem:[%s2348] sm:$0x1]
        %s2350 = scalar_lea.vmem [#allocation28], 1
        %v2351 = vld [vmem:[%s2350] sm:$0x1]
        %2352 = vadd.xlane.f32.xlu0 %v2347
        %v2353 = vpop.xlane.xlu0 %2352
        %v2354 = vmul.f32 %v2353, 0.03125
        %v2355 = vmul.f32 %v2347, %v2347
        %2356 = vadd.xlane.f32.xlu0 %v2355
        %v2357 = vpop.xlane.xlu0 %2356
        %v2358 = vmul.f32 %v2357, 0.03125
        %v2359 = vmul.f32 %v2354, %v2354
        %v2360 = vsub.f32 %v2358, %v2359
        %v2361 = vsub.f32 %v2347, %v2354
        %v2362 = vadd.f32 %v2360, 1e-12
        %v2363 = vrsqrt.pop %v2362
        %v2364 = vmul.f32 %v2361, %v2363
        %v2366 = vlaneseq
        %v2367 = vshrl.u32 %v2366, 7
        %v2368 = vsub.s32 0, %v2367
        %v2369 = vrot.slane %v2349, %v2368
        %v2371 = vmul.f32 %v2364, %v2369
        %v2373 = vlaneseq
        %v2374 = vshrl.u32 %v2373, 7
        %v2375 = vsub.s32 0, %v2374
        %v2376 = vrot.slane %v2351, %v2375
        %v2378 = vadd.f32 %v2371, %v2376
        %2379 = vst [vmem:[%s806] sm:$0xff] %v2378
        %v2380 = vpack.c.bf16 %v2378, %v2378
        %v2381 = vld [vmem:[%s18] sm:$0xf]
        %v2382 = vld [vmem:[%s18 + $0x4] sm:$0xf]
        %v2383 = vld [vmem:[%s18 + $0x8] sm:$0xf]
        %v2384 = vld [vmem:[%s18 + $0xc] sm:$0xf]
        %v2385 = vld [vmem:[%s18 + $0x10] sm:$0xf]
        %v2386 = vld [vmem:[%s18 + $0x14] sm:$0xf]
        %v2387 = vld [vmem:[%s18 + $0x18] sm:$0xf]
        %v2388 = vld [vmem:[%s18 + $0x1c] sm:$0xf]
        %v2389 = vld [vmem:[%s18 + $0x20] sm:$0xf]
        %v2390 = vld [vmem:[%s18 + $0x24] sm:$0xf]
        %v2391 = vld [vmem:[%s18 + $0x28] sm:$0xf]
        %v2392 = vld [vmem:[%s18 + $0x2c] sm:$0xf]
        %v2393 = vld [vmem:[%s18 + $0x30] sm:$0xf]
        %v2394 = vld [vmem:[%s18 + $0x34] sm:$0xf]
        %v2395 = vld [vmem:[%s18 + $0x38] sm:$0xf]
        %v2396 = vld [vmem:[%s18 + $0x3c] sm:$0xf]
        %v2397 = vld [vmem:[%s19] sm:$0x1]
        %v2414 = vunpack.c.l.b16 %v2381
        %v2415 = vunpack.c.l.b16 %v2382
        %v2416 = vunpack.c.l.b16 %v2383
        %v2417 = vunpack.c.l.b16 %v2384
        %v2418 = vunpack.c.l.b16 %v2385
        %v2419 = vunpack.c.l.b16 %v2386
        %v2420 = vunpack.c.l.b16 %v2387
        %v2421 = vunpack.c.l.b16 %v2388
        %v2422 = vunpack.c.l.b16 %v2389
        %v2423 = vunpack.c.l.b16 %v2390
        %v2424 = vunpack.c.l.b16 %v2391
        %v2425 = vunpack.c.l.b16 %v2392
        %v2426 = vunpack.c.l.b16 %v2393
        %v2427 = vunpack.c.l.b16 %v2394
        %v2428 = vunpack.c.l.b16 %v2395
        %v2429 = vunpack.c.l.b16 %v2396
        %v2430 = vpack.c.b16 %v2415, %v2414
        %v2431 = vpack.c.b16 %v2417, %v2416
        %v2432 = vpack.c.b16 %v2419, %v2418
        %v2433 = vpack.c.b16 %v2421, %v2420
        %v2434 = vpack.c.b16 %v2423, %v2422
        %v2435 = vpack.c.b16 %v2425, %v2424
        %v2436 = vpack.c.b16 %v2427, %v2426
        %v2437 = vpack.c.b16 %v2429, %v2428
        %2446 = vmatprep.subr.bf16.mxu0 0
        %2447 = vmatpush1.bf16.msra.mxu0 %v2430
        %2448 = vmatprep.subr.bf16.mxu0 0
        %2449 = vmatpush1.bf16.msra.mxu0 %v2431
        %2450 = vmatprep.subr.bf16.mxu0 0
        %2451 = vmatpush1.bf16.msra.mxu0 %v2432
        %2452 = vmatprep.subr.bf16.mxu0 0
        %2453 = vmatpush1.bf16.msra.mxu0 %v2433
        %2454 = vmatprep.subr.bf16.mxu0 0
        %2455 = vmatpush1.bf16.msra.mxu0 %v2434
        %2456 = vmatprep.subr.bf16.mxu0 0
        %2457 = vmatpush1.bf16.msra.mxu0 %v2435
        %2458 = vmatprep.subr.bf16.mxu0 0
        %2459 = vmatpush1.bf16.msra.mxu0 %v2436
        %2460 = vmatprep.subr.bf16.mxu0 0
        %2461 = vmatpush1.bf16.msra.mxu0 %v2437
        %2462 = vmatprep.subr.bf16.mxu0 0
        %2463 = vmatpush1.bf16.msra.mxu0 0
        %2464 = vmatprep.subr.bf16.mxu0 0
        %2465 = vmatpush1.bf16.msra.mxu0 0
        %2466 = vmatprep.subr.bf16.mxu0 0
        %2467 = vmatpush1.bf16.msra.mxu0 0
        %2468 = vmatprep.subr.bf16.mxu0 0
        %2469 = vmatpush1.bf16.msra.mxu0 0
        %2470 = vmatprep.subr.bf16.mxu0 0
        %2471 = vmatpush1.bf16.msra.mxu0 0
        %2472 = vmatprep.subr.bf16.mxu0 0
        %2473 = vmatpush1.bf16.msra.mxu0 0
        %2474 = vmatprep.subr.bf16.mxu0 0
        %2475 = vmatpush1.bf16.msra.mxu0 0
        %2476 = vmatprep.subr.bf16.mxu0 0
        %2477 = vmatpush1.bf16.msra.mxu0 0
        %2478 = vmatprep.mubr.bf16.mxu0 0
        %2479 = vmatmul.mubr.bf16.gmra.mrb[0].mxu0 %v2380
        %v2480 = vpop.f32.mrb[0].mxu0
        %v2481 = vadd.f32 %v2397, %v2480
        %v2482 = vpop.f32.mrb[0].mxu0
        %v2483 = vpop.f32.mrb[0].mxu0
        %v2484 = vpop.f32.mrb[0].mxu0
        %2485 = vdwg.mxu0
        %v2486 = vtanh.pop %v2481
        %2487 = vst [vmem:[%s812] sm:$0x1] %v2486
        %s2488 = sand.u32 %s441, 1
        %s2489 = scalar_lea.sflag [#allocation7], %s2488
        %s2490 = sand.u32 %s441, 1
        %s2491 = smul.addr %s2490, 8
        %s2492 = scalar_lea.vmem [#allocation29], %s2491
        %s2493 = sand.u32 %s467, 1
        %s2494 = scalar_lea.sflag [#allocation31], %s2493
        %s2495 = sand.u32 %s467, 1
        %s2496 = scalar_lea.vmem [#allocation30], %s2495
        // Predicated region
        $region153: #{tpu_custom_call.1} parent=91 // pred_check
          %p2497 = pneg %p451
        $region154: #{tpu_custom_call.1} parent=91 // pred_check_branch
          %2499 = sbr.rel (%p2497) target = $region156
        $region155: #{tpu_custom_call.1} parent=91 // pred_region
          %s2501 = ssub.s32 128, 128
          %2502 = vsyncadd %s2489, %s2501
          %s2503 = smul.addr %s55, 128
          %s2504 = scalar_lea.hbm %s20, %s2503
          %s2506 = sshll.u32 %s2492, 4
          %s2507 = int_to_ptr.vmem [resolvable:$true] %s2506
          %2509 = dma.vmem_to_hbm [thread:$0]  %s2507, 128, %s2504, %s2489
        $region156: #{tpu_custom_call.1} parent=91 // pred_fallthru
          _
        // Predicated region
        $region157: #{tpu_custom_call.1} parent=91 // pred_check
          %p2510 = pneg %p477
        $region158: #{tpu_custom_call.1} parent=91 // pred_check_branch
          %2512 = sbr.rel (%p2510) target = $region160
        $region159: #{tpu_custom_call.1} parent=91 // pred_region
          %s2514 = ssub.s32 16, 16
          %2515 = vsyncadd %s2494, %s2514
          %s2516 = smul.addr %s55, 16
          %s2517 = scalar_lea.hbm %s21, %s2516
          %s2519 = sshll.u32 %s2496, 4
          %s2520 = int_to_ptr.vmem [resolvable:$true] %s2519
          %2522 = dma.vmem_to_hbm [thread:$0]  %s2520, 16, %s2517, %s2494
        $region160: #{tpu_custom_call.1} parent=91 // pred_fallthru
          _
      $region92: #{tpu_custom_call.1} parent=5 // pred_fallthru
        _
      %p2523 = scmp.le.s32.totalorder 2, %s50
      // Predicated region
      $region161: #{tpu_custom_call.1} parent=5 // pred_check
        %p2524 = pneg %p2523
      $region162: #{tpu_custom_call.1} parent=5 // pred_check_branch
        %2526 = sbr.rel (%p2524) target = $region164
      $region163: #{tpu_custom_call.1} parent=5 // pred_region
        %s2527 = ssub.s32 %s50, 2
        // Predicated region
        $region165: #{tpu_custom_call.1} parent=163 // pred_check
          %p2528 = pneg %p457
        $region166: #{tpu_custom_call.1} parent=163 // pred_check_branch
          %2530 = sbr.rel (%p2528) target = $region168
        $region167: #{tpu_custom_call.1} parent=163 // pred_region
          %s2531 = sand.u32 %s442, 1
          %s2532 = scalar_lea.sflag [#allocation7], %s2531
          %s2533 = sand.u32 %s442, 1
          %s2534 = smul.addr %s2533, 8
          %s2535 = scalar_lea.vmem [#allocation29], %s2534
          %2536 = dma.done %s2532, 128
        $region168: #{tpu_custom_call.1} parent=163 // pred_fallthru
          _
        // Predicated region
        $region169: #{tpu_custom_call.1} parent=163 // pred_check
          %p2537 = pneg %p483
        $region170: #{tpu_custom_call.1} parent=163 // pred_check_branch
          %2539 = sbr.rel (%p2537) target = $region172
        $region171: #{tpu_custom_call.1} parent=163 // pred_region
          %s2540 = sand.u32 %s468, 1
          %s2541 = scalar_lea.sflag [#allocation31], %s2540
          %s2542 = sand.u32 %s468, 1
          %s2543 = scalar_lea.vmem [#allocation30], %s2542
          %2544 = dma.done %s2541, 16
        $region172: #{tpu_custom_call.1} parent=163 // pred_fallthru
          _
      $region164: #{tpu_custom_call.1} parent=5 // pred_fallthru
        _
    $region6: #{tpu_custom_call.1} parent=1 // loop_footer
      %s54 = sadd.s32 1, %s50
    $region7: #{tpu_custom_call.1} parent=1 // loop_footer_branch
      %49 = sbr.rel target = $region3
    $region8: #{tpu_custom_call.1} parent=1 // loop_exit
      _
    %2545 = vsyncpa [#allocation6], 1
    %s2546 = scalar_lea.sflag [#allocation6], 1
    %2547 = vsyncpa %s2546, 1
    %2548 = vsyncpa [#allocation9], 1
    %2549 = vsyncpa [#allocation12], 1
    %2550 = vsyncpa [#allocation15], 1
    %2551 = vsyncpa [#allocation18], 1
    %2552 = vsyncpa [#allocation21], 1
    %2553 = vsyncpa [#allocation24], 1
    %2554 = vsyncpa [#allocation27], 1
    %2555 = vsyncpa [#allocation7], 1
    %s2556 = scalar_lea.sflag [#allocation7], 1
    %2557 = vsyncpa %s2556, 1
    %2558 = vsyncpa [#allocation31], 1
    %s2559 = scalar_lea.sflag [#allocation31], 1
    %2560 = vsyncpa %s2559, 1

</llo_original>
